<compile_context>
chip_gen: v7x
topology: tpu7x:2x2x1
jax: 0.10.0
libtpu: 0.0.40
codegen_flags: <defaults>
</compile_context>

<pallas_src>
import functools

import jax
import jax.numpy as jnp
from jax.experimental import pallas as pl
from jax.experimental.pallas import tpu as pltpu

CP = 8  # channel padding (= one f32 sublane tile) so im2col row-groups stay tile aligned


# ------------------------------ fused Pallas kernel --------------------------------

def _fused_forward_kernel(low_ref, snap_ref, eps_ref, fl_ref, mask_ref,
                          alpha_ref, sigma_ref, temb_ref,
                          srw1_ref, srb1_ref, srw2_ref, srb2_ref,
                          enw1_ref, enb1_ref, enw2_ref, enb2_ref,
                          dew1_ref, deb1_ref, dew2_ref, deb2_ref,
                          loss_ref, *, wp, lb, halo):
    """Whole DiffusionModel forward ('v'-prediction training loss) for one batch element.

    Everything stays VMEM resident.  Each 3x3 conv = ONE MXU dot with
    K = 9 * n_sources * CP (im2col over the 9 taps only), bf16 operands / f32 accumulate,
    with bias, cond-skip add, time-embedding add, ReLU, pad-column masking and (for the
    last conv) the per-pixel L1 fused into the epilogue.
    """
    mask = mask_ref[...]                       # (1, LB)  valid-pixel columns of the band
    a = alpha_ref[0]                           # (1, 1)   per-batch alpha
    s = sigma_ref[0]                           # (1, 1)   per-batch sigma
    low = low_ref[0]                           # (CP, LB)
    snap = snap_ref[0]
    eps = eps_ref[0]
    fl = fl_ref[0]

    # ---- forward diffusion q(x_t|x_0) + 'v' target (fused; no HBM round trip) ----
    res = snap - low                           # residual_sr
    rt = a * res + s * eps                     # residual_t
    tgt = a * eps - s * res                    # 'v' target

    base = halo - wp - 1                       # lane offset of the (dh=0, dw=0) tap

    def windows(x):
        """9 statically shifted (CP, LB) views of a zero-haloed copy of x (f32)."""
        z = jnp.zeros((x.shape[0], halo), jnp.float32)
        xe = jnp.concatenate([z, x, z], axis=1)            # 128-lane-aligned concat
        return [xe[:, base + dh * wp + dw: base + dh * wp + dw + lb]
                for dh in range(3) for dw in range(3)]

    def conv(pieces, w_ref, b_ref, *, relu, add=None, temb=None):
        """3x3 'same' conv as ONE MXU matmul over the stacked tap windows."""
        xcol = jnp.concatenate(pieces, axis=0).astype(jnp.bfloat16)     # (K, LB)
        acc = jnp.dot(w_ref[...], xcol, preferred_element_type=jnp.float32)
        acc = acc + b_ref[...]                                          # (Cout, 1) bias
        if add is not None:
            acc = acc + add                                             # fused cond skip
        if temb is not None:
            acc = acc + temb                                            # fused t-embedding
        if relu:
            acc = jnp.maximum(acc, 0.0)
        return acc * mask                                 # re-zero the width-pad columns

    fl_win = windows(fl)                                  # fluid feeds 3 convs: hoisted

    # superres encoder
    skips_sr = conv(windows(low) + fl_win, srw1_ref, srb1_ref, relu=True)
    ssr_win = windows(skips_sr)                           # reused by decoder
    head_sr = conv(ssr_win, srw2_ref, srb2_ref, relu=False)

    # main encoder (cond_skips + time embedding fused into the first conv epilogue)
    skips = conv(windows(rt) + fl_win, enw1_ref, enb1_ref, relu=True,
                 add=skips_sr, temb=temb_ref[0])
    sk_win = windows(skips)                               # reused by decoder
    h = conv(sk_win, enw2_ref, enb2_ref, relu=True)

    # decoder (the channel concat is realised as im2col piece stacking; never materialised)
    d0 = conv(windows(h) + sk_win + ssr_win + windows(head_sr) + fl_win,
              dew1_ref, deb1_ref, relu=True)
    pred = conv(windows(d0), dew2_ref, deb2_ref, relu=False)

    loss_ref[0] = jnp.abs(pred - tgt)                     # fused per-pixel L1 (reduction='none')


# ------------------------------ layout / weight glue --------------------------------

def _pick_wp(H, W):
    """Smallest per-row width >= W+2 making the band lane-dense (H*wp % 128 == 0)."""
    wp = W + 2
    for k in range(129):
        if (H * (wp + k)) % 128 == 0:
            return wp + k
    return wp                                              # fallback: correct, just masked stores


def to_band(x, wp, cp=CP):
    """NCHW -> (B, CP, H*wp): channel-pad to CP, zero pad columns 0 and W+1..wp-1."""
    B, C, H, W = x.shape
    x = jnp.pad(x, ((0, 0), (0, cp - C), (0, 0), (1, wp - W - 1)))
    return x.reshape(B, cp, H * wp)


def from_band(x_band, C, H, W, wp):
    B = x_band.shape[0]
    return x_band.reshape(B, -1, H, wp)[:, :C, :, 1:W + 1]


def _stack_weight(w, splits, cout_pad=CP, cp=CP):
    """(9, Cout, Cin_tot) tap-major conv weight -> (cout_pad, 9*cp*len(splits)) bf16.

    Column order = source-major / tap-major / channel-minor, matching the kernel's im2col.
    Padding channels / output rows get zero weights, so results are bit-identical.
    """
    _, cout, _ = w.shape
    parts, off = [], 0
    for ch in splits:
        ws = w[:, :, off:off + ch]                                  # (9, Cout, ch)
        ws = jnp.pad(ws, ((0, 0), (0, cout_pad - cout), (0, cp - ch)))
        parts.append(jnp.transpose(ws, (1, 0, 2)).reshape(cout_pad, 9 * cp))
        off += ch
    return jnp.concatenate(parts, axis=1).astype(jnp.bfloat16)


def _pad_bias(b, cout_pad=CP):
    return jnp.pad(b, ((0, cout_pad - b.shape[0]), (0, 0)))


# --------------------------- schedule (tiny glue) ----------------------------

def logsnr_schedule_cosine(t, logsnr_min=-20.0, logsnr_max=20.0, shift=1.0):
    b = jnp.arctan(jnp.exp(-0.5 * logsnr_max))
    a = jnp.arctan(jnp.exp(-0.5 * logsnr_min)) - b
    return -2.0 * jnp.log(jnp.tan(a * t + b) * shift)


# ----------------------- synthetic encoder / decoder params -------------------------

def init_params(key, c_in=3, c_fluid=2, hidden=8):
    assert hidden == CP and c_in <= CP and c_fluid <= CP
    ks = jax.random.split(key, 12)

    def wconv(k, cin, cout):                 # (9 taps, Cout, Cin)
        return 0.1 * jax.random.normal(k, (9, cout, cin), jnp.float32)

    def bias(k, cout):
        return 0.01 * jax.random.normal(k, (cout, 1), jnp.float32)

    p = {}
    p["sr_w1"] = wconv(ks[0], c_in + c_fluid, hidden)
    p["sr_b1"] = bias(ks[1], hidden)
    p["sr_w2"] = wconv(ks[2], hidden, c_in)
    p["sr_b2"] = bias(ks[3], c_in)
    p["en_w1"] = wconv(ks[4], c_in + c_fluid, hidden)
    p["en_b1"] = bias(ks[5], hidden)
    p["en_temb"] = 0.1 * jax.random.normal(ks[6], (hidden,), jnp.float32)
    p["en_w2"] = wconv(ks[7], hidden, hidden)
    p["en_b2"] = bias(ks[8], hidden)
    dec_in = hidden * 3 + c_in + c_fluid
    p["de_w1"] = wconv(ks[9], dec_in, hidden)
    p["de_b1"] = bias(ks[10], hidden)
    p["de_w2"] = wconv(ks[11], hidden, c_in)
    p["de_b2"] = jnp.zeros((c_in, 1), jnp.float32)
    return p


# --------------------------- DiffusionModel.forward --------------------------

def diffusion_forward(p, lowres, snapshots, fluid, key, logsnr_shift=1.0):
    """Per-pixel 'v'-prediction diffusion training loss (reduction='none')."""
    # TODO(synk): only prediction_type='v' is implemented; the 'x'/'eps' branches and the
    # iterative sample() reverse-diffusion loop are omitted.
    B, C, H, W = snapshots.shape
    Cf = fluid.shape[1]
    hidden = p["en_temb"].shape[0]
    assert hidden == CP and C <= CP and Cf <= CP

    wp = _pick_wp(H, W)                         # lane-dense band: H*wp % 128 == 0
    lb = H * wp
    halo = max(128, ((wp + 1 + 127) // 128) * 128)

    tk, ek = jax.random.split(key)
    t = jax.random.uniform(tk, (B,), jnp.float32)
    logsnr = logsnr_schedule_cosine(t, shift=logsnr_shift)     # (B,) scalar schedule (glue)
    alpha = jnp.sqrt(jax.nn.sigmoid(logsnr)).reshape(B, 1, 1)
    sigma = jnp.sqrt(jax.nn.sigmoid(-logsnr)).reshape(B, 1, 1)
    eps = jax.random.normal(ek, snapshots.shape, jnp.float32)

    # Valid-pixel mask over the band's lane axis (zeroes the width-pad columns).
    mask = jnp.pad(jnp.ones((H, W), jnp.float32), ((0, 0), (1, wp - W - 1))).reshape(1, lb)

    low_b = to_band(lowres, wp)
    snap_b = to_band(snapshots, wp)
    eps_b = to_band(eps, wp)
    fl_b = to_band(fluid, wp)
    temb = jnp.pad((t[:, None] * p["en_temb"][None, :])[:, :, None],
                   ((0, 0), (0, CP - hidden), (0, 0)))          # (B, CP, 1)

    # Pre-stacked (Cout, 9*CP*n_src) bf16 weight matrices -> one MXU dot per conv.
    srw1 = _stack_weight(p["sr_w1"], [C, Cf]);                   srb1 = _pad_bias(p["sr_b1"])
    srw2 = _stack_weight(p["sr_w2"], [hidden]);                  srb2 = _pad_bias(p["sr_b2"])
    enw1 = _stack_weight(p["en_w1"], [C, Cf]);                   enb1 = _pad_bias(p["en_b1"])
    enw2 = _stack_weight(p["en_w2"], [hidden]);                  enb2 = _pad_bias(p["en_b2"])
    dew1 = _stack_weight(p["de_w1"], [hidden, hidden, hidden, C, Cf]); deb1 = _pad_bias(p["de_b1"])
    dew2 = _stack_weight(p["de_w2"], [hidden]);                  deb2 = _pad_bias(p["de_b2"])

    operands = [low_b, snap_b, eps_b, fl_b, mask, alpha, sigma, temb,
                srw1, srb1, srw2, srb2, enw1, enb1, enw2, enb2,
                dew1, deb1, dew2, deb2]

    def per_batch(arr):
        return pl.BlockSpec((1,) + arr.shape[1:], lambda b: (b,) + (0,) * (arr.ndim - 1))

    def shared(arr):
        return pl.BlockSpec(arr.shape, lambda b: (0,) * arr.ndim)

    in_specs = ([per_batch(low_b), per_batch(snap_b), per_batch(eps_b), per_batch(fl_b),
                 shared(mask), per_batch(alpha), per_batch(sigma), per_batch(temb)]
                + [shared(op) for op in operands[8:]])

    sum_cout_k = sum(w.shape[0] * w.shape[1] for w in (srw1, srw2, enw1, enw2, dew1, dew2))
    cost = pl.CostEstimate(
        flops=int(2 * B * lb * sum_cout_k),
        transcendentals=0,
        bytes_accessed=int(sum(op.size * op.dtype.itemsize for op in operands)
                           + 4 * B * CP * lb))

    kernel = functools.partial(_fused_forward_kernel, wp=wp, lb=lb, halo=halo)
    loss_b = pl.pallas_call(
        kernel,
        grid=(B,),
        in_specs=in_specs,
        out_specs=pl.BlockSpec((1, CP, lb), lambda b: (b, 0, 0)),
        out_shape=jax.ShapeDtypeStruct((B, CP, lb), jnp.float32),
        compiler_params=pltpu.CompilerParams(
            dimension_semantics=("parallel",)),       # B=2 -> one batch per TC on v7x
        cost_estimate=cost,
    )(*operands)

    return from_band(loss_b, C, H, W, wp)


# ----------------------------------- main ------------------------------------

if __name__ == "__main__":
    B, C, Cf, H, W = 2, 3, 2, 16, 16
    key = jax.random.PRNGKey(0)
    kp, kl, ks, kf, kd = jax.random.split(key, 5)

    params = init_params(kp, c_in=C, c_fluid=Cf, hidden=8)
    lowres_snapshots = jax.random.normal(kl, (B, C, H, W), jnp.float32)
    snapshots = jax.random.normal(ks, (B, C, H, W), jnp.float32)
    fluid_condition = jax.random.normal(kf, (B, Cf, H, W), jnp.float32)

    loss = diffusion_forward(params, lowres_snapshots, snapshots, fluid_condition, kd)
    jax.block_until_ready(loss)
    assert loss.shape == (B, C, H, W) and loss.dtype == jnp.float32
    assert bool(jnp.all(loss >= 0.0)) and bool(jnp.all(jnp.isfinite(loss)))
    print("KERNEL_OK")
</pallas_src>

<mosaic_0001>
module attributes {stable_mosaic.version = 11 : i64} {
  func.func @_fused_forward_kernel(%arg0: i32, %arg1: memref<1x8x384xf32, #tpu.memory_space<vmem>>, %arg2: memref<1x8x384xf32, #tpu.memory_space<vmem>>, %arg3: memref<1x8x384xf32, #tpu.memory_space<vmem>>, %arg4: memref<1x8x384xf32, #tpu.memory_space<vmem>>, %arg5: memref<1x384xf32, #tpu.memory_space<vmem>>, %arg6: memref<1x1x1xf32, #tpu.memory_space<vmem>>, %arg7: memref<1x1x1xf32, #tpu.memory_space<vmem>>, %arg8: memref<1x8x1xf32, #tpu.memory_space<vmem>>, %arg9: memref<8x144xbf16, #tpu.memory_space<vmem>>, %arg10: memref<8x1xf32, #tpu.memory_space<vmem>>, %arg11: memref<8x72xbf16, #tpu.memory_space<vmem>>, %arg12: memref<8x1xf32, #tpu.memory_space<vmem>>, %arg13: memref<8x144xbf16, #tpu.memory_space<vmem>>, %arg14: memref<8x1xf32, #tpu.memory_space<vmem>>, %arg15: memref<8x72xbf16, #tpu.memory_space<vmem>>, %arg16: memref<8x1xf32, #tpu.memory_space<vmem>>, %arg17: memref<8x360xbf16, #tpu.memory_space<vmem>>, %arg18: memref<8x1xf32, #tpu.memory_space<vmem>>, %arg19: memref<8x72xbf16, #tpu.memory_space<vmem>>, %arg20: memref<8x1xf32, #tpu.memory_space<vmem>>, %arg21: memref<1x8x384xf32, #tpu.memory_space<vmem>>) attributes {dimension_semantics = [#tpu.dimension_semantics<parallel>], iteration_bounds = array<i64: 2>, scalar_prefetch = 0 : i64, scratch_operands = 0 : i64, tpu.core_type = #tpu.core_type<tc>, window_params = [{transform_indices = @transform_0, window_bounds = array<i64: 1, 8, 384>}, {transform_indices = @transform_1, window_bounds = array<i64: 1, 8, 384>}, {transform_indices = @transform_2, window_bounds = array<i64: 1, 8, 384>}, {transform_indices = @transform_3, window_bounds = array<i64: 1, 8, 384>}, {pipeline_mode = #tpu.pipeline_mode<synchronous>, transform_indices = @transform_4, window_bounds = array<i64: 1, 384>}, {transform_indices = @transform_5, window_bounds = array<i64: 1, 1, 1>}, {transform_indices = @transform_6, window_bounds = array<i64: 1, 1, 1>}, {transform_indices = @transform_7, window_bounds = array<i64: 1, 8, 1>}, {pipeline_mode = #tpu.pipeline_mode<synchronous>, transform_indices = @transform_8, window_bounds = array<i64: 8, 144>}, {pipeline_mode = #tpu.pipeline_mode<synchronous>, transform_indices = @transform_9, window_bounds = array<i64: 8, 1>}, {pipeline_mode = #tpu.pipeline_mode<synchronous>, transform_indices = @transform_10, window_bounds = array<i64: 8, 72>}, {pipeline_mode = #tpu.pipeline_mode<synchronous>, transform_indices = @transform_11, window_bounds = array<i64: 8, 1>}, {pipeline_mode = #tpu.pipeline_mode<synchronous>, transform_indices = @transform_12, window_bounds = array<i64: 8, 144>}, {pipeline_mode = #tpu.pipeline_mode<synchronous>, transform_indices = @transform_13, window_bounds = array<i64: 8, 1>}, {pipeline_mode = #tpu.pipeline_mode<synchronous>, transform_indices = @transform_14, window_bounds = array<i64: 8, 72>}, {pipeline_mode = #tpu.pipeline_mode<synchronous>, transform_indices = @transform_15, window_bounds = array<i64: 8, 1>}, {pipeline_mode = #tpu.pipeline_mode<synchronous>, transform_indices = @transform_16, window_bounds = array<i64: 8, 360>}, {pipeline_mode = #tpu.pipeline_mode<synchronous>, transform_indices = @transform_17, window_bounds = array<i64: 8, 1>}, {pipeline_mode = #tpu.pipeline_mode<synchronous>, transform_indices = @transform_18, window_bounds = array<i64: 8, 72>}, {pipeline_mode = #tpu.pipeline_mode<synchronous>, transform_indices = @transform_19, window_bounds = array<i64: 8, 1>}, {transform_indices = @transform_20, window_bounds = array<i64: 1, 8, 384>}]} {
    %c0 = arith.constant 0 : index
    %c0_0 = arith.constant 0 : index
    %0 = vector.load %arg5[%c0, %c0_0] : memref<1x384xf32, #tpu.memory_space<vmem>>, vector<1x384xf32>
    %c0_1 = arith.constant 0 : index
    %c0_2 = arith.constant 0 : index
    %c0_3 = arith.constant 0 : index
    %1 = vector.load %arg6[%c0_1, %c0_2, %c0_3] : memref<1x1x1xf32, #tpu.memory_space<vmem>>, vector<1x1x1xf32>
    %2 = vector.shape_cast %1 : vector<1x1x1xf32> to vector<1x1xf32>
    %c0_4 = arith.constant 0 : index
    %c0_5 = arith.constant 0 : index
    %c0_6 = arith.constant 0 : index
    %3 = vector.load %arg7[%c0_4, %c0_5, %c0_6] : memref<1x1x1xf32, #tpu.memory_space<vmem>>, vector<1x1x1xf32>
    %4 = vector.shape_cast %3 : vector<1x1x1xf32> to vector<1x1xf32>
    %c0_7 = arith.constant 0 : index
    %c0_8 = arith.constant 0 : index
    %c0_9 = arith.constant 0 : index
    %5 = vector.load %arg1[%c0_7, %c0_8, %c0_9] : memref<1x8x384xf32, #tpu.memory_space<vmem>>, vector<1x8x384xf32>
    %6 = vector.shape_cast %5 : vector<1x8x384xf32> to vector<8x384xf32>
    %c0_10 = arith.constant 0 : index
    %c0_11 = arith.constant 0 : index
    %c0_12 = arith.constant 0 : index
    %7 = vector.load %arg2[%c0_10, %c0_11, %c0_12] : memref<1x8x384xf32, #tpu.memory_space<vmem>>, vector<1x8x384xf32>
    %8 = vector.shape_cast %7 : vector<1x8x384xf32> to vector<8x384xf32>
    %c0_13 = arith.constant 0 : index
    %c0_14 = arith.constant 0 : index
    %c0_15 = arith.constant 0 : index
    %9 = vector.load %arg3[%c0_13, %c0_14, %c0_15] : memref<1x8x384xf32, #tpu.memory_space<vmem>>, vector<1x8x384xf32>
    %10 = vector.shape_cast %9 : vector<1x8x384xf32> to vector<8x384xf32>
    %c0_16 = arith.constant 0 : index
    %c0_17 = arith.constant 0 : index
    %c0_18 = arith.constant 0 : index
    %11 = vector.load %arg4[%c0_16, %c0_17, %c0_18] : memref<1x8x384xf32, #tpu.memory_space<vmem>>, vector<1x8x384xf32>
    %12 = vector.shape_cast %11 : vector<1x8x384xf32> to vector<8x384xf32>
    %13 = arith.subf %8, %6 : vector<8x384xf32>
    %14 = vector.broadcast %2 : vector<1x1xf32> to vector<8x384xf32>
    %15 = arith.mulf %14, %13 : vector<8x384xf32>
    %16 = vector.broadcast %4 : vector<1x1xf32> to vector<8x384xf32>
    %17 = arith.mulf %16, %10 : vector<8x384xf32>
    %18 = arith.addf %15, %17 : vector<8x384xf32>
    %19 = vector.broadcast %2 : vector<1x1xf32> to vector<8x384xf32>
    %20 = arith.mulf %19, %10 : vector<8x384xf32>
    %21 = vector.broadcast %4 : vector<1x1xf32> to vector<8x384xf32>
    %22 = arith.mulf %21, %13 : vector<8x384xf32>
    %23 = arith.subf %20, %22 : vector<8x384xf32>
    %cst = arith.constant 0.000000e+00 : f32
    %24 = vector.broadcast %cst : f32 to vector<8x128xf32>
    %25 = tpu.concatenate %24, %12, %24 in 1 : vector<8x128xf32>, vector<8x384xf32>, vector<8x128xf32> -> vector<8x640xf32>
    %26 = vector.extract_strided_slice %25 {offsets = [0, 103], sizes = [8, 384], strides = [1, 1]} : vector<8x640xf32> to vector<8x384xf32>
    %27 = vector.extract_strided_slice %25 {offsets = [0, 104], sizes = [8, 384], strides = [1, 1]} : vector<8x640xf32> to vector<8x384xf32>
    %28 = vector.extract_strided_slice %25 {offsets = [0, 105], sizes = [8, 384], strides = [1, 1]} : vector<8x640xf32> to vector<8x384xf32>
    %29 = vector.extract_strided_slice %25 {offsets = [0, 127], sizes = [8, 384], strides = [1, 1]} : vector<8x640xf32> to vector<8x384xf32>
    %30 = vector.extract_strided_slice %25 {offsets = [0, 128], sizes = [8, 384], strides = [1, 1]} : vector<8x640xf32> to vector<8x384xf32>
    %31 = vector.extract_strided_slice %25 {offsets = [0, 129], sizes = [8, 384], strides = [1, 1]} : vector<8x640xf32> to vector<8x384xf32>
    %32 = vector.extract_strided_slice %25 {offsets = [0, 151], sizes = [8, 384], strides = [1, 1]} : vector<8x640xf32> to vector<8x384xf32>
    %33 = vector.extract_strided_slice %25 {offsets = [0, 152], sizes = [8, 384], strides = [1, 1]} : vector<8x640xf32> to vector<8x384xf32>
    %34 = vector.extract_strided_slice %25 {offsets = [0, 153], sizes = [8, 384], strides = [1, 1]} : vector<8x640xf32> to vector<8x384xf32>
    %cst_19 = arith.constant 0.000000e+00 : f32
    %35 = vector.broadcast %cst_19 : f32 to vector<8x128xf32>
    %36 = tpu.concatenate %35, %6, %35 in 1 : vector<8x128xf32>, vector<8x384xf32>, vector<8x128xf32> -> vector<8x640xf32>
    %37 = vector.extract_strided_slice %36 {offsets = [0, 103], sizes = [8, 384], strides = [1, 1]} : vector<8x640xf32> to vector<8x384xf32>
    %38 = vector.extract_strided_slice %36 {offsets = [0, 104], sizes = [8, 384], strides = [1, 1]} : vector<8x640xf32> to vector<8x384xf32>
    %39 = vector.extract_strided_slice %36 {offsets = [0, 105], sizes = [8, 384], strides = [1, 1]} : vector<8x640xf32> to vector<8x384xf32>
    %40 = vector.extract_strided_slice %36 {offsets = [0, 127], sizes = [8, 384], strides = [1, 1]} : vector<8x640xf32> to vector<8x384xf32>
    %41 = vector.extract_strided_slice %36 {offsets = [0, 128], sizes = [8, 384], strides = [1, 1]} : vector<8x640xf32> to vector<8x384xf32>
    %42 = vector.extract_strided_slice %36 {offsets = [0, 129], sizes = [8, 384], strides = [1, 1]} : vector<8x640xf32> to vector<8x384xf32>
    %43 = vector.extract_strided_slice %36 {offsets = [0, 151], sizes = [8, 384], strides = [1, 1]} : vector<8x640xf32> to vector<8x384xf32>
    %44 = vector.extract_strided_slice %36 {offsets = [0, 152], sizes = [8, 384], strides = [1, 1]} : vector<8x640xf32> to vector<8x384xf32>
    %45 = vector.extract_strided_slice %36 {offsets = [0, 153], sizes = [8, 384], strides = [1, 1]} : vector<8x640xf32> to vector<8x384xf32>
    %46 = tpu.concatenate %37, %38, %39, %40, %41, %42, %43, %44, %45, %26, %27, %28, %29, %30, %31, %32 in 0 : vector<8x384xf32>, vector<8x384xf32>, vector<8x384xf32>, vector<8x384xf32>, vector<8x384xf32>, vector<8x384xf32>, vector<8x384xf32>, vector<8x384xf32>, vector<8x384xf32>, vector<8x384xf32>, vector<8x384xf32>, vector<8x384xf32>, vector<8x384xf32>, vector<8x384xf32>, vector<8x384xf32>, vector<8x384xf32> -> vector<128x384xf32>
    %47 = tpu.concatenate %33, %34 in 0 : vector<8x384xf32>, vector<8x384xf32> -> vector<16x384xf32>
    %48 = tpu.concatenate %46, %47 in 0 : vector<128x384xf32>, vector<16x384xf32> -> vector<144x384xf32>
    %49 = arith.truncf %48 : vector<144x384xf32> to vector<144x384xbf16>
    %c0_20 = arith.constant 0 : index
    %c0_21 = arith.constant 0 : index
    %50 = vector.load %arg9[%c0_20, %c0_21] : memref<8x144xbf16, #tpu.memory_space<vmem>>, vector<8x144xbf16>
    %cst_22 = arith.constant dense<0.000000e+00> : vector<8x384xf32>
    %51 = tpu.matmul %50, %49, %cst_22 {dimension_numbers = #tpu.dot_dimension_numbers<[1], [0], [0], [1], [0, 0, 1, 1], [], []>} : vector<8x144xbf16>, vector<144x384xbf16>, vector<8x384xf32> -> vector<8x384xf32>
    %c0_23 = arith.constant 0 : index
    %c0_24 = arith.constant 0 : index
    %52 = vector.load %arg10[%c0_23, %c0_24] : memref<8x1xf32, #tpu.memory_space<vmem>>, vector<8x1xf32>
    %53 = vector.broadcast %52 : vector<8x1xf32> to vector<8x384xf32>
    %54 = arith.addf %51, %53 : vector<8x384xf32>
    %cst_25 = arith.constant 0.000000e+00 : f32
    %55 = vector.broadcast %cst_25 : f32 to vector<8x384xf32>
    %56 = arith.maximumf %54, %55 : vector<8x384xf32>
    %57 = vector.broadcast %0 : vector<1x384xf32> to vector<8x384xf32>
    %58 = arith.mulf %56, %57 : vector<8x384xf32>
    %cst_26 = arith.constant 0.000000e+00 : f32
    %59 = vector.broadcast %cst_26 : f32 to vector<8x128xf32>
    %60 = tpu.concatenate %59, %58, %59 in 1 : vector<8x128xf32>, vector<8x384xf32>, vector<8x128xf32> -> vector<8x640xf32>
    %61 = vector.extract_strided_slice %60 {offsets = [0, 103], sizes = [8, 384], strides = [1, 1]} : vector<8x640xf32> to vector<8x384xf32>
    %62 = vector.extract_strided_slice %60 {offsets = [0, 104], sizes = [8, 384], strides = [1, 1]} : vector<8x640xf32> to vector<8x384xf32>
    %63 = vector.extract_strided_slice %60 {offsets = [0, 105], sizes = [8, 384], strides = [1, 1]} : vector<8x640xf32> to vector<8x384xf32>
    %64 = vector.extract_strided_slice %60 {offsets = [0, 127], sizes = [8, 384], strides = [1, 1]} : vector<8x640xf32> to vector<8x384xf32>
    %65 = vector.extract_strided_slice %60 {offsets = [0, 128], sizes = [8, 384], strides = [1, 1]} : vector<8x640xf32> to vector<8x384xf32>
    %66 = vector.extract_strided_slice %60 {offsets = [0, 129], sizes = [8, 384], strides = [1, 1]} : vector<8x640xf32> to vector<8x384xf32>
    %67 = vector.extract_strided_slice %60 {offsets = [0, 151], sizes = [8, 384], strides = [1, 1]} : vector<8x640xf32> to vector<8x384xf32>
    %68 = vector.extract_strided_slice %60 {offsets = [0, 152], sizes = [8, 384], strides = [1, 1]} : vector<8x640xf32> to vector<8x384xf32>
    %69 = vector.extract_strided_slice %60 {offsets = [0, 153], sizes = [8, 384], strides = [1, 1]} : vector<8x640xf32> to vector<8x384xf32>
    %70 = tpu.concatenate %61, %62, %63, %64, %65, %66, %67, %68, %69 in 0 : vector<8x384xf32>, vector<8x384xf32>, vector<8x384xf32>, vector<8x384xf32>, vector<8x384xf32>, vector<8x384xf32>, vector<8x384xf32>, vector<8x384xf32>, vector<8x384xf32> -> vector<72x384xf32>
    %71 = arith.truncf %70 : vector<72x384xf32> to vector<72x384xbf16>
    %c0_27 = arith.constant 0 : index
    %c0_28 = arith.constant 0 : index
    %72 = vector.load %arg11[%c0_27, %c0_28] : memref<8x72xbf16, #tpu.memory_space<vmem>>, vector<8x72xbf16>
    %cst_29 = arith.constant dense<0.000000e+00> : vector<8x384xf32>
    %73 = tpu.matmul %72, %71, %cst_29 {dimension_numbers = #tpu.dot_dimension_numbers<[1], [0], [0], [1], [0, 0, 1, 1], [], []>} : vector<8x72xbf16>, vector<72x384xbf16>, vector<8x384xf32> -> vector<8x384xf32>
    %c0_30 = arith.constant 0 : index
    %c0_31 = arith.constant 0 : index
    %74 = vector.load %arg12[%c0_30, %c0_31] : memref<8x1xf32, #tpu.memory_space<vmem>>, vector<8x1xf32>
    %75 = vector.broadcast %74 : vector<8x1xf32> to vector<8x384xf32>
    %76 = arith.addf %73, %75 : vector<8x384xf32>
    %77 = vector.broadcast %0 : vector<1x384xf32> to vector<8x384xf32>
    %78 = arith.mulf %76, %77 : vector<8x384xf32>
    %cst_32 = arith.constant 0.000000e+00 : f32
    %79 = vector.broadcast %cst_32 : f32 to vector<8x128xf32>
    %80 = tpu.concatenate %79, %18, %79 in 1 : vector<8x128xf32>, vector<8x384xf32>, vector<8x128xf32> -> vector<8x640xf32>
    %81 = vector.extract_strided_slice %80 {offsets = [0, 103], sizes = [8, 384], strides = [1, 1]} : vector<8x640xf32> to vector<8x384xf32>
    %82 = vector.extract_strided_slice %80 {offsets = [0, 104], sizes = [8, 384], strides = [1, 1]} : vector<8x640xf32> to vector<8x384xf32>
    %83 = vector.extract_strided_slice %80 {offsets = [0, 105], sizes = [8, 384], strides = [1, 1]} : vector<8x640xf32> to vector<8x384xf32>
    %84 = vector.extract_strided_slice %80 {offsets = [0, 127], sizes = [8, 384], strides = [1, 1]} : vector<8x640xf32> to vector<8x384xf32>
    %85 = vector.extract_strided_slice %80 {offsets = [0, 128], sizes = [8, 384], strides = [1, 1]} : vector<8x640xf32> to vector<8x384xf32>
    %86 = vector.extract_strided_slice %80 {offsets = [0, 129], sizes = [8, 384], strides = [1, 1]} : vector<8x640xf32> to vector<8x384xf32>
    %87 = vector.extract_strided_slice %80 {offsets = [0, 151], sizes = [8, 384], strides = [1, 1]} : vector<8x640xf32> to vector<8x384xf32>
    %88 = vector.extract_strided_slice %80 {offsets = [0, 152], sizes = [8, 384], strides = [1, 1]} : vector<8x640xf32> to vector<8x384xf32>
    %89 = vector.extract_strided_slice %80 {offsets = [0, 153], sizes = [8, 384], strides = [1, 1]} : vector<8x640xf32> to vector<8x384xf32>
    %c0_33 = arith.constant 0 : index
    %c0_34 = arith.constant 0 : index
    %c0_35 = arith.constant 0 : index
    %90 = vector.load %arg8[%c0_33, %c0_34, %c0_35] : memref<1x8x1xf32, #tpu.memory_space<vmem>>, vector<1x8x1xf32>
    %91 = vector.shape_cast %90 : vector<1x8x1xf32> to vector<8x1xf32>
    %92 = tpu.concatenate %81, %82, %83, %84, %85, %86, %87, %88, %89, %26, %27, %28, %29, %30, %31, %32 in 0 : vector<8x384xf32>, vector<8x384xf32>, vector<8x384xf32>, vector<8x384xf32>, vector<8x384xf32>, vector<8x384xf32>, vector<8x384xf32>, vector<8x384xf32>, vector<8x384xf32>, vector<8x384xf32>, vector<8x384xf32>, vector<8x384xf32>, vector<8x384xf32>, vector<8x384xf32>, vector<8x384xf32>, vector<8x384xf32> -> vector<128x384xf32>
    %93 = tpu.concatenate %33, %34 in 0 : vector<8x384xf32>, vector<8x384xf32> -> vector<16x384xf32>
    %94 = tpu.concatenate %92, %93 in 0 : vector<128x384xf32>, vector<16x384xf32> -> vector<144x384xf32>
    %95 = arith.truncf %94 : vector<144x384xf32> to vector<144x384xbf16>
    %c0_36 = arith.constant 0 : index
    %c0_37 = arith.constant 0 : index
    %96 = vector.load %arg13[%c0_36, %c0_37] : memref<8x144xbf16, #tpu.memory_space<vmem>>, vector<8x144xbf16>
    %cst_38 = arith.constant dense<0.000000e+00> : vector<8x384xf32>
    %97 = tpu.matmul %96, %95, %cst_38 {dimension_numbers = #tpu.dot_dimension_numbers<[1], [0], [0], [1], [0, 0, 1, 1], [], []>} : vector<8x144xbf16>, vector<144x384xbf16>, vector<8x384xf32> -> vector<8x384xf32>
    %c0_39 = arith.constant 0 : index
    %c0_40 = arith.constant 0 : index
    %98 = vector.load %arg14[%c0_39, %c0_40] : memref<8x1xf32, #tpu.memory_space<vmem>>, vector<8x1xf32>
    %99 = vector.broadcast %98 : vector<8x1xf32> to vector<8x384xf32>
    %100 = arith.addf %97, %99 : vector<8x384xf32>
    %101 = arith.addf %100, %58 : vector<8x384xf32>
    %102 = vector.broadcast %91 : vector<8x1xf32> to vector<8x384xf32>
    %103 = arith.addf %101, %102 : vector<8x384xf32>
    %cst_41 = arith.constant 0.000000e+00 : f32
    %104 = vector.broadcast %cst_41 : f32 to vector<8x384xf32>
    %105 = arith.maximumf %103, %104 : vector<8x384xf32>
    %106 = vector.broadcast %0 : vector<1x384xf32> to vector<8x384xf32>
    %107 = arith.mulf %105, %106 : vector<8x384xf32>
    %cst_42 = arith.constant 0.000000e+00 : f32
    %108 = vector.broadcast %cst_42 : f32 to vector<8x128xf32>
    %109 = tpu.concatenate %108, %107, %108 in 1 : vector<8x128xf32>, vector<8x384xf32>, vector<8x128xf32> -> vector<8x640xf32>
    %110 = vector.extract_strided_slice %109 {offsets = [0, 103], sizes = [8, 384], strides = [1, 1]} : vector<8x640xf32> to vector<8x384xf32>
    %111 = vector.extract_strided_slice %109 {offsets = [0, 104], sizes = [8, 384], strides = [1, 1]} : vector<8x640xf32> to vector<8x384xf32>
    %112 = vector.extract_strided_slice %109 {offsets = [0, 105], sizes = [8, 384], strides = [1, 1]} : vector<8x640xf32> to vector<8x384xf32>
    %113 = vector.extract_strided_slice %109 {offsets = [0, 127], sizes = [8, 384], strides = [1, 1]} : vector<8x640xf32> to vector<8x384xf32>
    %114 = vector.extract_strided_slice %109 {offsets = [0, 128], sizes = [8, 384], strides = [1, 1]} : vector<8x640xf32> to vector<8x384xf32>
    %115 = vector.extract_strided_slice %109 {offsets = [0, 129], sizes = [8, 384], strides = [1, 1]} : vector<8x640xf32> to vector<8x384xf32>
    %116 = vector.extract_strided_slice %109 {offsets = [0, 151], sizes = [8, 384], strides = [1, 1]} : vector<8x640xf32> to vector<8x384xf32>
    %117 = vector.extract_strided_slice %109 {offsets = [0, 152], sizes = [8, 384], strides = [1, 1]} : vector<8x640xf32> to vector<8x384xf32>
    %118 = vector.extract_strided_slice %109 {offsets = [0, 153], sizes = [8, 384], strides = [1, 1]} : vector<8x640xf32> to vector<8x384xf32>
    %119 = tpu.concatenate %110, %111, %112, %113, %114, %115, %116, %117, %118 in 0 : vector<8x384xf32>, vector<8x384xf32>, vector<8x384xf32>, vector<8x384xf32>, vector<8x384xf32>, vector<8x384xf32>, vector<8x384xf32>, vector<8x384xf32>, vector<8x384xf32> -> vector<72x384xf32>
    %120 = arith.truncf %119 : vector<72x384xf32> to vector<72x384xbf16>
    %c0_43 = arith.constant 0 : index
    %c0_44 = arith.constant 0 : index
    %121 = vector.load %arg15[%c0_43, %c0_44] : memref<8x72xbf16, #tpu.memory_space<vmem>>, vector<8x72xbf16>
    %cst_45 = arith.constant dense<0.000000e+00> : vector<8x384xf32>
    %122 = tpu.matmul %121, %120, %cst_45 {dimension_numbers = #tpu.dot_dimension_numbers<[1], [0], [0], [1], [0, 0, 1, 1], [], []>} : vector<8x72xbf16>, vector<72x384xbf16>, vector<8x384xf32> -> vector<8x384xf32>
    %c0_46 = arith.constant 0 : index
    %c0_47 = arith.constant 0 : index
    %123 = vector.load %arg16[%c0_46, %c0_47] : memref<8x1xf32, #tpu.memory_space<vmem>>, vector<8x1xf32>
    %124 = vector.broadcast %123 : vector<8x1xf32> to vector<8x384xf32>
    %125 = arith.addf %122, %124 : vector<8x384xf32>
    %cst_48 = arith.constant 0.000000e+00 : f32
    %126 = vector.broadcast %cst_48 : f32 to vector<8x384xf32>
    %127 = arith.maximumf %125, %126 : vector<8x384xf32>
    %128 = vector.broadcast %0 : vector<1x384xf32> to vector<8x384xf32>
    %129 = arith.mulf %127, %128 : vector<8x384xf32>
    %cst_49 = arith.constant 0.000000e+00 : f32
    %130 = vector.broadcast %cst_49 : f32 to vector<8x128xf32>
    %131 = tpu.concatenate %130, %129, %130 in 1 : vector<8x128xf32>, vector<8x384xf32>, vector<8x128xf32> -> vector<8x640xf32>
    %132 = vector.extract_strided_slice %131 {offsets = [0, 103], sizes = [8, 384], strides = [1, 1]} : vector<8x640xf32> to vector<8x384xf32>
    %133 = vector.extract_strided_slice %131 {offsets = [0, 104], sizes = [8, 384], strides = [1, 1]} : vector<8x640xf32> to vector<8x384xf32>
    %134 = vector.extract_strided_slice %131 {offsets = [0, 105], sizes = [8, 384], strides = [1, 1]} : vector<8x640xf32> to vector<8x384xf32>
    %135 = vector.extract_strided_slice %131 {offsets = [0, 127], sizes = [8, 384], strides = [1, 1]} : vector<8x640xf32> to vector<8x384xf32>
    %136 = vector.extract_strided_slice %131 {offsets = [0, 128], sizes = [8, 384], strides = [1, 1]} : vector<8x640xf32> to vector<8x384xf32>
    %137 = vector.extract_strided_slice %131 {offsets = [0, 129], sizes = [8, 384], strides = [1, 1]} : vector<8x640xf32> to vector<8x384xf32>
    %138 = vector.extract_strided_slice %131 {offsets = [0, 151], sizes = [8, 384], strides = [1, 1]} : vector<8x640xf32> to vector<8x384xf32>
    %139 = vector.extract_strided_slice %131 {offsets = [0, 152], sizes = [8, 384], strides = [1, 1]} : vector<8x640xf32> to vector<8x384xf32>
    %140 = vector.extract_strided_slice %131 {offsets = [0, 153], sizes = [8, 384], strides = [1, 1]} : vector<8x640xf32> to vector<8x384xf32>
    %cst_50 = arith.constant 0.000000e+00 : f32
    %141 = vector.broadcast %cst_50 : f32 to vector<8x128xf32>
    %142 = tpu.concatenate %141, %78, %141 in 1 : vector<8x128xf32>, vector<8x384xf32>, vector<8x128xf32> -> vector<8x640xf32>
    %143 = vector.extract_strided_slice %142 {offsets = [0, 103], sizes = [8, 384], strides = [1, 1]} : vector<8x640xf32> to vector<8x384xf32>
    %144 = vector.extract_strided_slice %142 {offsets = [0, 104], sizes = [8, 384], strides = [1, 1]} : vector<8x640xf32> to vector<8x384xf32>
    %145 = vector.extract_strided_slice %142 {offsets = [0, 105], sizes = [8, 384], strides = [1, 1]} : vector<8x640xf32> to vector<8x384xf32>
    %146 = vector.extract_strided_slice %142 {offsets = [0, 127], sizes = [8, 384], strides = [1, 1]} : vector<8x640xf32> to vector<8x384xf32>
    %147 = vector.extract_strided_slice %142 {offsets = [0, 128], sizes = [8, 384], strides = [1, 1]} : vector<8x640xf32> to vector<8x384xf32>
    %148 = vector.extract_strided_slice %142 {offsets = [0, 129], sizes = [8, 384], strides = [1, 1]} : vector<8x640xf32> to vector<8x384xf32>
    %149 = vector.extract_strided_slice %142 {offsets = [0, 151], sizes = [8, 384], strides = [1, 1]} : vector<8x640xf32> to vector<8x384xf32>
    %150 = vector.extract_strided_slice %142 {offsets = [0, 152], sizes = [8, 384], strides = [1, 1]} : vector<8x640xf32> to vector<8x384xf32>
    %151 = vector.extract_strided_slice %142 {offsets = [0, 153], sizes = [8, 384], strides = [1, 1]} : vector<8x640xf32> to vector<8x384xf32>
    %152 = tpu.concatenate %132, %133, %134, %135, %136, %137, %138, %139, %140, %110, %111, %112, %113, %114, %115, %116 in 0 : vector<8x384xf32>, vector<8x384xf32>, vector<8x384xf32>, vector<8x384xf32>, vector<8x384xf32>, vector<8x384xf32>, vector<8x384xf32>, vector<8x384xf32>, vector<8x384xf32>, vector<8x384xf32>, vector<8x384xf32>, vector<8x384xf32>, vector<8x384xf32>, vector<8x384xf32>, vector<8x384xf32>, vector<8x384xf32> -> vector<128x384xf32>
    %153 = tpu.concatenate %117, %118, %61, %62, %63, %64, %65, %66, %67, %68, %69, %143, %144, %145, %146, %147 in 0 : vector<8x384xf32>, vector<8x384xf32>, vector<8x384xf32>, vector<8x384xf32>, vector<8x384xf32>, vector<8x384xf32>, vector<8x384xf32>, vector<8x384xf32>, vector<8x384xf32>, vector<8x384xf32>, vector<8x384xf32>, vector<8x384xf32>, vector<8x384xf32>, vector<8x384xf32>, vector<8x384xf32>, vector<8x384xf32> -> vector<128x384xf32>
    %154 = tpu.concatenate %148, %149, %150, %151, %26, %27, %28, %29, %30, %31, %32, %33, %34 in 0 : vector<8x384xf32>, vector<8x384xf32>, vector<8x384xf32>, vector<8x384xf32>, vector<8x384xf32>, vector<8x384xf32>, vector<8x384xf32>, vector<8x384xf32>, vector<8x384xf32>, vector<8x384xf32>, vector<8x384xf32>, vector<8x384xf32>, vector<8x384xf32> -> vector<104x384xf32>
    %155 = tpu.concatenate %152, %153, %154 in 0 : vector<128x384xf32>, vector<128x384xf32>, vector<104x384xf32> -> vector<360x384xf32>
    %156 = arith.truncf %155 : vector<360x384xf32> to vector<360x384xbf16>
    %c0_51 = arith.constant 0 : index
    %c0_52 = arith.constant 0 : index
    %157 = vector.load %arg17[%c0_51, %c0_52] : memref<8x360xbf16, #tpu.memory_space<vmem>>, vector<8x360xbf16>
    %cst_53 = arith.constant dense<0.000000e+00> : vector<8x384xf32>
    %158 = tpu.matmul %157, %156, %cst_53 {dimension_numbers = #tpu.dot_dimension_numbers<[1], [0], [0], [1], [0, 0, 1, 1], [], []>} : vector<8x360xbf16>, vector<360x384xbf16>, vector<8x384xf32> -> vector<8x384xf32>
    %c0_54 = arith.constant 0 : index
    %c0_55 = arith.constant 0 : index
    %159 = vector.load %arg18[%c0_54, %c0_55] : memref<8x1xf32, #tpu.memory_space<vmem>>, vector<8x1xf32>
    %160 = vector.broadcast %159 : vector<8x1xf32> to vector<8x384xf32>
    %161 = arith.addf %158, %160 : vector<8x384xf32>
    %cst_56 = arith.constant 0.000000e+00 : f32
    %162 = vector.broadcast %cst_56 : f32 to vector<8x384xf32>
    %163 = arith.maximumf %161, %162 : vector<8x384xf32>
    %164 = vector.broadcast %0 : vector<1x384xf32> to vector<8x384xf32>
    %165 = arith.mulf %163, %164 : vector<8x384xf32>
    %cst_57 = arith.constant 0.000000e+00 : f32
    %166 = vector.broadcast %cst_57 : f32 to vector<8x128xf32>
    %167 = tpu.concatenate %166, %165, %166 in 1 : vector<8x128xf32>, vector<8x384xf32>, vector<8x128xf32> -> vector<8x640xf32>
    %168 = vector.extract_strided_slice %167 {offsets = [0, 103], sizes = [8, 384], strides = [1, 1]} : vector<8x640xf32> to vector<8x384xf32>
    %169 = vector.extract_strided_slice %167 {offsets = [0, 104], sizes = [8, 384], strides = [1, 1]} : vector<8x640xf32> to vector<8x384xf32>
    %170 = vector.extract_strided_slice %167 {offsets = [0, 105], sizes = [8, 384], strides = [1, 1]} : vector<8x640xf32> to vector<8x384xf32>
    %171 = vector.extract_strided_slice %167 {offsets = [0, 127], sizes = [8, 384], strides = [1, 1]} : vector<8x640xf32> to vector<8x384xf32>
    %172 = vector.extract_strided_slice %167 {offsets = [0, 128], sizes = [8, 384], strides = [1, 1]} : vector<8x640xf32> to vector<8x384xf32>
    %173 = vector.extract_strided_slice %167 {offsets = [0, 129], sizes = [8, 384], strides = [1, 1]} : vector<8x640xf32> to vector<8x384xf32>
    %174 = vector.extract_strided_slice %167 {offsets = [0, 151], sizes = [8, 384], strides = [1, 1]} : vector<8x640xf32> to vector<8x384xf32>
    %175 = vector.extract_strided_slice %167 {offsets = [0, 152], sizes = [8, 384], strides = [1, 1]} : vector<8x640xf32> to vector<8x384xf32>
    %176 = vector.extract_strided_slice %167 {offsets = [0, 153], sizes = [8, 384], strides = [1, 1]} : vector<8x640xf32> to vector<8x384xf32>
    %177 = tpu.concatenate %168, %169, %170, %171, %172, %173, %174, %175, %176 in 0 : vector<8x384xf32>, vector<8x384xf32>, vector<8x384xf32>, vector<8x384xf32>, vector<8x384xf32>, vector<8x384xf32>, vector<8x384xf32>, vector<8x384xf32>, vector<8x384xf32> -> vector<72x384xf32>
    %178 = arith.truncf %177 : vector<72x384xf32> to vector<72x384xbf16>
    %c0_58 = arith.constant 0 : index
    %c0_59 = arith.constant 0 : index
    %179 = vector.load %arg19[%c0_58, %c0_59] : memref<8x72xbf16, #tpu.memory_space<vmem>>, vector<8x72xbf16>
    %cst_60 = arith.constant dense<0.000000e+00> : vector<8x384xf32>
    %180 = tpu.matmul %179, %178, %cst_60 {dimension_numbers = #tpu.dot_dimension_numbers<[1], [0], [0], [1], [0, 0, 1, 1], [], []>} : vector<8x72xbf16>, vector<72x384xbf16>, vector<8x384xf32> -> vector<8x384xf32>
    %c0_61 = arith.constant 0 : index
    %c0_62 = arith.constant 0 : index
    %181 = vector.load %arg20[%c0_61, %c0_62] : memref<8x1xf32, #tpu.memory_space<vmem>>, vector<8x1xf32>
    %182 = vector.broadcast %181 : vector<8x1xf32> to vector<8x384xf32>
    %183 = arith.addf %180, %182 : vector<8x384xf32>
    %184 = vector.broadcast %0 : vector<1x384xf32> to vector<8x384xf32>
    %185 = arith.mulf %183, %184 : vector<8x384xf32>
    %186 = arith.subf %185, %23 : vector<8x384xf32>
    %187 = math.absf %186 : vector<8x384xf32>
    %c0_63 = arith.constant 0 : index
    %c0_64 = arith.constant 0 : index
    %c0_65 = arith.constant 0 : index
    %188 = vector.load %arg21[%c0_63, %c0_64, %c0_65] : memref<1x8x384xf32, #tpu.memory_space<vmem>>, vector<1x8x384xf32>
    %189 = vector.shape_cast %188 : vector<1x8x384xf32> to vector<8x384xf32>
    %190 = vector.shape_cast %187 : vector<8x384xf32> to vector<1x8x384xf32>
    tpu.vector_store %arg21[%c0_63, %c0_64, %c0_65], %190 {strides = array<i32>} : memref<1x8x384xf32, #tpu.memory_space<vmem>>, vector<1x8x384xf32>,
    return
  }
  func.func @transform_0(%arg0: i32) -> (i32, i32, i32) {
    %c0_i32 = arith.constant 0 : i32
    %c0_i32_0 = arith.constant 0 : i32
    %c0_i32_1 = arith.constant 0 : i32
    return %arg0, %c0_i32, %c0_i32_0 : i32, i32, i32
  }
  func.func @transform_1(%arg0: i32) -> (i32, i32, i32) {
    %c0_i32 = arith.constant 0 : i32
    %c0_i32_0 = arith.constant 0 : i32
    %c0_i32_1 = arith.constant 0 : i32
    return %arg0, %c0_i32, %c0_i32_0 : i32, i32, i32
  }
  func.func @transform_2(%arg0: i32) -> (i32, i32, i32) {
    %c0_i32 = arith.constant 0 : i32
    %c0_i32_0 = arith.constant 0 : i32
    %c0_i32_1 = arith.constant 0 : i32
    return %arg0, %c0_i32, %c0_i32_0 : i32, i32, i32
  }
  func.func @transform_3(%arg0: i32) -> (i32, i32, i32) {
    %c0_i32 = arith.constant 0 : i32
    %c0_i32_0 = arith.constant 0 : i32
    %c0_i32_1 = arith.constant 0 : i32
    return %arg0, %c0_i32, %c0_i32_0 : i32, i32, i32
  }
  func.func @transform_4(%arg0: i32) -> (i32, i32) {
    %c0_i32 = arith.constant 0 : i32
    %c0_i32_0 = arith.constant 0 : i32
    %c0_i32_1 = arith.constant 0 : i32
    return %c0_i32, %c0_i32_0 : i32, i32
  }
  func.func @transform_5(%arg0: i32) -> (i32, i32, i32) {
    %c0_i32 = arith.constant 0 : i32
    %c0_i32_0 = arith.constant 0 : i32
    %c0_i32_1 = arith.constant 0 : i32
    return %arg0, %c0_i32, %c0_i32_0 : i32, i32, i32
  }
  func.func @transform_6(%arg0: i32) -> (i32, i32, i32) {
    %c0_i32 = arith.constant 0 : i32
    %c0_i32_0 = arith.constant 0 : i32
    %c0_i32_1 = arith.constant 0 : i32
    return %arg0, %c0_i32, %c0_i32_0 : i32, i32, i32
  }
  func.func @transform_7(%arg0: i32) -> (i32, i32, i32) {
    %c0_i32 = arith.constant 0 : i32
    %c0_i32_0 = arith.constant 0 : i32
    %c0_i32_1 = arith.constant 0 : i32
    return %arg0, %c0_i32, %c0_i32_0 : i32, i32, i32
  }
  func.func @transform_8(%arg0: i32) -> (i32, i32) {
    %c0_i32 = arith.constant 0 : i32
    %c0_i32_0 = arith.constant 0 : i32
    %c0_i32_1 = arith.constant 0 : i32
    return %c0_i32, %c0_i32_0 : i32, i32
  }
  func.func @transform_9(%arg0: i32) -> (i32, i32) {
    %c0_i32 = arith.constant 0 : i32
    %c0_i32_0 = arith.constant 0 : i32
    %c0_i32_1 = arith.constant 0 : i32
    return %c0_i32, %c0_i32_0 : i32, i32
  }
  func.func @transform_10(%arg0: i32) -> (i32, i32) {
    %c0_i32 = arith.constant 0 : i32
    %c0_i32_0 = arith.constant 0 : i32
    %c0_i32_1 = arith.constant 0 : i32
    return %c0_i32, %c0_i32_0 : i32, i32
  }
  func.func @transform_11(%arg0: i32) -> (i32, i32) {
    %c0_i32 = arith.constant 0 : i32
    %c0_i32_0 = arith.constant 0 : i32
    %c0_i32_1 = arith.constant 0 : i32
    return %c0_i32, %c0_i32_0 : i32, i32
  }
  func.func @transform_12(%arg0: i32) -> (i32, i32) {
    %c0_i32 = arith.constant 0 : i32
    %c0_i32_0 = arith.constant 0 : i32
    %c0_i32_1 = arith.constant 0 : i32
    return %c0_i32, %c0_i32_0 : i32, i32
  }
  func.func @transform_13(%arg0: i32) -> (i32, i32) {
    %c0_i32 = arith.constant 0 : i32
    %c0_i32_0 = arith.constant 0 : i32
    %c0_i32_1 = arith.constant 0 : i32
    return %c0_i32, %c0_i32_0 : i32, i32
  }
  func.func @transform_14(%arg0: i32) -> (i32, i32) {
    %c0_i32 = arith.constant 0 : i32
    %c0_i32_0 = arith.constant 0 : i32
    %c0_i32_1 = arith.constant 0 : i32
    return %c0_i32, %c0_i32_0 : i32, i32
  }
  func.func @transform_15(%arg0: i32) -> (i32, i32) {
    %c0_i32 = arith.constant 0 : i32
    %c0_i32_0 = arith.constant 0 : i32
    %c0_i32_1 = arith.constant 0 : i32
    return %c0_i32, %c0_i32_0 : i32, i32
  }
  func.func @transform_16(%arg0: i32) -> (i32, i32) {
    %c0_i32 = arith.constant 0 : i32
    %c0_i32_0 = arith.constant 0 : i32
    %c0_i32_1 = arith.constant 0 : i32
    return %c0_i32, %c0_i32_0 : i32, i32
  }
  func.func @transform_17(%arg0: i32) -> (i32, i32) {
    %c0_i32 = arith.constant 0 : i32
    %c0_i32_0 = arith.constant 0 : i32
    %c0_i32_1 = arith.constant 0 : i32
    return %c0_i32, %c0_i32_0 : i32, i32
  }
  func.func @transform_18(%arg0: i32) -> (i32, i32) {
    %c0_i32 = arith.constant 0 : i32
    %c0_i32_0 = arith.constant 0 : i32
    %c0_i32_1 = arith.constant 0 : i32
    return %c0_i32, %c0_i32_0 : i32, i32
  }
  func.func @transform_19(%arg0: i32) -> (i32, i32) {
    %c0_i32 = arith.constant 0 : i32
    %c0_i32_0 = arith.constant 0 : i32
    %c0_i32_1 = arith.constant 0 : i32
    return %c0_i32, %c0_i32_0 : i32, i32
  }
  func.func @transform_20(%arg0: i32) -> (i32, i32, i32) {
    %c0_i32 = arith.constant 0 : i32
    %c0_i32_0 = arith.constant 0 : i32
    %c0_i32_1 = arith.constant 0 : i32
    return %arg0, %c0_i32, %c0_i32_0 : i32, i32, i32
  }
}

</mosaic_0001>

<llo_original>
// kernel: tpu_custom_call.1
$region0: #{tpu_custom_call.1}
  #allocation0 [shape = 'u32[]', space=smem, size = 0x4, offset = 0x4, fixed_abs, tag = 'smem constant byte address 0x4 - core index']
  #allocation1 [shape = 'u32[144,128]{1,0:T(1,128)}', space=vmem, size = 0x12000, scoped, tag = 'internal scratch']
  %s0 = inlined_call_operand.vmem [shape: f32[2,8,384], index: 0, kind: input, shape index: {}]
  %s1 = inlined_call_operand.hbm [shape: f32[2,8,384], index: 1, kind: input, shape index: {}]
  %s2 = inlined_call_operand.hbm [shape: f32[2,8,384], index: 2, kind: input, shape index: {}]
  %s3 = inlined_call_operand.hbm [shape: f32[2,8,384], index: 3, kind: input, shape index: {}]
  %s4 = inlined_call_operand.vmem [shape: f32[1,384], index: 4, kind: input, shape index: {}]
  %s5 = inlined_call_operand.vmem [shape: f32[2,1,1], index: 5, kind: input, shape index: {}]
  %s6 = inlined_call_operand.vmem [shape: f32[2,1,1], index: 6, kind: input, shape index: {}]
  %s7 = inlined_call_operand.vmem [shape: f32[2,8,1], index: 7, kind: input, shape index: {}]
  %s8 = inlined_call_operand.vmem [shape: bf16[8,144], index: 8, kind: input, shape index: {}]
  %s9 = inlined_call_operand.vmem [shape: f32[8,1], index: 9, kind: input, shape index: {}]
  %s10 = inlined_call_operand.vmem [shape: bf16[8,72], index: 10, kind: input, shape index: {}]
  %s11 = inlined_call_operand.vmem [shape: f32[8,1], index: 11, kind: input, shape index: {}]
  %s12 = inlined_call_operand.vmem [shape: bf16[8,144], index: 12, kind: input, shape index: {}]
  %s13 = inlined_call_operand.vmem [shape: f32[8,1], index: 13, kind: input, shape index: {}]
  %s14 = inlined_call_operand.vmem [shape: bf16[8,72], index: 14, kind: input, shape index: {}]
  %s15 = inlined_call_operand.vmem [shape: f32[8,1], index: 15, kind: input, shape index: {}]
  %s16 = inlined_call_operand.vmem [shape: bf16[8,360], index: 16, kind: input, shape index: {}]
  %s17 = inlined_call_operand.vmem [shape: f32[8,1], index: 17, kind: input, shape index: {}]
  %s18 = inlined_call_operand.vmem [shape: bf16[8,72], index: 18, kind: input, shape index: {}]
  %s19 = inlined_call_operand.vmem [shape: f32[8,1], index: 19, kind: input, shape index: {}]
  %s20 = inlined_call_operand.hbm [shape: f32[2,8,384], index: 20, kind: output, shape index: {}]
  %s21 = sld [smem:[#allocation0]]
  $region125: #{tpu_custom_call.1} parent=0
    _
  %s23 = ssub.s32 1, %s21
  %s24 = scalar_select 0, %s23, %s21
  $region1: #{tpu_custom_call.1} parent=0
    #allocation2 [shape = 'u8[24576]{0}', space=vmem, size = 0x6000, scoped, tag = 'input window, operand 1']
    #allocation3 [shape = 's32[2]{0}', space=sflag, size = 0x8, scoped, tag = 'scoped memory for tpu_custom_call.1']
    #allocation4 [shape = 's32[2]{0}', space=sflag, size = 0x8, scoped, tag = 'scoped memory for tpu_custom_call.1']
    #allocation5 [shape = 'u8[24576]{0}', space=vmem, size = 0x6000, scoped, tag = 'input window, operand 2']
    #allocation6 [shape = 's32[2]{0}', space=sflag, size = 0x8, scoped, tag = 'scoped memory for tpu_custom_call.1']
    #allocation7 [shape = 'u8[24576]{0}', space=vmem, size = 0x6000, scoped, tag = 'input window, operand 3']
    #allocation8 [shape = 'u8[24576]{0}', space=vmem, size = 0x6000, scoped, tag = 'output window, operand 0']
    %25 = vsyncpa [#allocation3], 0
    %s26 = scalar_lea.sflag [#allocation3], 1
    %27 = vsyncpa %s26, 0
    %28 = vsyncpa [#allocation6], 0
    %s29 = scalar_lea.sflag [#allocation6], 1
    %30 = vsyncpa %s29, 0
    %31 = vsyncpa [#allocation4], 0
    %s32 = scalar_lea.sflag [#allocation4], 1
    %33 = vsyncpa %s32, 0
    loop: start=0, step=1, limit=4
    $region2: #{tpu_custom_call.1} parent=1 // loop_pre_header
      _
    $region3: #{tpu_custom_call.1} parent=1 // loop_header
      %s35 = sphi 0, %s39
      %p36 = scmp.ge.s32.totalorder %s35, 4
      %s45 = sphi 0, %s47
      %s48 = sphi 0, %s45
      %s49 = sphi 0, %s48
      %s65 = sphi 0, %s49
      %s71 = sphi 0, %s73
      %s74 = sphi 0, %s71
      %s75 = sphi 0, %s74
      %s91 = sphi 0, %s75
      %s97 = sphi 0, %s99
      %s100 = sphi 0, %s97
      %s101 = sphi 0, %s100
      %s117 = sphi 0, %s101
      %s123 = sphi 0, %s125
      %s126 = sphi 0, %s123
      %s127 = sphi 0, %s126
      %s143 = sphi 0, %s127
      %s147 = sphi 0, %s147
      %s149 = sphi 0, %s147
      %s150 = sphi 0, %s149
      %s164 = sphi 0, %s150
      %s170 = sphi 0, %s172
      %s173 = sphi 0, %s170
      %s174 = sphi 0, %s173
      %s190 = sphi 0, %s174
      %s196 = sphi 0, %s198
      %s199 = sphi 0, %s196
      %s200 = sphi 0, %s199
      %s216 = sphi 0, %s200
      %s222 = sphi 0, %s224
      %s225 = sphi 0, %s222
      %s226 = sphi 0, %s225
      %s242 = sphi 0, %s226
      %s246 = sphi 0, %s246
      %s248 = sphi 0, %s246
      %s249 = sphi 0, %s248
      %s263 = sphi 0, %s249
      %s267 = sphi 0, %s267
      %s269 = sphi 0, %s267
      %s270 = sphi 0, %s269
      %s284 = sphi 0, %s270
      %s288 = sphi 0, %s288
      %s290 = sphi 0, %s288
      %s291 = sphi 0, %s290
      %s305 = sphi 0, %s291
      %s309 = sphi 0, %s309
      %s311 = sphi 0, %s309
      %s312 = sphi 0, %s311
      %s326 = sphi 0, %s312
      %s330 = sphi 0, %s330
      %s332 = sphi 0, %s330
      %s333 = sphi 0, %s332
      %s347 = sphi 0, %s333
      %s351 = sphi 0, %s351
      %s353 = sphi 0, %s351
      %s354 = sphi 0, %s353
      %s368 = sphi 0, %s354
      %s372 = sphi 0, %s372
      %s374 = sphi 0, %s372
      %s375 = sphi 0, %s374
      %s389 = sphi 0, %s375
      %s393 = sphi 0, %s393
      %s395 = sphi 0, %s393
      %s396 = sphi 0, %s395
      %s410 = sphi 0, %s396
      %s414 = sphi 0, %s414
      %s416 = sphi 0, %s414
      %s417 = sphi 0, %s416
      %s431 = sphi 0, %s417
      %s435 = sphi 0, %s435
      %s437 = sphi 0, %s435
      %s438 = sphi 0, %s437
      %s452 = sphi 0, %s438
      %s456 = sphi 0, %s456
      %s458 = sphi 0, %s456
      %s459 = sphi 0, %s458
      %s473 = sphi 0, %s459
      %s477 = sphi 0, %s477
      %s479 = sphi 0, %s477
      %s480 = sphi 0, %s479
      %s494 = sphi 0, %s480
      %s500 = sphi 0, %s502
      %s503 = sphi 0, %s500
      %s504 = sphi 0, %s503
      %s520 = sphi 0, %s504
    $region4: #{tpu_custom_call.1} parent=1 // loop_header_branch
      %38 = sbr.rel (%p36) target = $region8
    $region5: #{tpu_custom_call.1} parent=1 // loop_body
      %s40 = ssub.s32 %s35, 1
      %s41 = ssub.s32 %s35, 2
      %s42 = sadd.s32 %s35, 1
      %s43 = ssub.s32 %s35, %s42
      %p44 = scmp.eq.s32.totalorder %s43, 0
      %s46 = sadd.s32 %s45, 1
      %s47 = scalar_select %p44, %s45, %s46
      %p50 = pneg %p44
      %p51 = scmp.eq.s32.totalorder %s35, 1
      %p52 = por %p50, %p51
      %p53 = scmp.ne.s32.totalorder %s45, %s48
      %p54 = scmp.eq.s32.totalorder %s35, 0
      %p55 = por %p53, %p54
      %p56 = scmp.ne.s32.totalorder %s45, %s48
      %p57 = scmp.eq.s32.totalorder %s40, 1
      %p58 = por %p56, %p57
      %p59 = scmp.ne.s32.totalorder %s48, %s49
      %p60 = scmp.eq.s32.totalorder %s40, 0
      %p61 = por %p59, %p60
      %p62 = scmp.ne.s32.totalorder %s48, %s49
      %p63 = scmp.eq.s32.totalorder %s41, 1
      %p64 = por %p62, %p63
      %p66 = scmp.ne.s32.totalorder %s49, %s65
      %p67 = scmp.eq.s32.totalorder %s41, 0
      %p68 = por %p66, %p67
      %s69 = ssub.s32 %s35, %s42
      %p70 = scmp.eq.s32.totalorder %s69, 0
      %s72 = sadd.s32 %s71, 1
      %s73 = scalar_select %p70, %s71, %s72
      %p76 = pneg %p70
      %p77 = scmp.eq.s32.totalorder %s35, 1
      %p78 = por %p76, %p77
      %p79 = scmp.ne.s32.totalorder %s71, %s74
      %p80 = scmp.eq.s32.totalorder %s35, 0
      %p81 = por %p79, %p80
      %p82 = scmp.ne.s32.totalorder %s71, %s74
      %p83 = scmp.eq.s32.totalorder %s40, 1
      %p84 = por %p82, %p83
      %p85 = scmp.ne.s32.totalorder %s74, %s75
      %p86 = scmp.eq.s32.totalorder %s40, 0
      %p87 = por %p85, %p86
      %p88 = scmp.ne.s32.totalorder %s74, %s75
      %p89 = scmp.eq.s32.totalorder %s41, 1
      %p90 = por %p88, %p89
      %p92 = scmp.ne.s32.totalorder %s75, %s91
      %p93 = scmp.eq.s32.totalorder %s41, 0
      %p94 = por %p92, %p93
      %s95 = ssub.s32 %s35, %s42
      %p96 = scmp.eq.s32.totalorder %s95, 0
      %s98 = sadd.s32 %s97, 1
      %s99 = scalar_select %p96, %s97, %s98
      %p102 = pneg %p96
      %p103 = scmp.eq.s32.totalorder %s35, 1
      %p104 = por %p102, %p103
      %p105 = scmp.ne.s32.totalorder %s97, %s100
      %p106 = scmp.eq.s32.totalorder %s35, 0
      %p107 = por %p105, %p106
      %p108 = scmp.ne.s32.totalorder %s97, %s100
      %p109 = scmp.eq.s32.totalorder %s40, 1
      %p110 = por %p108, %p109
      %p111 = scmp.ne.s32.totalorder %s100, %s101
      %p112 = scmp.eq.s32.totalorder %s40, 0
      %p113 = por %p111, %p112
      %p114 = scmp.ne.s32.totalorder %s100, %s101
      %p115 = scmp.eq.s32.totalorder %s41, 1
      %p116 = por %p114, %p115
      %p118 = scmp.ne.s32.totalorder %s101, %s117
      %p119 = scmp.eq.s32.totalorder %s41, 0
      %p120 = por %p118, %p119
      %s121 = ssub.s32 %s35, %s42
      %p122 = scmp.eq.s32.totalorder %s121, 0
      %s124 = sadd.s32 %s123, 1
      %s125 = scalar_select %p122, %s123, %s124
      %p128 = pneg %p122
      %p129 = scmp.eq.s32.totalorder %s35, 1
      %p130 = por %p128, %p129
      %p131 = scmp.ne.s32.totalorder %s123, %s126
      %p132 = scmp.eq.s32.totalorder %s35, 0
      %p133 = por %p131, %p132
      %p134 = scmp.ne.s32.totalorder %s123, %s126
      %p135 = scmp.eq.s32.totalorder %s40, 1
      %p136 = por %p134, %p135
      %p137 = scmp.ne.s32.totalorder %s126, %s127
      %p138 = scmp.eq.s32.totalorder %s40, 0
      %p139 = por %p137, %p138
      %p140 = scmp.ne.s32.totalorder %s126, %s127
      %p141 = scmp.eq.s32.totalorder %s41, 1
      %p142 = por %p140, %p141
      %p144 = scmp.ne.s32.totalorder %s127, %s143
      %p145 = scmp.eq.s32.totalorder %s41, 0
      %p146 = por %p144, %p145
      %s148 = sadd.s32 %s147, 1
      %p151 = scmp.eq.s32.totalorder %s35, 1
      %p152 = scmp.ne.s32.totalorder %s147, %s149
      %p153 = scmp.eq.s32.totalorder %s35, 0
      %p154 = por %p152, %p153
      %p155 = scmp.ne.s32.totalorder %s147, %s149
      %p156 = scmp.eq.s32.totalorder %s40, 1
      %p157 = por %p155, %p156
      %p158 = scmp.ne.s32.totalorder %s149, %s150
      %p159 = scmp.eq.s32.totalorder %s40, 0
      %p160 = por %p158, %p159
      %p161 = scmp.ne.s32.totalorder %s149, %s150
      %p162 = scmp.eq.s32.totalorder %s41, 1
      %p163 = por %p161, %p162
      %p165 = scmp.ne.s32.totalorder %s150, %s164
      %p166 = scmp.eq.s32.totalorder %s41, 0
      %p167 = por %p165, %p166
      %s168 = ssub.s32 %s35, %s42
      %p169 = scmp.eq.s32.totalorder %s168, 0
      %s171 = sadd.s32 %s170, 1
      %s172 = scalar_select %p169, %s170, %s171
      %p175 = pneg %p169
      %p176 = scmp.eq.s32.totalorder %s35, 1
      %p177 = por %p175, %p176
      %p178 = scmp.ne.s32.totalorder %s170, %s173
      %p179 = scmp.eq.s32.totalorder %s35, 0
      %p180 = por %p178, %p179
      %p181 = scmp.ne.s32.totalorder %s170, %s173
      %p182 = scmp.eq.s32.totalorder %s40, 1
      %p183 = por %p181, %p182
      %p184 = scmp.ne.s32.totalorder %s173, %s174
      %p185 = scmp.eq.s32.totalorder %s40, 0
      %p186 = por %p184, %p185
      %p187 = scmp.ne.s32.totalorder %s173, %s174
      %p188 = scmp.eq.s32.totalorder %s41, 1
      %p189 = por %p187, %p188
      %p191 = scmp.ne.s32.totalorder %s174, %s190
      %p192 = scmp.eq.s32.totalorder %s41, 0
      %p193 = por %p191, %p192
      %s194 = ssub.s32 %s35, %s42
      %p195 = scmp.eq.s32.totalorder %s194, 0
      %s197 = sadd.s32 %s196, 1
      %s198 = scalar_select %p195, %s196, %s197
      %p201 = pneg %p195
      %p202 = scmp.eq.s32.totalorder %s35, 1
      %p203 = por %p201, %p202
      %p204 = scmp.ne.s32.totalorder %s196, %s199
      %p205 = scmp.eq.s32.totalorder %s35, 0
      %p206 = por %p204, %p205
      %p207 = scmp.ne.s32.totalorder %s196, %s199
      %p208 = scmp.eq.s32.totalorder %s40, 1
      %p209 = por %p207, %p208
      %p210 = scmp.ne.s32.totalorder %s199, %s200
      %p211 = scmp.eq.s32.totalorder %s40, 0
      %p212 = por %p210, %p211
      %p213 = scmp.ne.s32.totalorder %s199, %s200
      %p214 = scmp.eq.s32.totalorder %s41, 1
      %p215 = por %p213, %p214
      %p217 = scmp.ne.s32.totalorder %s200, %s216
      %p218 = scmp.eq.s32.totalorder %s41, 0
      %p219 = por %p217, %p218
      %s220 = ssub.s32 %s35, %s42
      %p221 = scmp.eq.s32.totalorder %s220, 0
      %s223 = sadd.s32 %s222, 1
      %s224 = scalar_select %p221, %s222, %s223
      %p227 = pneg %p221
      %p228 = scmp.eq.s32.totalorder %s35, 1
      %p229 = por %p227, %p228
      %p230 = scmp.ne.s32.totalorder %s222, %s225
      %p231 = scmp.eq.s32.totalorder %s35, 0
      %p232 = por %p230, %p231
      %p233 = scmp.ne.s32.totalorder %s222, %s225
      %p234 = scmp.eq.s32.totalorder %s40, 1
      %p235 = por %p233, %p234
      %p236 = scmp.ne.s32.totalorder %s225, %s226
      %p237 = scmp.eq.s32.totalorder %s40, 0
      %p238 = por %p236, %p237
      %p239 = scmp.ne.s32.totalorder %s225, %s226
      %p240 = scmp.eq.s32.totalorder %s41, 1
      %p241 = por %p239, %p240
      %p243 = scmp.ne.s32.totalorder %s226, %s242
      %p244 = scmp.eq.s32.totalorder %s41, 0
      %p245 = por %p243, %p244
      %s247 = sadd.s32 %s246, 1
      %p250 = scmp.eq.s32.totalorder %s35, 1
      %p251 = scmp.ne.s32.totalorder %s246, %s248
      %p252 = scmp.eq.s32.totalorder %s35, 0
      %p253 = por %p251, %p252
      %p254 = scmp.ne.s32.totalorder %s246, %s248
      %p255 = scmp.eq.s32.totalorder %s40, 1
      %p256 = por %p254, %p255
      %p257 = scmp.ne.s32.totalorder %s248, %s249
      %p258 = scmp.eq.s32.totalorder %s40, 0
      %p259 = por %p257, %p258
      %p260 = scmp.ne.s32.totalorder %s248, %s249
      %p261 = scmp.eq.s32.totalorder %s41, 1
      %p262 = por %p260, %p261
      %p264 = scmp.ne.s32.totalorder %s249, %s263
      %p265 = scmp.eq.s32.totalorder %s41, 0
      %p266 = por %p264, %p265
      %s268 = sadd.s32 %s267, 1
      %p271 = scmp.eq.s32.totalorder %s35, 1
      %p272 = scmp.ne.s32.totalorder %s267, %s269
      %p273 = scmp.eq.s32.totalorder %s35, 0
      %p274 = por %p272, %p273
      %p275 = scmp.ne.s32.totalorder %s267, %s269
      %p276 = scmp.eq.s32.totalorder %s40, 1
      %p277 = por %p275, %p276
      %p278 = scmp.ne.s32.totalorder %s269, %s270
      %p279 = scmp.eq.s32.totalorder %s40, 0
      %p280 = por %p278, %p279
      %p281 = scmp.ne.s32.totalorder %s269, %s270
      %p282 = scmp.eq.s32.totalorder %s41, 1
      %p283 = por %p281, %p282
      %p285 = scmp.ne.s32.totalorder %s270, %s284
      %p286 = scmp.eq.s32.totalorder %s41, 0
      %p287 = por %p285, %p286
      %s289 = sadd.s32 %s288, 1
      %p292 = scmp.eq.s32.totalorder %s35, 1
      %p293 = scmp.ne.s32.totalorder %s288, %s290
      %p294 = scmp.eq.s32.totalorder %s35, 0
      %p295 = por %p293, %p294
      %p296 = scmp.ne.s32.totalorder %s288, %s290
      %p297 = scmp.eq.s32.totalorder %s40, 1
      %p298 = por %p296, %p297
      %p299 = scmp.ne.s32.totalorder %s290, %s291
      %p300 = scmp.eq.s32.totalorder %s40, 0
      %p301 = por %p299, %p300
      %p302 = scmp.ne.s32.totalorder %s290, %s291
      %p303 = scmp.eq.s32.totalorder %s41, 1
      %p304 = por %p302, %p303
      %p306 = scmp.ne.s32.totalorder %s291, %s305
      %p307 = scmp.eq.s32.totalorder %s41, 0
      %p308 = por %p306, %p307
      %s310 = sadd.s32 %s309, 1
      %p313 = scmp.eq.s32.totalorder %s35, 1
      %p314 = scmp.ne.s32.totalorder %s309, %s311
      %p315 = scmp.eq.s32.totalorder %s35, 0
      %p316 = por %p314, %p315
      %p317 = scmp.ne.s32.totalorder %s309, %s311
      %p318 = scmp.eq.s32.totalorder %s40, 1
      %p319 = por %p317, %p318
      %p320 = scmp.ne.s32.totalorder %s311, %s312
      %p321 = scmp.eq.s32.totalorder %s40, 0
      %p322 = por %p320, %p321
      %p323 = scmp.ne.s32.totalorder %s311, %s312
      %p324 = scmp.eq.s32.totalorder %s41, 1
      %p325 = por %p323, %p324
      %p327 = scmp.ne.s32.totalorder %s312, %s326
      %p328 = scmp.eq.s32.totalorder %s41, 0
      %p329 = por %p327, %p328
      %s331 = sadd.s32 %s330, 1
      %p334 = scmp.eq.s32.totalorder %s35, 1
      %p335 = scmp.ne.s32.totalorder %s330, %s332
      %p336 = scmp.eq.s32.totalorder %s35, 0
      %p337 = por %p335, %p336
      %p338 = scmp.ne.s32.totalorder %s330, %s332
      %p339 = scmp.eq.s32.totalorder %s40, 1
      %p340 = por %p338, %p339
      %p341 = scmp.ne.s32.totalorder %s332, %s333
      %p342 = scmp.eq.s32.totalorder %s40, 0
      %p343 = por %p341, %p342
      %p344 = scmp.ne.s32.totalorder %s332, %s333
      %p345 = scmp.eq.s32.totalorder %s41, 1
      %p346 = por %p344, %p345
      %p348 = scmp.ne.s32.totalorder %s333, %s347
      %p349 = scmp.eq.s32.totalorder %s41, 0
      %p350 = por %p348, %p349
      %s352 = sadd.s32 %s351, 1
      %p355 = scmp.eq.s32.totalorder %s35, 1
      %p356 = scmp.ne.s32.totalorder %s351, %s353
      %p357 = scmp.eq.s32.totalorder %s35, 0
      %p358 = por %p356, %p357
      %p359 = scmp.ne.s32.totalorder %s351, %s353
      %p360 = scmp.eq.s32.totalorder %s40, 1
      %p361 = por %p359, %p360
      %p362 = scmp.ne.s32.totalorder %s353, %s354
      %p363 = scmp.eq.s32.totalorder %s40, 0
      %p364 = por %p362, %p363
      %p365 = scmp.ne.s32.totalorder %s353, %s354
      %p366 = scmp.eq.s32.totalorder %s41, 1
      %p367 = por %p365, %p366
      %p369 = scmp.ne.s32.totalorder %s354, %s368
      %p370 = scmp.eq.s32.totalorder %s41, 0
      %p371 = por %p369, %p370
      %s373 = sadd.s32 %s372, 1
      %p376 = scmp.eq.s32.totalorder %s35, 1
      %p377 = scmp.ne.s32.totalorder %s372, %s374
      %p378 = scmp.eq.s32.totalorder %s35, 0
      %p379 = por %p377, %p378
      %p380 = scmp.ne.s32.totalorder %s372, %s374
      %p381 = scmp.eq.s32.totalorder %s40, 1
      %p382 = por %p380, %p381
      %p383 = scmp.ne.s32.totalorder %s374, %s375
      %p384 = scmp.eq.s32.totalorder %s40, 0
      %p385 = por %p383, %p384
      %p386 = scmp.ne.s32.totalorder %s374, %s375
      %p387 = scmp.eq.s32.totalorder %s41, 1
      %p388 = por %p386, %p387
      %p390 = scmp.ne.s32.totalorder %s375, %s389
      %p391 = scmp.eq.s32.totalorder %s41, 0
      %p392 = por %p390, %p391
      %s394 = sadd.s32 %s393, 1
      %p397 = scmp.eq.s32.totalorder %s35, 1
      %p398 = scmp.ne.s32.totalorder %s393, %s395
      %p399 = scmp.eq.s32.totalorder %s35, 0
      %p400 = por %p398, %p399
      %p401 = scmp.ne.s32.totalorder %s393, %s395
      %p402 = scmp.eq.s32.totalorder %s40, 1
      %p403 = por %p401, %p402
      %p404 = scmp.ne.s32.totalorder %s395, %s396
      %p405 = scmp.eq.s32.totalorder %s40, 0
      %p406 = por %p404, %p405
      %p407 = scmp.ne.s32.totalorder %s395, %s396
      %p408 = scmp.eq.s32.totalorder %s41, 1
      %p409 = por %p407, %p408
      %p411 = scmp.ne.s32.totalorder %s396, %s410
      %p412 = scmp.eq.s32.totalorder %s41, 0
      %p413 = por %p411, %p412
      %s415 = sadd.s32 %s414, 1
      %p418 = scmp.eq.s32.totalorder %s35, 1
      %p419 = scmp.ne.s32.totalorder %s414, %s416
      %p420 = scmp.eq.s32.totalorder %s35, 0
      %p421 = por %p419, %p420
      %p422 = scmp.ne.s32.totalorder %s414, %s416
      %p423 = scmp.eq.s32.totalorder %s40, 1
      %p424 = por %p422, %p423
      %p425 = scmp.ne.s32.totalorder %s416, %s417
      %p426 = scmp.eq.s32.totalorder %s40, 0
      %p427 = por %p425, %p426
      %p428 = scmp.ne.s32.totalorder %s416, %s417
      %p429 = scmp.eq.s32.totalorder %s41, 1
      %p430 = por %p428, %p429
      %p432 = scmp.ne.s32.totalorder %s417, %s431
      %p433 = scmp.eq.s32.totalorder %s41, 0
      %p434 = por %p432, %p433
      %s436 = sadd.s32 %s435, 1
      %p439 = scmp.eq.s32.totalorder %s35, 1
      %p440 = scmp.ne.s32.totalorder %s435, %s437
      %p441 = scmp.eq.s32.totalorder %s35, 0
      %p442 = por %p440, %p441
      %p443 = scmp.ne.s32.totalorder %s435, %s437
      %p444 = scmp.eq.s32.totalorder %s40, 1
      %p445 = por %p443, %p444
      %p446 = scmp.ne.s32.totalorder %s437, %s438
      %p447 = scmp.eq.s32.totalorder %s40, 0
      %p448 = por %p446, %p447
      %p449 = scmp.ne.s32.totalorder %s437, %s438
      %p450 = scmp.eq.s32.totalorder %s41, 1
      %p451 = por %p449, %p450
      %p453 = scmp.ne.s32.totalorder %s438, %s452
      %p454 = scmp.eq.s32.totalorder %s41, 0
      %p455 = por %p453, %p454
      %s457 = sadd.s32 %s456, 1
      %p460 = scmp.eq.s32.totalorder %s35, 1
      %p461 = scmp.ne.s32.totalorder %s456, %s458
      %p462 = scmp.eq.s32.totalorder %s35, 0
      %p463 = por %p461, %p462
      %p464 = scmp.ne.s32.totalorder %s456, %s458
      %p465 = scmp.eq.s32.totalorder %s40, 1
      %p466 = por %p464, %p465
      %p467 = scmp.ne.s32.totalorder %s458, %s459
      %p468 = scmp.eq.s32.totalorder %s40, 0
      %p469 = por %p467, %p468
      %p470 = scmp.ne.s32.totalorder %s458, %s459
      %p471 = scmp.eq.s32.totalorder %s41, 1
      %p472 = por %p470, %p471
      %p474 = scmp.ne.s32.totalorder %s459, %s473
      %p475 = scmp.eq.s32.totalorder %s41, 0
      %p476 = por %p474, %p475
      %s478 = sadd.s32 %s477, 1
      %p481 = scmp.eq.s32.totalorder %s35, 1
      %p482 = scmp.ne.s32.totalorder %s477, %s479
      %p483 = scmp.eq.s32.totalorder %s35, 0
      %p484 = por %p482, %p483
      %p485 = scmp.ne.s32.totalorder %s477, %s479
      %p486 = scmp.eq.s32.totalorder %s40, 1
      %p487 = por %p485, %p486
      %p488 = scmp.ne.s32.totalorder %s479, %s480
      %p489 = scmp.eq.s32.totalorder %s40, 0
      %p490 = por %p488, %p489
      %p491 = scmp.ne.s32.totalorder %s479, %s480
      %p492 = scmp.eq.s32.totalorder %s41, 1
      %p493 = por %p491, %p492
      %p495 = scmp.ne.s32.totalorder %s480, %s494
      %p496 = scmp.eq.s32.totalorder %s41, 0
      %p497 = por %p495, %p496
      %s498 = ssub.s32 %s35, %s42
      %p499 = scmp.eq.s32.totalorder %s498, 0
      %s501 = sadd.s32 %s500, 1
      %s502 = scalar_select %p499, %s500, %s501
      %p505 = pneg %p499
      %p506 = scmp.eq.s32.totalorder %s35, 1
      %p507 = por %p505, %p506
      %p508 = scmp.ne.s32.totalorder %s500, %s503
      %p509 = scmp.eq.s32.totalorder %s35, 0
      %p510 = por %p508, %p509
      %p511 = scmp.ne.s32.totalorder %s500, %s503
      %p512 = scmp.eq.s32.totalorder %s40, 1
      %p513 = por %p511, %p512
      %p514 = scmp.ne.s32.totalorder %s503, %s504
      %p515 = scmp.eq.s32.totalorder %s40, 0
      %p516 = por %p514, %p515
      %p517 = scmp.ne.s32.totalorder %s503, %s504
      %p518 = scmp.eq.s32.totalorder %s41, 1
      %p519 = por %p517, %p518
      %p521 = scmp.ne.s32.totalorder %s504, %s520
      %p522 = scmp.eq.s32.totalorder %s41, 0
      %p523 = por %p521, %p522
      %p524 = scmp.le.s32.totalorder 1, %s35
      %p525 = scmp.lt.s32.totalorder %s35, 3
      %p526 = pnand %p524, %p525
      %p527 = pneg %p526
      // Predicated region
      $region9: #{tpu_custom_call.1} parent=5 // pred_check
        _
      $region10: #{tpu_custom_call.1} parent=5 // pred_check_branch
        %529 = sbr.rel (%p526) target = $region12
      $region11: #{tpu_custom_call.1} parent=5 // pred_region
        %s530 = ssub.s32 %s35, 1
        // Predicated region
        $region13: #{tpu_custom_call.1} parent=11 // pred_check
          %p531 = pneg %p160
        $region14: #{tpu_custom_call.1} parent=11 // pred_check_branch
          %533 = sbr.rel (%p531) target = $region16
        $region15: #{tpu_custom_call.1} parent=11 // pred_region
          _
        $region16: #{tpu_custom_call.1} parent=11 // pred_fallthru
          _
        // Predicated region
        $region17: #{tpu_custom_call.1} parent=11 // pred_check
          %p534 = pneg %p259
        $region18: #{tpu_custom_call.1} parent=11 // pred_check_branch
          %536 = sbr.rel (%p534) target = $region20
        $region19: #{tpu_custom_call.1} parent=11 // pred_region
          _
        $region20: #{tpu_custom_call.1} parent=11 // pred_fallthru
          _
        // Predicated region
        $region21: #{tpu_custom_call.1} parent=11 // pred_check
          %p537 = pneg %p280
        $region22: #{tpu_custom_call.1} parent=11 // pred_check_branch
          %539 = sbr.rel (%p537) target = $region24
        $region23: #{tpu_custom_call.1} parent=11 // pred_region
          _
        $region24: #{tpu_custom_call.1} parent=11 // pred_fallthru
          _
        // Predicated region
        $region25: #{tpu_custom_call.1} parent=11 // pred_check
          %p540 = pneg %p301
        $region26: #{tpu_custom_call.1} parent=11 // pred_check_branch
          %542 = sbr.rel (%p540) target = $region28
        $region27: #{tpu_custom_call.1} parent=11 // pred_region
          _
        $region28: #{tpu_custom_call.1} parent=11 // pred_fallthru
          _
        // Predicated region
        $region29: #{tpu_custom_call.1} parent=11 // pred_check
          %p543 = pneg %p322
        $region30: #{tpu_custom_call.1} parent=11 // pred_check_branch
          %545 = sbr.rel (%p543) target = $region32
        $region31: #{tpu_custom_call.1} parent=11 // pred_region
          _
        $region32: #{tpu_custom_call.1} parent=11 // pred_fallthru
          _
        // Predicated region
        $region33: #{tpu_custom_call.1} parent=11 // pred_check
          %p546 = pneg %p343
        $region34: #{tpu_custom_call.1} parent=11 // pred_check_branch
          %548 = sbr.rel (%p546) target = $region36
        $region35: #{tpu_custom_call.1} parent=11 // pred_region
          _
        $region36: #{tpu_custom_call.1} parent=11 // pred_fallthru
          _
        // Predicated region
        $region37: #{tpu_custom_call.1} parent=11 // pred_check
          %p549 = pneg %p364
        $region38: #{tpu_custom_call.1} parent=11 // pred_check_branch
          %551 = sbr.rel (%p549) target = $region40
        $region39: #{tpu_custom_call.1} parent=11 // pred_region
          _
        $region40: #{tpu_custom_call.1} parent=11 // pred_fallthru
          _
        // Predicated region
        $region41: #{tpu_custom_call.1} parent=11 // pred_check
          %p552 = pneg %p385
        $region42: #{tpu_custom_call.1} parent=11 // pred_check_branch
          %554 = sbr.rel (%p552) target = $region44
        $region43: #{tpu_custom_call.1} parent=11 // pred_region
          _
        $region44: #{tpu_custom_call.1} parent=11 // pred_fallthru
          _
        // Predicated region
        $region45: #{tpu_custom_call.1} parent=11 // pred_check
          %p555 = pneg %p406
        $region46: #{tpu_custom_call.1} parent=11 // pred_check_branch
          %557 = sbr.rel (%p555) target = $region48
        $region47: #{tpu_custom_call.1} parent=11 // pred_region
          _
        $region48: #{tpu_custom_call.1} parent=11 // pred_fallthru
          _
        // Predicated region
        $region49: #{tpu_custom_call.1} parent=11 // pred_check
          %p558 = pneg %p427
        $region50: #{tpu_custom_call.1} parent=11 // pred_check_branch
          %560 = sbr.rel (%p558) target = $region52
        $region51: #{tpu_custom_call.1} parent=11 // pred_region
          _
        $region52: #{tpu_custom_call.1} parent=11 // pred_fallthru
          _
        // Predicated region
        $region53: #{tpu_custom_call.1} parent=11 // pred_check
          %p561 = pneg %p448
        $region54: #{tpu_custom_call.1} parent=11 // pred_check_branch
          %563 = sbr.rel (%p561) target = $region56
        $region55: #{tpu_custom_call.1} parent=11 // pred_region
          _
        $region56: #{tpu_custom_call.1} parent=11 // pred_fallthru
          _
        // Predicated region
        $region57: #{tpu_custom_call.1} parent=11 // pred_check
          %p564 = pneg %p469
        $region58: #{tpu_custom_call.1} parent=11 // pred_check_branch
          %566 = sbr.rel (%p564) target = $region60
        $region59: #{tpu_custom_call.1} parent=11 // pred_region
          _
        $region60: #{tpu_custom_call.1} parent=11 // pred_fallthru
          _
        // Predicated region
        $region61: #{tpu_custom_call.1} parent=11 // pred_check
          %p567 = pneg %p490
        $region62: #{tpu_custom_call.1} parent=11 // pred_check_branch
          %569 = sbr.rel (%p567) target = $region64
        $region63: #{tpu_custom_call.1} parent=11 // pred_region
          _
        $region64: #{tpu_custom_call.1} parent=11 // pred_fallthru
          _
      $region12: #{tpu_custom_call.1} parent=5 // pred_fallthru
        _
      %p570 = scmp.lt.s32.totalorder %s35, 2
      // Predicated region
      $region65: #{tpu_custom_call.1} parent=5 // pred_check
        %p571 = pneg %p570
      $region66: #{tpu_custom_call.1} parent=5 // pred_check_branch
        %573 = sbr.rel (%p571) target = $region68
      $region67: #{tpu_custom_call.1} parent=5 // pred_region
        // Predicated region
        $region69: #{tpu_custom_call.1} parent=67 // pred_check
          %p574 = pneg %p55
        $region70: #{tpu_custom_call.1} parent=67 // pred_check_branch
          %576 = sbr.rel (%p574) target = $region72
        $region71: #{tpu_custom_call.1} parent=67 // pred_region
          %p577 = scmp.lt.s32.totalorder %s35, 1
          %s578 = scalar_select %p577, %s35, 1
          %s579 = smul.addr %s578, 3
          %s580 = smul.addr %s579, 8
          %s581 = scalar_lea.vmem %s0, %s580
        $region72: #{tpu_custom_call.1} parent=67 // pred_fallthru
          _
        // Predicated region
        $region73: #{tpu_custom_call.1} parent=67 // pred_check
          %p582 = pneg %p81
        $region74: #{tpu_custom_call.1} parent=67 // pred_check_branch
          %584 = sbr.rel (%p582) target = $region76
        $region75: #{tpu_custom_call.1} parent=67 // pred_region
          %s585 = sand.u32 %s71, 1
          %s586 = scalar_lea.sflag [#allocation3], %s585
          %s587 = sand.u32 %s71, 1
          %s588 = smul.addr %s587, 24
          %s589 = scalar_lea.vmem [#allocation2], %s588
          %s591 = ssub.s32 384, 384
          %592 = vsyncadd %s586, %s591
          %s593 = smul.addr %s35, 3
          %s594 = smul.addr %s593, 128
          %s595 = scalar_lea.hbm %s1, %s594
          %s597 = sshll.u32 %s589, 4
          %s598 = int_to_ptr.vmem [resolvable:$true] %s597
          %600 = dma.hbm_to_vmem [thread:$0]  %s595, 384, %s598, %s586
        $region76: #{tpu_custom_call.1} parent=67 // pred_fallthru
          _
        // Predicated region
        $region77: #{tpu_custom_call.1} parent=67 // pred_check
          %p601 = pneg %p107
        $region78: #{tpu_custom_call.1} parent=67 // pred_check_branch
          %603 = sbr.rel (%p601) target = $region80
        $region79: #{tpu_custom_call.1} parent=67 // pred_region
          %s604 = sand.u32 %s35, 1
          %s605 = scalar_lea.sflag [#allocation6], %s604
          %s606 = sand.u32 %s97, 1
          %s607 = smul.addr %s606, 24
          %s608 = scalar_lea.vmem [#allocation5], %s607
          %s610 = ssub.s32 384, 384
          %611 = vsyncadd %s605, %s610
          %s612 = smul.addr %s35, 3
          %s613 = smul.addr %s612, 128
          %s614 = scalar_lea.hbm %s2, %s613
          %s616 = sshll.u32 %s608, 4
          %s617 = int_to_ptr.vmem [resolvable:$true] %s616
          %619 = dma.hbm_to_vmem [thread:$0]  %s614, 384, %s617, %s605
        $region80: #{tpu_custom_call.1} parent=67 // pred_fallthru
          _
        // Predicated region
        $region81: #{tpu_custom_call.1} parent=67 // pred_check
          %p620 = pneg %p133
        $region82: #{tpu_custom_call.1} parent=67 // pred_check_branch
          %622 = sbr.rel (%p620) target = $region84
        $region83: #{tpu_custom_call.1} parent=67 // pred_region
          %s623 = sand.u32 %s35, 1
          %s624 = scalar_lea.sflag [#allocation6], %s623
          %s625 = sand.u32 %s123, 1
          %s626 = smul.addr %s625, 24
          %s627 = scalar_lea.vmem [#allocation7], %s626
          %s629 = ssub.s32 384, 384
          %630 = vsyncadd %s624, %s629
          %s631 = smul.addr %s35, 3
          %s632 = smul.addr %s631, 128
          %s633 = scalar_lea.hbm %s3, %s632
          %s635 = sshll.u32 %s627, 4
          %s636 = int_to_ptr.vmem [resolvable:$true] %s635
          %638 = dma.hbm_to_vmem [thread:$0]  %s633, 384, %s636, %s624
        $region84: #{tpu_custom_call.1} parent=67 // pred_fallthru
          _
        // Predicated region
        $region85: #{tpu_custom_call.1} parent=67 // pred_check
          %p639 = pneg %p180
        $region86: #{tpu_custom_call.1} parent=67 // pred_check_branch
          %641 = sbr.rel (%p639) target = $region88
        $region87: #{tpu_custom_call.1} parent=67 // pred_region
          %p642 = scmp.lt.s32.totalorder %s35, 1
          %s643 = scalar_select %p642, %s35, 1
          %s644 = scalar_lea.vmem %s5, %s643
        $region88: #{tpu_custom_call.1} parent=67 // pred_fallthru
          _
        // Predicated region
        $region89: #{tpu_custom_call.1} parent=67 // pred_check
          %p645 = pneg %p206
        $region90: #{tpu_custom_call.1} parent=67 // pred_check_branch
          %647 = sbr.rel (%p645) target = $region92
        $region91: #{tpu_custom_call.1} parent=67 // pred_region
          %p648 = scmp.lt.s32.totalorder %s35, 1
          %s649 = scalar_select %p648, %s35, 1
          %s650 = scalar_lea.vmem %s6, %s649
        $region92: #{tpu_custom_call.1} parent=67 // pred_fallthru
          _
        // Predicated region
        $region93: #{tpu_custom_call.1} parent=67 // pred_check
          %p651 = pneg %p232
        $region94: #{tpu_custom_call.1} parent=67 // pred_check_branch
          %653 = sbr.rel (%p651) target = $region96
        $region95: #{tpu_custom_call.1} parent=67 // pred_region
          %p654 = scmp.lt.s32.totalorder %s35, 1
          %s655 = scalar_select %p654, %s35, 1
          %s656 = smul.addr %s655, 8
          %s657 = scalar_lea.vmem %s7, %s656
        $region96: #{tpu_custom_call.1} parent=67 // pred_fallthru
          _
      $region68: #{tpu_custom_call.1} parent=5 // pred_fallthru
        _
      %p658 = scmp.le.s32.totalorder 1, %s35
      %p659 = scmp.lt.s32.totalorder %s35, 3
      %p660 = pnand %p658, %p659
      %p661 = pneg %p660
      // Predicated region
      $region97: #{tpu_custom_call.1} parent=5 // pred_check
        _
      $region98: #{tpu_custom_call.1} parent=5 // pred_check_branch
        %663 = sbr.rel (%p660) target = $region100
      $region99: #{tpu_custom_call.1} parent=5 // pred_region
        %s664 = ssub.s32 %s35, 1
        %s665 = sand.u32 %s74, 1
        %s666 = scalar_lea.sflag [#allocation3], %s665
        %s667 = sand.u32 %s74, 1
        %s668 = smul.addr %s667, 24
        %s669 = scalar_lea.vmem [#allocation2], %s668
        // Predicated region
        $region101: #{tpu_custom_call.1} parent=99 // pred_check
          %p670 = pneg %p87
        $region102: #{tpu_custom_call.1} parent=99 // pred_check_branch
          %672 = sbr.rel (%p670) target = $region104
        $region103: #{tpu_custom_call.1} parent=99 // pred_region
          %673 = dma.done %s666, 384
        $region104: #{tpu_custom_call.1} parent=99 // pred_fallthru
          _
        %s674 = sand.u32 %s40, 1
        %s675 = scalar_lea.sflag [#allocation6], %s674
        %s676 = sand.u32 %s100, 1
        %s677 = smul.addr %s676, 24
        %s678 = scalar_lea.vmem [#allocation5], %s677
        // Predicated region
        $region105: #{tpu_custom_call.1} parent=99 // pred_check
          %p679 = pneg %p113
        $region106: #{tpu_custom_call.1} parent=99 // pred_check_branch
          %681 = sbr.rel (%p679) target = $region108
        $region107: #{tpu_custom_call.1} parent=99 // pred_region
          %682 = dma.done %s675, 384
        $region108: #{tpu_custom_call.1} parent=99 // pred_fallthru
          _
        %s683 = sand.u32 %s40, 1
        %s684 = scalar_lea.sflag [#allocation6], %s683
        %s685 = sand.u32 %s126, 1
        %s686 = smul.addr %s685, 24
        %s687 = scalar_lea.vmem [#allocation7], %s686
        // Predicated region
        $region109: #{tpu_custom_call.1} parent=99 // pred_check
          %p688 = pneg %p139
        $region110: #{tpu_custom_call.1} parent=99 // pred_check_branch
          %690 = sbr.rel (%p688) target = $region112
        $region111: #{tpu_custom_call.1} parent=99 // pred_region
          %691 = dma.done %s684, 384
        $region112: #{tpu_custom_call.1} parent=99 // pred_fallthru
          _
        %p692 = scmp.lt.s32.totalorder %s40, 1
        %s693 = scalar_select %p692, %s40, 1
        %s694 = smul.addr %s693, 3
        %s695 = smul.addr %s694, 8
        %s696 = scalar_lea.vmem %s0, %s695
        %p697 = pneg %p61
        %p698 = pneg %p58
        %s699 = sand.u32 %s74, 1
        %s700 = scalar_lea.sflag [#allocation3], %s699
        %s701 = sand.u32 %s74, 1
        %s702 = smul.addr %s701, 24
        %s703 = scalar_lea.vmem [#allocation2], %s702
        %p704 = pneg %p87
        %p705 = pneg %p84
        %s706 = sand.u32 %s40, 1
        %s707 = scalar_lea.sflag [#allocation6], %s706
        %s708 = sand.u32 %s100, 1
        %s709 = smul.addr %s708, 24
        %s710 = scalar_lea.vmem [#allocation5], %s709
        %p711 = pneg %p113
        %p712 = pneg %p110
        %s713 = sand.u32 %s40, 1
        %s714 = scalar_lea.sflag [#allocation6], %s713
        %s715 = sand.u32 %s126, 1
        %s716 = smul.addr %s715, 24
        %s717 = scalar_lea.vmem [#allocation7], %s716
        %p718 = pneg %p139
        %p719 = pneg %p136
        %p720 = pneg %p160
        %p721 = pneg %p157
        %p722 = scmp.lt.s32.totalorder %s40, 1
        %s723 = scalar_select %p722, %s40, 1
        %s724 = scalar_lea.vmem %s5, %s723
        %p725 = pneg %p186
        %p726 = pneg %p183
        %p727 = scmp.lt.s32.totalorder %s40, 1
        %s728 = scalar_select %p727, %s40, 1
        %s729 = scalar_lea.vmem %s6, %s728
        %p730 = pneg %p212
        %p731 = pneg %p209
        %p732 = scmp.lt.s32.totalorder %s40, 1
        %s733 = scalar_select %p732, %s40, 1
        %s734 = smul.addr %s733, 8
        %s735 = scalar_lea.vmem %s7, %s734
        %p736 = pneg %p238
        %p737 = pneg %p235
        %p738 = pneg %p259
        %p739 = pneg %p256
        %p740 = pneg %p280
        %p741 = pneg %p277
        %p742 = pneg %p301
        %p743 = pneg %p298
        %p744 = pneg %p322
        %p745 = pneg %p319
        %p746 = pneg %p343
        %p747 = pneg %p340
        %p748 = pneg %p364
        %p749 = pneg %p361
        %p750 = pneg %p385
        %p751 = pneg %p382
        %p752 = pneg %p406
        %p753 = pneg %p403
        %p754 = pneg %p427
        %p755 = pneg %p424
        %p756 = pneg %p448
        %p757 = pneg %p445
        %p758 = pneg %p469
        %p759 = pneg %p466
        %p760 = pneg %p490
        %p761 = pneg %p487
        %p762 = pneg %p516
        %p763 = pneg %p513
        %s764 = sand.u32 %s503, 1
        %s765 = scalar_lea.sflag [#allocation4], %s764
        %s766 = sand.u32 %s503, 1
        %s767 = smul.addr %s766, 24
        %s768 = scalar_lea.vmem [#allocation8], %s767
        %p769 = scmp.lt.s32.totalorder %s40, 1
        %s770 = scalar_select %p769, %s40, 1
        %s771 = smul.addr %s770, 3
        %s772 = smul.addr %s771, 8
        %s773 = scalar_lea.vmem %s0, %s772
        %p774 = scmp.lt.s32.totalorder %s40, 1
        %s775 = scalar_select %p774, %s40, 1
        %s776 = scalar_lea.vmem %s5, %s775
        %p777 = scmp.lt.s32.totalorder %s40, 1
        %s778 = scalar_select %p777, %s40, 1
        %s779 = scalar_lea.vmem %s6, %s778
        %p780 = scmp.lt.s32.totalorder %s40, 1
        %s781 = scalar_select %p780, %s40, 1
        %s782 = smul.addr %s781, 8
        %s783 = scalar_lea.vmem %s7, %s782
        %v785 = vld [vmem:[%s4] sm:$0x7]
        %v786 = vld [vmem:[%s776] sm:$0x1]
        %v787 = vld [vmem:[%s779] sm:$0x1]
        %v788 = vld [vmem:[%s773] sm:$0xff]
        %v789 = vld [vmem:[%s773 + $0x8] sm:$0xff]
        %v790 = vld [vmem:[%s773 + $0x10] sm:$0xff]
        %v791 = vld [vmem:[%s669] sm:$0xff]
        %v792 = vld [vmem:[%s669 + $0x8] sm:$0xff]
        %v793 = vld [vmem:[%s669 + $0x10] sm:$0xff]
        %v794 = vld [vmem:[%s678] sm:$0xff]
        %v795 = vld [vmem:[%s678 + $0x8] sm:$0xff]
        %v796 = vld [vmem:[%s678 + $0x10] sm:$0xff]
        %v797 = vld [vmem:[%s687] sm:$0xff]
        %v798 = vld [vmem:[%s687 + $0x8] sm:$0xff]
        %v799 = vld [vmem:[%s687 + $0x10] sm:$0xff]
        %v800 = vsub.f32 %v791, %v788
        %v801 = vsub.f32 %v792, %v789
        %v802 = vsub.f32 %v793, %v790
        %v804 = vlaneseq
        %v805 = vshrl.u32 %v804, 7
        %v806 = vsub.s32 0, %v805
        %v807 = vrot.slane %v786, %v806
        %808 = vset.pattern.permute.xlu0 0
        %809 = vperm.xlu0 %808, %v807
        %v810 = vpop.permute.xlu0 %809
        %v812 = vmul.f32 %v810, %v800
        %v813 = vmul.f32 %v810, %v801
        %v814 = vmul.f32 %v810, %v802
        %v816 = vlaneseq
        %v817 = vshrl.u32 %v816, 7
        %v818 = vsub.s32 0, %v817
        %v819 = vrot.slane %v787, %v818
        %820 = vset.pattern.permute.xlu0 0
        %821 = vperm.xlu0 %820, %v819
        %v822 = vpop.permute.xlu0 %821
        %v824 = vmul.f32 %v822, %v794
        %v825 = vmul.f32 %v822, %v795
        %v826 = vmul.f32 %v822, %v796
        %v827 = vadd.f32 %v812, %v824
        %v828 = vadd.f32 %v813, %v825
        %v829 = vadd.f32 %v814, %v826
        %v830 = vmul.f32 %v810, %v794
        %v831 = vmul.f32 %v810, %v795
        %v832 = vmul.f32 %v810, %v796
        %v833 = vmul.f32 %v822, %v800
        %v834 = vmul.f32 %v822, %v801
        %v835 = vmul.f32 %v822, %v802
        %v836 = vsub.f32 %v830, %v833
        %v837 = vsub.f32 %v831, %v834
        %v838 = vsub.f32 %v832, %v835
        %843 = vrot.lane.b32.xlu0 0.0, 127
        %v844 = vpop.permute.xlu0 %843
        %845 = vrot.lane.b32.xlu0 %v788, 127
        %v846 = vpop.permute.xlu0 %845
        %847 = vrot.lane.b32.xlu0 %v789, 127
        %v848 = vpop.permute.xlu0 %847
        %849 = vrot.lane.b32.xlu0 %v790, 127
        %v850 = vpop.permute.xlu0 %849
        %vm851 = vcmask 1039360
        %v852 = vsel %vm851, %v844, %v846
        %v853 = vsel %vm851, %v846, %v848
        %v854 = vsel %vm851, %v848, %v850
        %859 = vrot.lane.b32.xlu0 0.0, 126
        %v860 = vpop.permute.xlu0 %859
        %861 = vrot.lane.b32.xlu0 %v788, 126
        %v862 = vpop.permute.xlu0 %861
        %863 = vrot.lane.b32.xlu0 %v789, 126
        %v864 = vpop.permute.xlu0 %863
        %865 = vrot.lane.b32.xlu0 %v790, 126
        %v866 = vpop.permute.xlu0 %865
        %vm867 = vcmask 1031168
        %v868 = vsel %vm867, %v860, %v862
        %v869 = vsel %vm867, %v862, %v864
        %v870 = vsel %vm867, %v864, %v866
        %875 = vrot.lane.b32.xlu0 0.0, 104
        %v876 = vpop.permute.xlu0 %875
        %877 = vrot.lane.b32.xlu0 %v788, 104
        %v878 = vpop.permute.xlu0 %877
        %879 = vrot.lane.b32.xlu0 %v789, 104
        %v880 = vpop.permute.xlu0 %879
        %881 = vrot.lane.b32.xlu0 %v790, 104
        %v882 = vpop.permute.xlu0 %881
        %vm883 = vcmask 850944
        %v884 = vsel %vm883, %v876, %v878
        %v885 = vsel %vm883, %v878, %v880
        %v886 = vsel %vm883, %v880, %v882
        %891 = vrot.lane.b32.xlu0 %v788, 103
        %v892 = vpop.permute.xlu0 %891
        %893 = vrot.lane.b32.xlu0 %v789, 103
        %v894 = vpop.permute.xlu0 %893
        %895 = vrot.lane.b32.xlu0 %v790, 103
        %v896 = vpop.permute.xlu0 %895
        %vm897 = vcmask 842752
        %v898 = vsel %vm897, %v892, %v894
        %v899 = vsel %vm897, %v894, %v896
        %904 = vrot.lane.b32.xlu0 %v788, 102
        %v905 = vpop.permute.xlu0 %904
        %906 = vrot.lane.b32.xlu0 %v789, 102
        %v907 = vpop.permute.xlu0 %906
        %908 = vrot.lane.b32.xlu0 %v790, 102
        %v909 = vpop.permute.xlu0 %908
        %910 = vrot.lane.b32.xlu0 0.0, 102
        %v911 = vpop.permute.xlu0 %910
        %vm912 = vcmask 834560
        %v913 = vsel %vm912, %v905, %v907
        %v914 = vsel %vm912, %v907, %v909
        %v915 = vsel %vm912, %v909, %v911
        %920 = vrot.lane.b32.xlu0 %v788, 80
        %v921 = vpop.permute.xlu0 %920
        %922 = vrot.lane.b32.xlu0 %v789, 80
        %v923 = vpop.permute.xlu0 %922
        %924 = vrot.lane.b32.xlu0 %v790, 80
        %v925 = vpop.permute.xlu0 %924
        %926 = vrot.lane.b32.xlu0 0.0, 80
        %v927 = vpop.permute.xlu0 %926
        %vm928 = vcmask 654336
        %v929 = vsel %vm928, %v921, %v923
        %v930 = vsel %vm928, %v923, %v925
        %v931 = vsel %vm928, %v925, %v927
        %936 = vrot.lane.b32.xlu0 %v788, 79
        %v937 = vpop.permute.xlu0 %936
        %938 = vrot.lane.b32.xlu0 %v789, 79
        %v939 = vpop.permute.xlu0 %938
        %940 = vrot.lane.b32.xlu0 %v790, 79
        %v941 = vpop.permute.xlu0 %940
        %942 = vrot.lane.b32.xlu0 0.0, 79
        %v943 = vpop.permute.xlu0 %942
        %vm944 = vcmask 646144
        %v945 = vsel %vm944, %v937, %v939
        %v946 = vsel %vm944, %v939, %v941
        %v947 = vsel %vm944, %v941, %v943
        %952 = vrot.lane.b32.xlu0 %v788, 78
        %v953 = vpop.permute.xlu0 %952
        %954 = vrot.lane.b32.xlu0 %v789, 78
        %v955 = vpop.permute.xlu0 %954
        %956 = vrot.lane.b32.xlu0 %v790, 78
        %v957 = vpop.permute.xlu0 %956
        %958 = vrot.lane.b32.xlu0 0.0, 78
        %v959 = vpop.permute.xlu0 %958
        %vm960 = vcmask 637952
        %v961 = vsel %vm960, %v953, %v955
        %v962 = vsel %vm960, %v955, %v957
        %v963 = vsel %vm960, %v957, %v959
        %971 = vrot.lane.b32.xlu0 %v797, 127
        %v972 = vpop.permute.xlu0 %971
        %973 = vrot.lane.b32.xlu0 %v798, 127
        %v974 = vpop.permute.xlu0 %973
        %975 = vrot.lane.b32.xlu0 %v799, 127
        %v976 = vpop.permute.xlu0 %975
        %v977 = vsel %vm851, %v844, %v972
        %v978 = vsel %vm851, %v972, %v974
        %v979 = vsel %vm851, %v974, %v976
        %984 = vrot.lane.b32.xlu0 %v797, 126
        %v985 = vpop.permute.xlu0 %984
        %986 = vrot.lane.b32.xlu0 %v798, 126
        %v987 = vpop.permute.xlu0 %986
        %988 = vrot.lane.b32.xlu0 %v799, 126
        %v989 = vpop.permute.xlu0 %988
        %v990 = vsel %vm867, %v860, %v985
        %v991 = vsel %vm867, %v985, %v987
        %v992 = vsel %vm867, %v987, %v989
        %997 = vrot.lane.b32.xlu0 %v797, 104
        %v998 = vpop.permute.xlu0 %997
        %999 = vrot.lane.b32.xlu0 %v798, 104
        %v1000 = vpop.permute.xlu0 %999
        %1001 = vrot.lane.b32.xlu0 %v799, 104
        %v1002 = vpop.permute.xlu0 %1001
        %v1003 = vsel %vm883, %v876, %v998
        %v1004 = vsel %vm883, %v998, %v1000
        %v1005 = vsel %vm883, %v1000, %v1002
        %1010 = vrot.lane.b32.xlu0 %v797, 103
        %v1011 = vpop.permute.xlu0 %1010
        %1012 = vrot.lane.b32.xlu0 %v798, 103
        %v1013 = vpop.permute.xlu0 %1012
        %1014 = vrot.lane.b32.xlu0 %v799, 103
        %v1015 = vpop.permute.xlu0 %1014
        %v1016 = vsel %vm897, %v1011, %v1013
        %v1017 = vsel %vm897, %v1013, %v1015
        %1022 = vrot.lane.b32.xlu0 %v797, 102
        %v1023 = vpop.permute.xlu0 %1022
        %1024 = vrot.lane.b32.xlu0 %v798, 102
        %v1025 = vpop.permute.xlu0 %1024
        %1026 = vrot.lane.b32.xlu0 %v799, 102
        %v1027 = vpop.permute.xlu0 %1026
        %v1028 = vsel %vm912, %v1023, %v1025
        %v1029 = vsel %vm912, %v1025, %v1027
        %v1030 = vsel %vm912, %v1027, %v911
        %1035 = vrot.lane.b32.xlu0 %v797, 80
        %v1036 = vpop.permute.xlu0 %1035
        %1037 = vrot.lane.b32.xlu0 %v798, 80
        %v1038 = vpop.permute.xlu0 %1037
        %1039 = vrot.lane.b32.xlu0 %v799, 80
        %v1040 = vpop.permute.xlu0 %1039
        %v1041 = vsel %vm928, %v1036, %v1038
        %v1042 = vsel %vm928, %v1038, %v1040
        %v1043 = vsel %vm928, %v1040, %v927
        %v1048 = vsel %vm851, %v976, %v844
        %1049 = vrot.lane.b32.xlu0 %v797, 79
        %v1050 = vpop.permute.xlu0 %1049
        %1051 = vrot.lane.b32.xlu0 %v798, 79
        %v1052 = vpop.permute.xlu0 %1051
        %1053 = vrot.lane.b32.xlu0 %v799, 79
        %v1054 = vpop.permute.xlu0 %1053
        %1055 = vrot.lane.b32.xlu0 %v978, 79
        %v1056 = vpop.permute.xlu0 %1055
        %1057 = vrot.lane.b32.xlu0 %v979, 79
        %v1058 = vpop.permute.xlu0 %1057
        %1059 = vrot.lane.b32.xlu0 %v1048, 79
        %v1060 = vpop.permute.xlu0 %1059
        %1061 = vrot.lane.b32.xlu0 %v844, 79
        %v1062 = vpop.permute.xlu0 %1061
        %v1063 = vsel %vm944, %v1050, %v1052
        %v1064 = vsel %vm944, %v1052, %v1054
        %v1065 = vsel %vm944, %v1054, %v943
        %v1066 = vsel %vm944, %v1056, %v1058
        %v1067 = vsel %vm944, %v1058, %v1060
        %v1068 = vsel %vm944, %v1060, %v1062
        %v1077 = vpack.c.bf16 %v852, 0.0
        %v1078 = vpack.c.bf16 %v853, %v788
        %v1079 = vpack.c.bf16 %v854, %v789
        %v1080 = vpack.c.bf16 %v850, %v790
        %v1081 = vpack.c.bf16 %v884, %v868
        %v1082 = vpack.c.bf16 %v885, %v869
        %v1083 = vpack.c.bf16 %v886, %v870
        %v1084 = vpack.c.bf16 %v882, %v866
        %v1085 = vpack.c.bf16 %v905, %v892
        %v1086 = vpack.c.bf16 %v913, %v898
        %v1087 = vpack.c.bf16 %v914, %v899
        %v1088 = vpack.c.bf16 %v915, %v896
        %v1089 = vpack.c.bf16 %v937, %v921
        %v1090 = vpack.c.bf16 %v945, %v929
        %v1091 = vpack.c.bf16 %v946, %v930
        %v1092 = vpack.c.bf16 %v947, %v931
        %v1093 = vpack.c.bf16 0.0, %v953
        %v1094 = vpack.c.bf16 %v797, %v961
        %v1095 = vpack.c.bf16 %v798, %v962
        %v1096 = vpack.c.bf16 %v799, %v963
        %v1097 = vpack.c.bf16 %v990, %v977
        %v1098 = vpack.c.bf16 %v991, %v978
        %v1099 = vpack.c.bf16 %v992, %v979
        %v1100 = vpack.c.bf16 %v989, %v976
        %v1101 = vpack.c.bf16 %v1011, %v1003
        %v1102 = vpack.c.bf16 %v1016, %v1004
        %v1103 = vpack.c.bf16 %v1017, %v1005
        %v1104 = vpack.c.bf16 %v1015, %v1002
        %v1105 = vpack.c.bf16 %v1036, %v1023
        %v1106 = vpack.c.bf16 %v1041, %v1028
        %v1107 = vpack.c.bf16 %v1042, %v1029
        %v1108 = vpack.c.bf16 %v1043, %v1030
        %v1109 = vpack.c.bf16 %v1056, %v1050
        %v1110 = vpack.c.bf16 %v1066, %v1063
        %v1111 = vpack.c.bf16 %v1067, %v1064
        %v1112 = vpack.c.bf16 %v1068, %v1065
        %v1113 = vld [vmem:[%s8] sm:$0xff]
        %v1114 = vld [vmem:[%s9] sm:$0xff]
        %1116 = vset.pattern.permute.xlu0 0
        %1117 = vperm.xlu0 %1116, %v1114
        %v1118 = vpop.permute.xlu0 %1117
        %v1121 = vunpack.c.l.b16 %v1113
        %v1122 = vunpack.c.h.b16 %v1113
        %v1123 = vpack.c.b16 %v1121, %v1121
        %v1124 = vpack.c.b16 %v1122, %v1122
        %1162 = vrot.lane.b32.xlu0 %v1077, 25
        %v1163 = vpop.permute.xlu0 %1162
        %1164 = vrot.lane.b32.xlu0 %v1078, 25
        %v1165 = vpop.permute.xlu0 %1164
        %1166 = vrot.lane.b32.xlu0 %v1079, 25
        %v1167 = vpop.permute.xlu0 %1166
        %1168 = vrot.lane.b32.xlu0 %v1080, 25
        %v1169 = vpop.permute.xlu0 %1168
        %1170 = vrot.lane.b32.xlu0 %v1081, 25
        %v1171 = vpop.permute.xlu0 %1170
        %1172 = vrot.lane.b32.xlu0 %v1082, 25
        %v1173 = vpop.permute.xlu0 %1172
        %1174 = vrot.lane.b32.xlu0 %v1083, 25
        %v1175 = vpop.permute.xlu0 %1174
        %1176 = vrot.lane.b32.xlu0 %v1084, 25
        %v1177 = vpop.permute.xlu0 %1176
        %1178 = vrot.lane.b32.xlu0 %v1085, 25
        %v1179 = vpop.permute.xlu0 %1178
        %1180 = vrot.lane.b32.xlu0 %v1086, 25
        %v1181 = vpop.permute.xlu0 %1180
        %1182 = vrot.lane.b32.xlu0 %v1087, 25
        %v1183 = vpop.permute.xlu0 %1182
        %1184 = vrot.lane.b32.xlu0 %v1088, 25
        %v1185 = vpop.permute.xlu0 %1184
        %1186 = vrot.lane.b32.xlu0 %v1089, 25
        %v1187 = vpop.permute.xlu0 %1186
        %1188 = vrot.lane.b32.xlu0 %v1090, 25
        %v1189 = vpop.permute.xlu0 %1188
        %1190 = vrot.lane.b32.xlu0 %v1091, 25
        %v1191 = vpop.permute.xlu0 %1190
        %1192 = vrot.lane.b32.xlu0 %v1092, 25
        %v1193 = vpop.permute.xlu0 %1192
        %1194 = vrot.lane.b32.xlu0 %v1093, 25
        %v1195 = vpop.permute.xlu0 %1194
        %1196 = vrot.lane.b32.xlu0 %v1094, 25
        %v1197 = vpop.permute.xlu0 %1196
        %1198 = vrot.lane.b32.xlu0 %v1095, 25
        %v1199 = vpop.permute.xlu0 %1198
        %1200 = vrot.lane.b32.xlu0 %v1096, 25
        %v1201 = vpop.permute.xlu0 %1200
        %1202 = vrot.lane.b32.xlu0 %v1097, 25
        %v1203 = vpop.permute.xlu0 %1202
        %1204 = vrot.lane.b32.xlu0 %v1098, 25
        %v1205 = vpop.permute.xlu0 %1204
        %1206 = vrot.lane.b32.xlu0 %v1099, 25
        %v1207 = vpop.permute.xlu0 %1206
        %1208 = vrot.lane.b32.xlu0 %v1100, 25
        %v1209 = vpop.permute.xlu0 %1208
        %1210 = vrot.lane.b32.xlu0 %v1101, 25
        %v1211 = vpop.permute.xlu0 %1210
        %1212 = vrot.lane.b32.xlu0 %v1102, 25
        %v1213 = vpop.permute.xlu0 %1212
        %1214 = vrot.lane.b32.xlu0 %v1103, 25
        %v1215 = vpop.permute.xlu0 %1214
        %1216 = vrot.lane.b32.xlu0 %v1104, 25
        %v1217 = vpop.permute.xlu0 %1216
        %1218 = vrot.lane.b32.xlu0 %v1105, 25
        %v1219 = vpop.permute.xlu0 %1218
        %1220 = vrot.lane.b32.xlu0 %v1106, 25
        %v1221 = vpop.permute.xlu0 %1220
        %1222 = vrot.lane.b32.xlu0 %v1107, 25
        %v1223 = vpop.permute.xlu0 %1222
        %1224 = vrot.lane.b32.xlu0 %v1108, 25
        %v1225 = vpop.permute.xlu0 %1224
        %1226 = vrot.lane.b32.xlu0 %v1109, 25
        %v1227 = vpop.permute.xlu0 %1226
        %1228 = vrot.lane.b32.xlu0 %v1110, 25
        %v1229 = vpop.permute.xlu0 %1228
        %1230 = vrot.lane.b32.xlu0 %v1111, 25
        %v1231 = vpop.permute.xlu0 %1230
        %1232 = vrot.lane.b32.xlu0 %v1112, 25
        %v1233 = vpop.permute.xlu0 %1232
        %vm1234 = vcmask 203776
        %v1235 = vsel %vm1234, %v1163, %v1165
        %v1236 = vsel %vm1234, %v1165, %v1167
        %v1237 = vsel %vm1234, %v1167, %v1169
        %v1238 = vsel %vm1234, %v1171, %v1173
        %v1239 = vsel %vm1234, %v1173, %v1175
        %v1240 = vsel %vm1234, %v1175, %v1177
        %v1241 = vsel %vm1234, %v1179, %v1181
        %v1242 = vsel %vm1234, %v1181, %v1183
        %v1243 = vsel %vm1234, %v1183, %v1185
        %v1244 = vsel %vm1234, %v1187, %v1189
        %v1245 = vsel %vm1234, %v1189, %v1191
        %v1246 = vsel %vm1234, %v1191, %v1193
        %v1247 = vsel %vm1234, %v1195, %v1197
        %v1248 = vsel %vm1234, %v1197, %v1199
        %v1249 = vsel %vm1234, %v1199, %v1201
        %v1250 = vsel %vm1234, %v1203, %v1205
        %v1251 = vsel %vm1234, %v1205, %v1207
        %v1252 = vsel %vm1234, %v1207, %v1209
        %v1253 = vsel %vm1234, %v1211, %v1213
        %v1254 = vsel %vm1234, %v1213, %v1215
        %v1255 = vsel %vm1234, %v1215, %v1217
        %v1256 = vsel %vm1234, %v1219, %v1221
        %v1257 = vsel %vm1234, %v1221, %v1223
        %v1258 = vsel %vm1234, %v1223, %v1225
        %v1259 = vsel %vm1234, %v1227, %v1229
        %v1260 = vsel %vm1234, %v1229, %v1231
        %v1261 = vsel %vm1234, %v1231, %v1233
        %vm1289 = vcmask 130048
        %v1291 = vsel %vm1289, %v1124, 0
        %1293 = vmatprep.subr.bf16.mxu0 %v1236
        %1294 = vmatpush1.bf16.msra.mxu0 %v1235
        %1295 = vmatprep.subr.bf16.mxu0 %v1239
        %1296 = vmatpush1.bf16.msra.mxu0 %v1238
        %1297 = vmatprep.subr.bf16.mxu0 %v1242
        %1298 = vmatpush1.bf16.msra.mxu0 %v1241
        %1299 = vmatprep.subr.bf16.mxu0 %v1245
        %1300 = vmatpush1.bf16.msra.mxu0 %v1244
        %1301 = vmatprep.subr.bf16.mxu0 %v1248
        %1302 = vmatpush1.bf16.msra.mxu0 %v1247
        %1303 = vmatprep.subr.bf16.mxu0 %v1251
        %1304 = vmatpush1.bf16.msra.mxu0 %v1250
        %1305 = vmatprep.subr.bf16.mxu0 %v1254
        %1306 = vmatpush1.bf16.msra.mxu0 %v1253
        %1307 = vmatprep.subr.bf16.mxu0 %v1257
        %1308 = vmatpush1.bf16.msra.mxu0 %v1256
        %1309 = vmatprep.subr.bf16.mxu0 %v1260
        %1310 = vmatpush1.bf16.msra.mxu0 %v1259
        %1311 = vmatprep.subr.bf16.mxu0 0
        %1312 = vmatpush1.bf16.msra.mxu0 0
        %1313 = vmatprep.subr.bf16.mxu0 0
        %1314 = vmatpush1.bf16.msra.mxu0 0
        %1315 = vmatprep.subr.bf16.mxu0 0
        %1316 = vmatpush1.bf16.msra.mxu0 0
        %1317 = vmatprep.subr.bf16.mxu0 0
        %1318 = vmatpush1.bf16.msra.mxu0 0
        %1319 = vmatprep.subr.bf16.mxu0 0
        %1320 = vmatpush1.bf16.msra.mxu0 0
        %1321 = vmatprep.subr.bf16.mxu0 0
        %1322 = vmatpush1.bf16.msra.mxu0 0
        %1323 = vmatprep.subr.bf16.mxu0 0
        %1324 = vmatpush1.bf16.msra.mxu0 0
        %1325 = vmatprep.mubr.bf16.mxu0 %v1291
        %1326 = vmatmul.mubr.bf16.gmra.mrb[0].mxu0 %v1123
        %v1327 = vpop.f32.mrb[0].mxu0
        %v1328 = vadd.f32 %v1118, %v1327
        %v1329 = vpop.f32.mrb[0].mxu0
        %v1330 = vadd.f32 %v1118, %v1329
        %v1331 = vpop.f32.mrb[0].mxu0
        %v1332 = vpop.f32.mrb[0].mxu0
        %1333 = vdwg.mxu0
        %1334 = vmatprep.subr.bf16.mxu0 0
        %1335 = vmatpush1.bf16.msra.mxu0 %v1237
        %1336 = vmatprep.subr.bf16.mxu0 0
        %1337 = vmatpush1.bf16.msra.mxu0 %v1240
        %1338 = vmatprep.subr.bf16.mxu0 0
        %1339 = vmatpush1.bf16.msra.mxu0 %v1243
        %1340 = vmatprep.subr.bf16.mxu0 0
        %1341 = vmatpush1.bf16.msra.mxu0 %v1246
        %1342 = vmatprep.subr.bf16.mxu0 0
        %1343 = vmatpush1.bf16.msra.mxu0 %v1249
        %1344 = vmatprep.subr.bf16.mxu0 0
        %1345 = vmatpush1.bf16.msra.mxu0 %v1252
        %1346 = vmatprep.subr.bf16.mxu0 0
        %1347 = vmatpush1.bf16.msra.mxu0 %v1255
        %1348 = vmatprep.subr.bf16.mxu0 0
        %1349 = vmatpush1.bf16.msra.mxu0 %v1258
        %1350 = vmatprep.subr.bf16.mxu0 0
        %1351 = vmatpush1.bf16.msra.mxu0 %v1261
        %1352 = vmatprep.subr.bf16.mxu0 0
        %1353 = vmatpush1.bf16.msra.mxu0 0
        %1354 = vmatprep.subr.bf16.mxu0 0
        %1355 = vmatpush1.bf16.msra.mxu0 0
        %1356 = vmatprep.subr.bf16.mxu0 0
        %1357 = vmatpush1.bf16.msra.mxu0 0
        %1358 = vmatprep.subr.bf16.mxu0 0
        %1359 = vmatpush1.bf16.msra.mxu0 0
        %1360 = vmatprep.subr.bf16.mxu0 0
        %1361 = vmatpush1.bf16.msra.mxu0 0
        %1362 = vmatprep.subr.bf16.mxu0 0
        %1363 = vmatpush1.bf16.msra.mxu0 0
        %1364 = vmatprep.subr.bf16.mxu0 0
        %1365 = vmatpush1.bf16.msra.mxu0 0
        %1366 = vmatprep.mubr.bf16.mxu0 %v1291
        %1367 = vmatmul.mubr.bf16.gmra.mrb[0].mxu0 %v1123
        %v1368 = vpop.f32.mrb[0].mxu0
        %v1369 = vadd.f32 %v1118, %v1368
        %v1370 = vpop.f32.mrb[0].mxu0
        %v1371 = vpop.f32.mrb[0].mxu0
        %v1372 = vpop.f32.mrb[0].mxu0
        %1373 = vdwg.mxu0
        %v1374 = vmax.f32 %v1328, 0.0
        %v1375 = vmax.f32 %v1330, 0.0
        %v1376 = vmax.f32 %v1369, 0.0
        %v1378 = vlaneseq
        %v1379 = vshrl.u32 %v1378, 7
        %v1380 = vsub.s32 0, %v1379
        %v1381 = vrot.slane %v785, %v1380
        %v1382 = vlaneseq
        %v1383 = vshrl.u32 %v1382, 7
        %v1384 = vsub.s32 1, %v1383
        %v1385 = vrot.slane %v785, %v1384
        %v1386 = vlaneseq
        %v1387 = vshrl.u32 %v1386, 7
        %v1388 = vsub.s32 2, %v1387
        %v1389 = vrot.slane %v785, %v1388
        %v1393 = vmul.f32 %v1374, %v1381
        %v1394 = vmul.f32 %v1375, %v1385
        %v1395 = vmul.f32 %v1376, %v1389
        %1399 = vrot.lane.b32.xlu0 %v1393, 127
        %v1400 = vpop.permute.xlu0 %1399
        %1401 = vrot.lane.b32.xlu0 %v1394, 127
        %v1402 = vpop.permute.xlu0 %1401
        %1403 = vrot.lane.b32.xlu0 %v1395, 127
        %v1404 = vpop.permute.xlu0 %1403
        %v1405 = vsel %vm851, %v844, %v1400
        %v1406 = vsel %vm851, %v1400, %v1402
        %v1407 = vsel %vm851, %v1402, %v1404
        %1412 = vrot.lane.b32.xlu0 %v1393, 126
        %v1413 = vpop.permute.xlu0 %1412
        %1414 = vrot.lane.b32.xlu0 %v1394, 126
        %v1415 = vpop.permute.xlu0 %1414
        %1416 = vrot.lane.b32.xlu0 %v1395, 126
        %v1417 = vpop.permute.xlu0 %1416
        %v1418 = vsel %vm867, %v860, %v1413
        %v1419 = vsel %vm867, %v1413, %v1415
        %v1420 = vsel %vm867, %v1415, %v1417
        %1425 = vrot.lane.b32.xlu0 %v1393, 104
        %v1426 = vpop.permute.xlu0 %1425
        %1427 = vrot.lane.b32.xlu0 %v1394, 104
        %v1428 = vpop.permute.xlu0 %1427
        %1429 = vrot.lane.b32.xlu0 %v1395, 104
        %v1430 = vpop.permute.xlu0 %1429
        %v1431 = vsel %vm883, %v876, %v1426
        %v1432 = vsel %vm883, %v1426, %v1428
        %v1433 = vsel %vm883, %v1428, %v1430
        %1438 = vrot.lane.b32.xlu0 %v1393, 103
        %v1439 = vpop.permute.xlu0 %1438
        %1440 = vrot.lane.b32.xlu0 %v1394, 103
        %v1441 = vpop.permute.xlu0 %1440
        %1442 = vrot.lane.b32.xlu0 %v1395, 103
        %v1443 = vpop.permute.xlu0 %1442
        %v1444 = vsel %vm897, %v1439, %v1441
        %v1445 = vsel %vm897, %v1441, %v1443
        %1450 = vrot.lane.b32.xlu0 %v1393, 102
        %v1451 = vpop.permute.xlu0 %1450
        %1452 = vrot.lane.b32.xlu0 %v1394, 102
        %v1453 = vpop.permute.xlu0 %1452
        %1454 = vrot.lane.b32.xlu0 %v1395, 102
        %v1455 = vpop.permute.xlu0 %1454
        %v1456 = vsel %vm912, %v1451, %v1453
        %v1457 = vsel %vm912, %v1453, %v1455
        %v1458 = vsel %vm912, %v1455, %v911
        %1463 = vrot.lane.b32.xlu0 %v1393, 80
        %v1464 = vpop.permute.xlu0 %1463
        %1465 = vrot.lane.b32.xlu0 %v1394, 80
        %v1466 = vpop.permute.xlu0 %1465
        %1467 = vrot.lane.b32.xlu0 %v1395, 80
        %v1468 = vpop.permute.xlu0 %1467
        %v1469 = vsel %vm928, %v1464, %v1466
        %v1470 = vsel %vm928, %v1466, %v1468
        %v1471 = vsel %vm928, %v1468, %v927
        %1476 = vrot.lane.b32.xlu0 %v1393, 79
        %v1477 = vpop.permute.xlu0 %1476
        %1478 = vrot.lane.b32.xlu0 %v1394, 79
        %v1479 = vpop.permute.xlu0 %1478
        %1480 = vrot.lane.b32.xlu0 %v1395, 79
        %v1481 = vpop.permute.xlu0 %1480
        %v1482 = vsel %vm944, %v1477, %v1479
        %v1483 = vsel %vm944, %v1479, %v1481
        %v1484 = vsel %vm944, %v1481, %v943
        %1489 = vrot.lane.b32.xlu0 %v1393, 78
        %v1490 = vpop.permute.xlu0 %1489
        %1491 = vrot.lane.b32.xlu0 %v1394, 78
        %v1492 = vpop.permute.xlu0 %1491
        %1493 = vrot.lane.b32.xlu0 %v1395, 78
        %v1494 = vpop.permute.xlu0 %1493
        %v1495 = vsel %vm960, %v1490, %v1492
        %v1496 = vsel %vm960, %v1492, %v1494
        %v1497 = vsel %vm960, %v1494, %v959
        %v1502 = vpack.c.bf16 %v1405, 0.0
        %v1503 = vpack.c.bf16 %v1406, %v1393
        %v1504 = vpack.c.bf16 %v1407, %v1394
        %v1505 = vpack.c.bf16 %v1404, %v1395
        %v1506 = vpack.c.bf16 %v1431, %v1418
        %v1507 = vpack.c.bf16 %v1432, %v1419
        %v1508 = vpack.c.bf16 %v1433, %v1420
        %v1509 = vpack.c.bf16 %v1430, %v1417
        %v1510 = vpack.c.bf16 %v1451, %v1439
        %v1511 = vpack.c.bf16 %v1456, %v1444
        %v1512 = vpack.c.bf16 %v1457, %v1445
        %v1513 = vpack.c.bf16 %v1458, %v1443
        %v1514 = vpack.c.bf16 %v1477, %v1464
        %v1515 = vpack.c.bf16 %v1482, %v1469
        %v1516 = vpack.c.bf16 %v1483, %v1470
        %v1517 = vpack.c.bf16 %v1484, %v1471
        %v1518 = vpack.c.bf16 %v1490, %v1490
        %v1519 = vpack.c.bf16 %v1495, %v1495
        %v1520 = vpack.c.bf16 %v1496, %v1496
        %v1521 = vpack.c.bf16 %v1497, %v1497
        %v1522 = vld [vmem:[%s10] sm:$0xf]
        %v1523 = vld [vmem:[%s11] sm:$0xff]
        %1525 = vset.pattern.permute.xlu0 0
        %1526 = vperm.xlu0 %1525, %v1523
        %v1527 = vpop.permute.xlu0 %1526
        %1549 = vrot.lane.b32.xlu0 %v1502, 25
        %v1550 = vpop.permute.xlu0 %1549
        %1551 = vrot.lane.b32.xlu0 %v1503, 25
        %v1552 = vpop.permute.xlu0 %1551
        %1553 = vrot.lane.b32.xlu0 %v1504, 25
        %v1554 = vpop.permute.xlu0 %1553
        %1555 = vrot.lane.b32.xlu0 %v1505, 25
        %v1556 = vpop.permute.xlu0 %1555
        %1557 = vrot.lane.b32.xlu0 %v1506, 25
        %v1558 = vpop.permute.xlu0 %1557
        %1559 = vrot.lane.b32.xlu0 %v1507, 25
        %v1560 = vpop.permute.xlu0 %1559
        %1561 = vrot.lane.b32.xlu0 %v1508, 25
        %v1562 = vpop.permute.xlu0 %1561
        %1563 = vrot.lane.b32.xlu0 %v1509, 25
        %v1564 = vpop.permute.xlu0 %1563
        %1565 = vrot.lane.b32.xlu0 %v1510, 25
        %v1566 = vpop.permute.xlu0 %1565
        %1567 = vrot.lane.b32.xlu0 %v1511, 25
        %v1568 = vpop.permute.xlu0 %1567
        %1569 = vrot.lane.b32.xlu0 %v1512, 25
        %v1570 = vpop.permute.xlu0 %1569
        %1571 = vrot.lane.b32.xlu0 %v1513, 25
        %v1572 = vpop.permute.xlu0 %1571
        %1573 = vrot.lane.b32.xlu0 %v1514, 25
        %v1574 = vpop.permute.xlu0 %1573
        %1575 = vrot.lane.b32.xlu0 %v1515, 25
        %v1576 = vpop.permute.xlu0 %1575
        %1577 = vrot.lane.b32.xlu0 %v1516, 25
        %v1578 = vpop.permute.xlu0 %1577
        %1579 = vrot.lane.b32.xlu0 %v1517, 25
        %v1580 = vpop.permute.xlu0 %1579
        %1581 = vrot.lane.b32.xlu0 %v1518, 25
        %v1582 = vpop.permute.xlu0 %1581
        %1583 = vrot.lane.b32.xlu0 %v1519, 25
        %v1584 = vpop.permute.xlu0 %1583
        %1585 = vrot.lane.b32.xlu0 %v1520, 25
        %v1586 = vpop.permute.xlu0 %1585
        %1587 = vrot.lane.b32.xlu0 %v1521, 25
        %v1588 = vpop.permute.xlu0 %1587
        %v1589 = vsel %vm1234, %v1550, %v1552
        %v1590 = vsel %vm1234, %v1552, %v1554
        %v1591 = vsel %vm1234, %v1554, %v1556
        %v1592 = vsel %vm1234, %v1558, %v1560
        %v1593 = vsel %vm1234, %v1560, %v1562
        %v1594 = vsel %vm1234, %v1562, %v1564
        %v1595 = vsel %vm1234, %v1566, %v1568
        %v1596 = vsel %vm1234, %v1568, %v1570
        %v1597 = vsel %vm1234, %v1570, %v1572
        %v1598 = vsel %vm1234, %v1574, %v1576
        %v1599 = vsel %vm1234, %v1576, %v1578
        %v1600 = vsel %vm1234, %v1578, %v1580
        %v1601 = vsel %vm1234, %v1582, %v1584
        %v1602 = vsel %vm1234, %v1584, %v1586
        %v1603 = vsel %vm1234, %v1586, %v1588
        %vm1616 = vcmask 588800
        %v1618 = vsel %vm1616, %v1522, 0
        %vm1620 = vcmask 1043456
        %v1622 = vsel %vm1620, %v1601, 0
        %v1625 = vsel %vm1620, %v1602, 0
        %v1628 = vsel %vm1620, %v1603, 0
        %1630 = vmatprep.subr.bf16.mxu0 %v1590
        %1631 = vmatpush1.bf16.msra.mxu0 %v1589
        %1632 = vmatprep.subr.bf16.mxu0 %v1593
        %1633 = vmatpush1.bf16.msra.mxu0 %v1592
        %1634 = vmatprep.subr.bf16.mxu0 %v1596
        %1635 = vmatpush1.bf16.msra.mxu0 %v1595
        %1636 = vmatprep.subr.bf16.mxu0 %v1599
        %1637 = vmatpush1.bf16.msra.mxu0 %v1598
        %1638 = vmatprep.subr.bf16.mxu0 %v1625
        %1639 = vmatpush1.bf16.msra.mxu0 %v1622
        %1640 = vmatprep.subr.bf16.mxu0 0
        %1641 = vmatpush1.bf16.msra.mxu0 0
        %1642 = vmatprep.subr.bf16.mxu0 0
        %1643 = vmatpush1.bf16.msra.mxu0 0
        %1644 = vmatprep.subr.bf16.mxu0 0
        %1645 = vmatpush1.bf16.msra.mxu0 0
        %1646 = vmatprep.subr.bf16.mxu0 0
        %1647 = vmatpush1.bf16.msra.mxu0 0
        %1648 = vmatprep.subr.bf16.mxu0 0
        %1649 = vmatpush1.bf16.msra.mxu0 0
        %1650 = vmatprep.subr.bf16.mxu0 0
        %1651 = vmatpush1.bf16.msra.mxu0 0
        %1652 = vmatprep.subr.bf16.mxu0 0
        %1653 = vmatpush1.bf16.msra.mxu0 0
        %1654 = vmatprep.subr.bf16.mxu0 0
        %1655 = vmatpush1.bf16.msra.mxu0 0
        %1656 = vmatprep.subr.bf16.mxu0 0
        %1657 = vmatpush1.bf16.msra.mxu0 0
        %1658 = vmatprep.subr.bf16.mxu0 0
        %1659 = vmatpush1.bf16.msra.mxu0 0
        %1660 = vmatprep.subr.bf16.mxu0 0
        %1661 = vmatpush1.bf16.msra.mxu0 0
        %1662 = vmatprep.mubr.bf16.mxu0 0
        %1663 = vmatmul.mubr.bf16.gmra.mrb[0].mxu0 %v1618
        %v1664 = vpop.f32.mrb[0].mxu0
        %v1665 = vadd.f32 %v1527, %v1664
        %v1666 = vpop.f32.mrb[0].mxu0
        %v1667 = vadd.f32 %v1527, %v1666
        %v1668 = vpop.f32.mrb[0].mxu0
        %v1669 = vpop.f32.mrb[0].mxu0
        %1670 = vdwg.mxu0
        %1671 = vmatprep.subr.bf16.mxu0 0
        %1672 = vmatpush1.bf16.msra.mxu0 %v1591
        %1673 = vmatprep.subr.bf16.mxu0 0
        %1674 = vmatpush1.bf16.msra.mxu0 %v1594
        %1675 = vmatprep.subr.bf16.mxu0 0
        %1676 = vmatpush1.bf16.msra.mxu0 %v1597
        %1677 = vmatprep.subr.bf16.mxu0 0
        %1678 = vmatpush1.bf16.msra.mxu0 %v1600
        %1679 = vmatprep.subr.bf16.mxu0 0
        %1680 = vmatpush1.bf16.msra.mxu0 %v1628
        %1681 = vmatprep.subr.bf16.mxu0 0
        %1682 = vmatpush1.bf16.msra.mxu0 0
        %1683 = vmatprep.subr.bf16.mxu0 0
        %1684 = vmatpush1.bf16.msra.mxu0 0
        %1685 = vmatprep.subr.bf16.mxu0 0
        %1686 = vmatpush1.bf16.msra.mxu0 0
        %1687 = vmatprep.subr.bf16.mxu0 0
        %1688 = vmatpush1.bf16.msra.mxu0 0
        %1689 = vmatprep.subr.bf16.mxu0 0
        %1690 = vmatpush1.bf16.msra.mxu0 0
        %1691 = vmatprep.subr.bf16.mxu0 0
        %1692 = vmatpush1.bf16.msra.mxu0 0
        %1693 = vmatprep.subr.bf16.mxu0 0
        %1694 = vmatpush1.bf16.msra.mxu0 0
        %1695 = vmatprep.subr.bf16.mxu0 0
        %1696 = vmatpush1.bf16.msra.mxu0 0
        %1697 = vmatprep.subr.bf16.mxu0 0
        %1698 = vmatpush1.bf16.msra.mxu0 0
        %1699 = vmatprep.subr.bf16.mxu0 0
        %1700 = vmatpush1.bf16.msra.mxu0 0
        %1701 = vmatprep.subr.bf16.mxu0 0
        %1702 = vmatpush1.bf16.msra.mxu0 0
        %1703 = vmatprep.mubr.bf16.mxu0 0
        %1704 = vmatmul.mubr.bf16.gmra.mrb[0].mxu0 %v1618
        %v1705 = vpop.f32.mrb[0].mxu0
        %v1706 = vadd.f32 %v1527, %v1705
        %v1707 = vpop.f32.mrb[0].mxu0
        %v1708 = vpop.f32.mrb[0].mxu0
        %v1709 = vpop.f32.mrb[0].mxu0
        %1710 = vdwg.mxu0
        %v1711 = vmul.f32 %v1665, %v1381
        %v1712 = vmul.f32 %v1667, %v1385
        %v1713 = vmul.f32 %v1706, %v1389
        %v1714 = vld [vmem:[%s783] sm:$0xff]
        %1718 = vrot.lane.b32.xlu0 %v827, 127
        %v1719 = vpop.permute.xlu0 %1718
        %1720 = vrot.lane.b32.xlu0 %v828, 127
        %v1721 = vpop.permute.xlu0 %1720
        %1722 = vrot.lane.b32.xlu0 %v829, 127
        %v1723 = vpop.permute.xlu0 %1722
        %v1724 = vsel %vm851, %v844, %v1719
        %v1725 = vsel %vm851, %v1719, %v1721
        %v1726 = vsel %vm851, %v1721, %v1723
        %1731 = vrot.lane.b32.xlu0 %v827, 126
        %v1732 = vpop.permute.xlu0 %1731
        %1733 = vrot.lane.b32.xlu0 %v828, 126
        %v1734 = vpop.permute.xlu0 %1733
        %1735 = vrot.lane.b32.xlu0 %v829, 126
        %v1736 = vpop.permute.xlu0 %1735
        %v1737 = vsel %vm867, %v860, %v1732
        %v1738 = vsel %vm867, %v1732, %v1734
        %v1739 = vsel %vm867, %v1734, %v1736
        %1744 = vrot.lane.b32.xlu0 %v827, 104
        %v1745 = vpop.permute.xlu0 %1744
        %1746 = vrot.lane.b32.xlu0 %v828, 104
        %v1747 = vpop.permute.xlu0 %1746
        %1748 = vrot.lane.b32.xlu0 %v829, 104
        %v1749 = vpop.permute.xlu0 %1748
        %v1750 = vsel %vm883, %v876, %v1745
        %v1751 = vsel %vm883, %v1745, %v1747
        %v1752 = vsel %vm883, %v1747, %v1749
        %1757 = vrot.lane.b32.xlu0 %v827, 103
        %v1758 = vpop.permute.xlu0 %1757
        %1759 = vrot.lane.b32.xlu0 %v828, 103
        %v1760 = vpop.permute.xlu0 %1759
        %1761 = vrot.lane.b32.xlu0 %v829, 103
        %v1762 = vpop.permute.xlu0 %1761
        %v1763 = vsel %vm897, %v1758, %v1760
        %v1764 = vsel %vm897, %v1760, %v1762
        %1769 = vrot.lane.b32.xlu0 %v827, 102
        %v1770 = vpop.permute.xlu0 %1769
        %1771 = vrot.lane.b32.xlu0 %v828, 102
        %v1772 = vpop.permute.xlu0 %1771
        %1773 = vrot.lane.b32.xlu0 %v829, 102
        %v1774 = vpop.permute.xlu0 %1773
        %v1775 = vsel %vm912, %v1770, %v1772
        %v1776 = vsel %vm912, %v1772, %v1774
        %v1777 = vsel %vm912, %v1774, %v911
        %1782 = vrot.lane.b32.xlu0 %v827, 80
        %v1783 = vpop.permute.xlu0 %1782
        %1784 = vrot.lane.b32.xlu0 %v828, 80
        %v1785 = vpop.permute.xlu0 %1784
        %1786 = vrot.lane.b32.xlu0 %v829, 80
        %v1787 = vpop.permute.xlu0 %1786
        %v1788 = vsel %vm928, %v1783, %v1785
        %v1789 = vsel %vm928, %v1785, %v1787
        %v1790 = vsel %vm928, %v1787, %v927
        %1795 = vrot.lane.b32.xlu0 %v827, 79
        %v1796 = vpop.permute.xlu0 %1795
        %1797 = vrot.lane.b32.xlu0 %v828, 79
        %v1798 = vpop.permute.xlu0 %1797
        %1799 = vrot.lane.b32.xlu0 %v829, 79
        %v1800 = vpop.permute.xlu0 %1799
        %v1801 = vsel %vm944, %v1796, %v1798
        %v1802 = vsel %vm944, %v1798, %v1800
        %v1803 = vsel %vm944, %v1800, %v943
        %1808 = vrot.lane.b32.xlu0 %v827, 78
        %v1809 = vpop.permute.xlu0 %1808
        %1810 = vrot.lane.b32.xlu0 %v828, 78
        %v1811 = vpop.permute.xlu0 %1810
        %1812 = vrot.lane.b32.xlu0 %v829, 78
        %v1813 = vpop.permute.xlu0 %1812
        %v1814 = vsel %vm960, %v1809, %v1811
        %v1815 = vsel %vm960, %v1811, %v1813
        %v1816 = vsel %vm960, %v1813, %v959
        %v1821 = vpack.c.bf16 %v1724, 0.0
        %v1822 = vpack.c.bf16 %v1725, %v827
        %v1823 = vpack.c.bf16 %v1726, %v828
        %v1824 = vpack.c.bf16 %v1723, %v829
        %v1825 = vpack.c.bf16 %v1750, %v1737
        %v1826 = vpack.c.bf16 %v1751, %v1738
        %v1827 = vpack.c.bf16 %v1752, %v1739
        %v1828 = vpack.c.bf16 %v1749, %v1736
        %v1829 = vpack.c.bf16 %v1770, %v1758
        %v1830 = vpack.c.bf16 %v1775, %v1763
        %v1831 = vpack.c.bf16 %v1776, %v1764
        %v1832 = vpack.c.bf16 %v1777, %v1762
        %v1833 = vpack.c.bf16 %v1796, %v1783
        %v1834 = vpack.c.bf16 %v1801, %v1788
        %v1835 = vpack.c.bf16 %v1802, %v1789
        %v1836 = vpack.c.bf16 %v1803, %v1790
        %v1837 = vpack.c.bf16 0.0, %v1809
        %v1838 = vpack.c.bf16 %v797, %v1814
        %v1839 = vpack.c.bf16 %v798, %v1815
        %v1840 = vpack.c.bf16 %v799, %v1816
        %v1841 = vld [vmem:[%s12] sm:$0xff]
        %v1842 = vld [vmem:[%s13] sm:$0xff]
        %1844 = vset.pattern.permute.xlu0 0
        %1845 = vperm.xlu0 %1844, %v1842
        %v1846 = vpop.permute.xlu0 %1845
        %v1849 = vunpack.c.l.b16 %v1841
        %v1850 = vunpack.c.h.b16 %v1841
        %v1851 = vpack.c.b16 %v1849, %v1849
        %v1852 = vpack.c.b16 %v1850, %v1850
        %1874 = vrot.lane.b32.xlu0 %v1821, 25
        %v1875 = vpop.permute.xlu0 %1874
        %1876 = vrot.lane.b32.xlu0 %v1822, 25
        %v1877 = vpop.permute.xlu0 %1876
        %1878 = vrot.lane.b32.xlu0 %v1823, 25
        %v1879 = vpop.permute.xlu0 %1878
        %1880 = vrot.lane.b32.xlu0 %v1824, 25
        %v1881 = vpop.permute.xlu0 %1880
        %1882 = vrot.lane.b32.xlu0 %v1825, 25
        %v1883 = vpop.permute.xlu0 %1882
        %1884 = vrot.lane.b32.xlu0 %v1826, 25
        %v1885 = vpop.permute.xlu0 %1884
        %1886 = vrot.lane.b32.xlu0 %v1827, 25
        %v1887 = vpop.permute.xlu0 %1886
        %1888 = vrot.lane.b32.xlu0 %v1828, 25
        %v1889 = vpop.permute.xlu0 %1888
        %1890 = vrot.lane.b32.xlu0 %v1829, 25
        %v1891 = vpop.permute.xlu0 %1890
        %1892 = vrot.lane.b32.xlu0 %v1830, 25
        %v1893 = vpop.permute.xlu0 %1892
        %1894 = vrot.lane.b32.xlu0 %v1831, 25
        %v1895 = vpop.permute.xlu0 %1894
        %1896 = vrot.lane.b32.xlu0 %v1832, 25
        %v1897 = vpop.permute.xlu0 %1896
        %1898 = vrot.lane.b32.xlu0 %v1833, 25
        %v1899 = vpop.permute.xlu0 %1898
        %1900 = vrot.lane.b32.xlu0 %v1834, 25
        %v1901 = vpop.permute.xlu0 %1900
        %1902 = vrot.lane.b32.xlu0 %v1835, 25
        %v1903 = vpop.permute.xlu0 %1902
        %1904 = vrot.lane.b32.xlu0 %v1836, 25
        %v1905 = vpop.permute.xlu0 %1904
        %1906 = vrot.lane.b32.xlu0 %v1837, 25
        %v1907 = vpop.permute.xlu0 %1906
        %1908 = vrot.lane.b32.xlu0 %v1838, 25
        %v1909 = vpop.permute.xlu0 %1908
        %1910 = vrot.lane.b32.xlu0 %v1839, 25
        %v1911 = vpop.permute.xlu0 %1910
        %1912 = vrot.lane.b32.xlu0 %v1840, 25
        %v1913 = vpop.permute.xlu0 %1912
        %v1914 = vsel %vm1234, %v1875, %v1877
        %v1915 = vsel %vm1234, %v1877, %v1879
        %v1916 = vsel %vm1234, %v1879, %v1881
        %v1917 = vsel %vm1234, %v1883, %v1885
        %v1918 = vsel %vm1234, %v1885, %v1887
        %v1919 = vsel %vm1234, %v1887, %v1889
        %v1920 = vsel %vm1234, %v1891, %v1893
        %v1921 = vsel %vm1234, %v1893, %v1895
        %v1922 = vsel %vm1234, %v1895, %v1897
        %v1923 = vsel %vm1234, %v1899, %v1901
        %v1924 = vsel %vm1234, %v1901, %v1903
        %v1925 = vsel %vm1234, %v1903, %v1905
        %v1926 = vsel %vm1234, %v1907, %v1909
        %v1927 = vsel %vm1234, %v1909, %v1911
        %v1928 = vsel %vm1234, %v1911, %v1913
        %v1945 = vsel %vm1289, %v1852, 0
        %1947 = vmatprep.subr.bf16.mxu0 %v1915
        %1948 = vmatpush1.bf16.msra.mxu0 %v1914
        %1949 = vmatprep.subr.bf16.mxu0 %v1918
        %1950 = vmatpush1.bf16.msra.mxu0 %v1917
        %1951 = vmatprep.subr.bf16.mxu0 %v1921
        %1952 = vmatpush1.bf16.msra.mxu0 %v1920
        %1953 = vmatprep.subr.bf16.mxu0 %v1924
        %1954 = vmatpush1.bf16.msra.mxu0 %v1923
        %1955 = vmatprep.subr.bf16.mxu0 %v1927
        %1956 = vmatpush1.bf16.msra.mxu0 %v1926
        %1957 = vmatprep.subr.bf16.mxu0 %v1251
        %1958 = vmatpush1.bf16.msra.mxu0 %v1250
        %1959 = vmatprep.subr.bf16.mxu0 %v1254
        %1960 = vmatpush1.bf16.msra.mxu0 %v1253
        %1961 = vmatprep.subr.bf16.mxu0 %v1257
        %1962 = vmatpush1.bf16.msra.mxu0 %v1256
        %1963 = vmatprep.subr.bf16.mxu0 %v1260
        %1964 = vmatpush1.bf16.msra.mxu0 %v1259
        %1965 = vmatprep.subr.bf16.mxu0 0
        %1966 = vmatpush1.bf16.msra.mxu0 0
        %1967 = vmatprep.subr.bf16.mxu0 0
        %1968 = vmatpush1.bf16.msra.mxu0 0
        %1969 = vmatprep.subr.bf16.mxu0 0
        %1970 = vmatpush1.bf16.msra.mxu0 0
        %1971 = vmatprep.subr.bf16.mxu0 0
        %1972 = vmatpush1.bf16.msra.mxu0 0
        %1973 = vmatprep.subr.bf16.mxu0 0
        %1974 = vmatpush1.bf16.msra.mxu0 0
        %1975 = vmatprep.subr.bf16.mxu0 0
        %1976 = vmatpush1.bf16.msra.mxu0 0
        %1977 = vmatprep.subr.bf16.mxu0 0
        %1978 = vmatpush1.bf16.msra.mxu0 0
        %1979 = vmatprep.mubr.bf16.mxu0 %v1945
        %1980 = vmatmul.mubr.bf16.gmra.mrb[0].mxu0 %v1851
        %v1981 = vpop.f32.mrb[0].mxu0
        %v1982 = vadd.f32 %v1846, %v1981
        %v1983 = vpop.f32.mrb[0].mxu0
        %v1984 = vadd.f32 %v1846, %v1983
        %v1985 = vpop.f32.mrb[0].mxu0
        %v1986 = vpop.f32.mrb[0].mxu0
        %1987 = vdwg.mxu0
        %1988 = vmatprep.subr.bf16.mxu0 0
        %1989 = vmatpush1.bf16.msra.mxu0 %v1916
        %1990 = vmatprep.subr.bf16.mxu0 0
        %1991 = vmatpush1.bf16.msra.mxu0 %v1919
        %1992 = vmatprep.subr.bf16.mxu0 0
        %1993 = vmatpush1.bf16.msra.mxu0 %v1922
        %1994 = vmatprep.subr.bf16.mxu0 0
        %1995 = vmatpush1.bf16.msra.mxu0 %v1925
        %1996 = vmatprep.subr.bf16.mxu0 0
        %1997 = vmatpush1.bf16.msra.mxu0 %v1928
        %1998 = vmatprep.subr.bf16.mxu0 0
        %1999 = vmatpush1.bf16.msra.mxu0 %v1252
        %2000 = vmatprep.subr.bf16.mxu0 0
        %2001 = vmatpush1.bf16.msra.mxu0 %v1255
        %2002 = vmatprep.subr.bf16.mxu0 0
        %2003 = vmatpush1.bf16.msra.mxu0 %v1258
        %2004 = vmatprep.subr.bf16.mxu0 0
        %2005 = vmatpush1.bf16.msra.mxu0 %v1261
        %2006 = vmatprep.subr.bf16.mxu0 0
        %2007 = vmatpush1.bf16.msra.mxu0 0
        %2008 = vmatprep.subr.bf16.mxu0 0
        %2009 = vmatpush1.bf16.msra.mxu0 0
        %2010 = vmatprep.subr.bf16.mxu0 0
        %2011 = vmatpush1.bf16.msra.mxu0 0
        %2012 = vmatprep.subr.bf16.mxu0 0
        %2013 = vmatpush1.bf16.msra.mxu0 0
        %2014 = vmatprep.subr.bf16.mxu0 0
        %2015 = vmatpush1.bf16.msra.mxu0 0
        %2016 = vmatprep.subr.bf16.mxu0 0
        %2017 = vmatpush1.bf16.msra.mxu0 0
        %2018 = vmatprep.subr.bf16.mxu0 0
        %2019 = vmatpush1.bf16.msra.mxu0 0
        %2020 = vmatprep.mubr.bf16.mxu0 %v1945
        %2021 = vmatmul.mubr.bf16.gmra.mrb[0].mxu0 %v1851
        %v2022 = vpop.f32.mrb[0].mxu0
        %v2023 = vadd.f32 %v1846, %v2022
        %v2024 = vpop.f32.mrb[0].mxu0
        %v2025 = vpop.f32.mrb[0].mxu0
        %v2026 = vpop.f32.mrb[0].mxu0
        %2027 = vdwg.mxu0
        %v2028 = vadd.f32 %v1982, %v1393
        %v2029 = vadd.f32 %v1984, %v1394
        %v2030 = vadd.f32 %v2023, %v1395
        %2032 = vset.pattern.permute.xlu0 0
        %2033 = vperm.xlu0 %2032, %v1714
        %v2034 = vpop.permute.xlu0 %2033
        %v2036 = vadd.f32 %v2028, %v2034
        %v2037 = vadd.f32 %v2029, %v2034
        %v2038 = vadd.f32 %v2030, %v2034
        %v2039 = vmax.f32 %v2036, 0.0
        %v2040 = vmax.f32 %v2037, 0.0
        %v2041 = vmax.f32 %v2038, 0.0
        %v2042 = vmul.f32 %v2039, %v1381
        %v2043 = vmul.f32 %v2040, %v1385
        %v2044 = vmul.f32 %v2041, %v1389
        %2048 = vrot.lane.b32.xlu0 %v2042, 127
        %v2049 = vpop.permute.xlu0 %2048
        %2050 = vrot.lane.b32.xlu0 %v2043, 127
        %v2051 = vpop.permute.xlu0 %2050
        %2052 = vrot.lane.b32.xlu0 %v2044, 127
        %v2053 = vpop.permute.xlu0 %2052
        %v2054 = vsel %vm851, %v844, %v2049
        %v2055 = vsel %vm851, %v2049, %v2051
        %v2056 = vsel %vm851, %v2051, %v2053
        %2061 = vrot.lane.b32.xlu0 %v2042, 126
        %v2062 = vpop.permute.xlu0 %2061
        %2063 = vrot.lane.b32.xlu0 %v2043, 126
        %v2064 = vpop.permute.xlu0 %2063
        %2065 = vrot.lane.b32.xlu0 %v2044, 126
        %v2066 = vpop.permute.xlu0 %2065
        %v2067 = vsel %vm867, %v860, %v2062
        %v2068 = vsel %vm867, %v2062, %v2064
        %v2069 = vsel %vm867, %v2064, %v2066
        %2074 = vrot.lane.b32.xlu0 %v2042, 104
        %v2075 = vpop.permute.xlu0 %2074
        %2076 = vrot.lane.b32.xlu0 %v2043, 104
        %v2077 = vpop.permute.xlu0 %2076
        %2078 = vrot.lane.b32.xlu0 %v2044, 104
        %v2079 = vpop.permute.xlu0 %2078
        %v2080 = vsel %vm883, %v876, %v2075
        %v2081 = vsel %vm883, %v2075, %v2077
        %v2082 = vsel %vm883, %v2077, %v2079
        %2087 = vrot.lane.b32.xlu0 %v2042, 103
        %v2088 = vpop.permute.xlu0 %2087
        %2089 = vrot.lane.b32.xlu0 %v2043, 103
        %v2090 = vpop.permute.xlu0 %2089
        %2091 = vrot.lane.b32.xlu0 %v2044, 103
        %v2092 = vpop.permute.xlu0 %2091
        %v2093 = vsel %vm897, %v2088, %v2090
        %v2094 = vsel %vm897, %v2090, %v2092
        %2099 = vrot.lane.b32.xlu0 %v2042, 102
        %v2100 = vpop.permute.xlu0 %2099
        %2101 = vrot.lane.b32.xlu0 %v2043, 102
        %v2102 = vpop.permute.xlu0 %2101
        %2103 = vrot.lane.b32.xlu0 %v2044, 102
        %v2104 = vpop.permute.xlu0 %2103
        %v2105 = vsel %vm912, %v2100, %v2102
        %v2106 = vsel %vm912, %v2102, %v2104
        %v2107 = vsel %vm912, %v2104, %v911
        %2112 = vrot.lane.b32.xlu0 %v2042, 80
        %v2113 = vpop.permute.xlu0 %2112
        %2114 = vrot.lane.b32.xlu0 %v2043, 80
        %v2115 = vpop.permute.xlu0 %2114
        %2116 = vrot.lane.b32.xlu0 %v2044, 80
        %v2117 = vpop.permute.xlu0 %2116
        %v2118 = vsel %vm928, %v2113, %v2115
        %v2119 = vsel %vm928, %v2115, %v2117
        %v2120 = vsel %vm928, %v2117, %v927
        %2125 = vrot.lane.b32.xlu0 %v2042, 79
        %v2126 = vpop.permute.xlu0 %2125
        %2127 = vrot.lane.b32.xlu0 %v2043, 79
        %v2128 = vpop.permute.xlu0 %2127
        %2129 = vrot.lane.b32.xlu0 %v2044, 79
        %v2130 = vpop.permute.xlu0 %2129
        %v2131 = vsel %vm944, %v2126, %v2128
        %v2132 = vsel %vm944, %v2128, %v2130
        %v2133 = vsel %vm944, %v2130, %v943
        %2138 = vrot.lane.b32.xlu0 %v2042, 78
        %v2139 = vpop.permute.xlu0 %2138
        %2140 = vrot.lane.b32.xlu0 %v2043, 78
        %v2141 = vpop.permute.xlu0 %2140
        %2142 = vrot.lane.b32.xlu0 %v2044, 78
        %v2143 = vpop.permute.xlu0 %2142
        %v2144 = vsel %vm960, %v2139, %v2141
        %v2145 = vsel %vm960, %v2141, %v2143
        %v2146 = vsel %vm960, %v2143, %v959
        %v2151 = vpack.c.bf16 %v2054, 0.0
        %v2152 = vpack.c.bf16 %v2055, %v2042
        %v2153 = vpack.c.bf16 %v2056, %v2043
        %v2154 = vpack.c.bf16 %v2053, %v2044
        %v2155 = vpack.c.bf16 %v2080, %v2067
        %v2156 = vpack.c.bf16 %v2081, %v2068
        %v2157 = vpack.c.bf16 %v2082, %v2069
        %v2158 = vpack.c.bf16 %v2079, %v2066
        %v2159 = vpack.c.bf16 %v2100, %v2088
        %v2160 = vpack.c.bf16 %v2105, %v2093
        %v2161 = vpack.c.bf16 %v2106, %v2094
        %v2162 = vpack.c.bf16 %v2107, %v2092
        %v2163 = vpack.c.bf16 %v2126, %v2113
        %v2164 = vpack.c.bf16 %v2131, %v2118
        %v2165 = vpack.c.bf16 %v2132, %v2119
        %v2166 = vpack.c.bf16 %v2133, %v2120
        %v2167 = vpack.c.bf16 %v2139, %v2139
        %v2168 = vpack.c.bf16 %v2144, %v2144
        %v2169 = vpack.c.bf16 %v2145, %v2145
        %v2170 = vpack.c.bf16 %v2146, %v2146
        %v2171 = vld [vmem:[%s14] sm:$0xf]
        %v2172 = vld [vmem:[%s15] sm:$0xff]
        %2174 = vset.pattern.permute.xlu0 0
        %2175 = vperm.xlu0 %2174, %v2172
        %v2176 = vpop.permute.xlu0 %2175
        %2198 = vrot.lane.b32.xlu0 %v2151, 25
        %v2199 = vpop.permute.xlu0 %2198
        %2200 = vrot.lane.b32.xlu0 %v2152, 25
        %v2201 = vpop.permute.xlu0 %2200
        %2202 = vrot.lane.b32.xlu0 %v2153, 25
        %v2203 = vpop.permute.xlu0 %2202
        %2204 = vrot.lane.b32.xlu0 %v2154, 25
        %v2205 = vpop.permute.xlu0 %2204
        %2206 = vrot.lane.b32.xlu0 %v2155, 25
        %v2207 = vpop.permute.xlu0 %2206
        %2208 = vrot.lane.b32.xlu0 %v2156, 25
        %v2209 = vpop.permute.xlu0 %2208
        %2210 = vrot.lane.b32.xlu0 %v2157, 25
        %v2211 = vpop.permute.xlu0 %2210
        %2212 = vrot.lane.b32.xlu0 %v2158, 25
        %v2213 = vpop.permute.xlu0 %2212
        %2214 = vrot.lane.b32.xlu0 %v2159, 25
        %v2215 = vpop.permute.xlu0 %2214
        %2216 = vrot.lane.b32.xlu0 %v2160, 25
        %v2217 = vpop.permute.xlu0 %2216
        %2218 = vrot.lane.b32.xlu0 %v2161, 25
        %v2219 = vpop.permute.xlu0 %2218
        %2220 = vrot.lane.b32.xlu0 %v2162, 25
        %v2221 = vpop.permute.xlu0 %2220
        %2222 = vrot.lane.b32.xlu0 %v2163, 25
        %v2223 = vpop.permute.xlu0 %2222
        %2224 = vrot.lane.b32.xlu0 %v2164, 25
        %v2225 = vpop.permute.xlu0 %2224
        %2226 = vrot.lane.b32.xlu0 %v2165, 25
        %v2227 = vpop.permute.xlu0 %2226
        %2228 = vrot.lane.b32.xlu0 %v2166, 25
        %v2229 = vpop.permute.xlu0 %2228
        %2230 = vrot.lane.b32.xlu0 %v2167, 25
        %v2231 = vpop.permute.xlu0 %2230
        %2232 = vrot.lane.b32.xlu0 %v2168, 25
        %v2233 = vpop.permute.xlu0 %2232
        %2234 = vrot.lane.b32.xlu0 %v2169, 25
        %v2235 = vpop.permute.xlu0 %2234
        %2236 = vrot.lane.b32.xlu0 %v2170, 25
        %v2237 = vpop.permute.xlu0 %2236
        %v2238 = vsel %vm1234, %v2199, %v2201
        %v2239 = vsel %vm1234, %v2201, %v2203
        %v2240 = vsel %vm1234, %v2203, %v2205
        %v2241 = vsel %vm1234, %v2207, %v2209
        %v2242 = vsel %vm1234, %v2209, %v2211
        %v2243 = vsel %vm1234, %v2211, %v2213
        %v2244 = vsel %vm1234, %v2215, %v2217
        %v2245 = vsel %vm1234, %v2217, %v2219
        %v2246 = vsel %vm1234, %v2219, %v2221
        %v2247 = vsel %vm1234, %v2223, %v2225
        %v2248 = vsel %vm1234, %v2225, %v2227
        %v2249 = vsel %vm1234, %v2227, %v2229
        %v2250 = vsel %vm1234, %v2231, %v2233
        %v2251 = vsel %vm1234, %v2233, %v2235
        %v2252 = vsel %vm1234, %v2235, %v2237
        %v2266 = vsel %vm1616, %v2171, 0
        %v2269 = vsel %vm1620, %v2250, 0
        %v2272 = vsel %vm1620, %v2251, 0
        %v2275 = vsel %vm1620, %v2252, 0
        %2277 = vmatprep.subr.bf16.mxu0 %v2239
        %2278 = vmatpush1.bf16.msra.mxu0 %v2238
        %2279 = vmatprep.subr.bf16.mxu0 %v2242
        %2280 = vmatpush1.bf16.msra.mxu0 %v2241
        %2281 = vmatprep.subr.bf16.mxu0 %v2245
        %2282 = vmatpush1.bf16.msra.mxu0 %v2244
        %2283 = vmatprep.subr.bf16.mxu0 %v2248
        %2284 = vmatpush1.bf16.msra.mxu0 %v2247
        %2285 = vmatprep.subr.bf16.mxu0 %v2272
        %2286 = vmatpush1.bf16.msra.mxu0 %v2269
        %2287 = vmatprep.subr.bf16.mxu0 0
        %2288 = vmatpush1.bf16.msra.mxu0 0
        %2289 = vmatprep.subr.bf16.mxu0 0
        %2290 = vmatpush1.bf16.msra.mxu0 0
        %2291 = vmatprep.subr.bf16.mxu0 0
        %2292 = vmatpush1.bf16.msra.mxu0 0
        %2293 = vmatprep.subr.bf16.mxu0 0
        %2294 = vmatpush1.bf16.msra.mxu0 0
        %2295 = vmatprep.subr.bf16.mxu0 0
        %2296 = vmatpush1.bf16.msra.mxu0 0
        %2297 = vmatprep.subr.bf16.mxu0 0
        %2298 = vmatpush1.bf16.msra.mxu0 0
        %2299 = vmatprep.subr.bf16.mxu0 0
        %2300 = vmatpush1.bf16.msra.mxu0 0
        %2301 = vmatprep.subr.bf16.mxu0 0
        %2302 = vmatpush1.bf16.msra.mxu0 0
        %2303 = vmatprep.subr.bf16.mxu0 0
        %2304 = vmatpush1.bf16.msra.mxu0 0
        %2305 = vmatprep.subr.bf16.mxu0 0
        %2306 = vmatpush1.bf16.msra.mxu0 0
        %2307 = vmatprep.subr.bf16.mxu0 0
        %2308 = vmatpush1.bf16.msra.mxu0 0
        %2309 = vmatprep.mubr.bf16.mxu0 0
        %2310 = vmatmul.mubr.bf16.gmra.mrb[0].mxu0 %v2266
        %v2311 = vpop.f32.mrb[0].mxu0
        %v2312 = vadd.f32 %v2176, %v2311
        %v2313 = vpop.f32.mrb[0].mxu0
        %v2314 = vadd.f32 %v2176, %v2313
        %v2315 = vpop.f32.mrb[0].mxu0
        %v2316 = vpop.f32.mrb[0].mxu0
        %2317 = vdwg.mxu0
        %2318 = vmatprep.subr.bf16.mxu0 0
        %2319 = vmatpush1.bf16.msra.mxu0 %v2240
        %2320 = vmatprep.subr.bf16.mxu0 0
        %2321 = vmatpush1.bf16.msra.mxu0 %v2243
        %2322 = vmatprep.subr.bf16.mxu0 0
        %2323 = vmatpush1.bf16.msra.mxu0 %v2246
        %2324 = vmatprep.subr.bf16.mxu0 0
        %2325 = vmatpush1.bf16.msra.mxu0 %v2249
        %2326 = vmatprep.subr.bf16.mxu0 0
        %2327 = vmatpush1.bf16.msra.mxu0 %v2275
        %2328 = vmatprep.subr.bf16.mxu0 0
        %2329 = vmatpush1.bf16.msra.mxu0 0
        %2330 = vmatprep.subr.bf16.mxu0 0
        %2331 = vmatpush1.bf16.msra.mxu0 0
        %2332 = vmatprep.subr.bf16.mxu0 0
        %2333 = vmatpush1.bf16.msra.mxu0 0
        %2334 = vmatprep.subr.bf16.mxu0 0
        %2335 = vmatpush1.bf16.msra.mxu0 0
        %2336 = vmatprep.subr.bf16.mxu0 0
        %2337 = vmatpush1.bf16.msra.mxu0 0
        %2338 = vmatprep.subr.bf16.mxu0 0
        %2339 = vmatpush1.bf16.msra.mxu0 0
        %2340 = vmatprep.subr.bf16.mxu0 0
        %2341 = vmatpush1.bf16.msra.mxu0 0
        %2342 = vmatprep.subr.bf16.mxu0 0
        %2343 = vmatpush1.bf16.msra.mxu0 0
        %2344 = vmatprep.subr.bf16.mxu0 0
        %2345 = vmatpush1.bf16.msra.mxu0 0
        %2346 = vmatprep.subr.bf16.mxu0 0
        %2347 = vmatpush1.bf16.msra.mxu0 0
        %2348 = vmatprep.subr.bf16.mxu0 0
        %2349 = vmatpush1.bf16.msra.mxu0 0
        %2350 = vmatprep.mubr.bf16.mxu0 0
        %2351 = vmatmul.mubr.bf16.gmra.mrb[0].mxu0 %v2266
        %v2352 = vpop.f32.mrb[0].mxu0
        %v2353 = vadd.f32 %v2176, %v2352
        %v2354 = vpop.f32.mrb[0].mxu0
        %v2355 = vpop.f32.mrb[0].mxu0
        %v2356 = vpop.f32.mrb[0].mxu0
        %2357 = vdwg.mxu0
        %v2358 = vmax.f32 %v2312, 0.0
        %v2359 = vmax.f32 %v2314, 0.0
        %v2360 = vmax.f32 %v2353, 0.0
        %v2361 = vmul.f32 %v2358, %v1381
        %v2362 = vmul.f32 %v2359, %v1385
        %v2363 = vmul.f32 %v2360, %v1389
        %2367 = vrot.lane.b32.xlu0 %v2361, 127
        %v2368 = vpop.permute.xlu0 %2367
        %2369 = vrot.lane.b32.xlu0 %v2362, 127
        %v2370 = vpop.permute.xlu0 %2369
        %2371 = vrot.lane.b32.xlu0 %v2363, 127
        %v2372 = vpop.permute.xlu0 %2371
        %v2373 = vsel %vm851, %v844, %v2368
        %v2374 = vsel %vm851, %v2368, %v2370
        %v2375 = vsel %vm851, %v2370, %v2372
        %2380 = vrot.lane.b32.xlu0 %v2361, 126
        %v2381 = vpop.permute.xlu0 %2380
        %2382 = vrot.lane.b32.xlu0 %v2362, 126
        %v2383 = vpop.permute.xlu0 %2382
        %2384 = vrot.lane.b32.xlu0 %v2363, 126
        %v2385 = vpop.permute.xlu0 %2384
        %v2386 = vsel %vm867, %v860, %v2381
        %v2387 = vsel %vm867, %v2381, %v2383
        %v2388 = vsel %vm867, %v2383, %v2385
        %2393 = vrot.lane.b32.xlu0 %v2361, 104
        %v2394 = vpop.permute.xlu0 %2393
        %2395 = vrot.lane.b32.xlu0 %v2362, 104
        %v2396 = vpop.permute.xlu0 %2395
        %2397 = vrot.lane.b32.xlu0 %v2363, 104
        %v2398 = vpop.permute.xlu0 %2397
        %v2399 = vsel %vm883, %v876, %v2394
        %v2400 = vsel %vm883, %v2394, %v2396
        %v2401 = vsel %vm883, %v2396, %v2398
        %2406 = vrot.lane.b32.xlu0 %v2361, 103
        %v2407 = vpop.permute.xlu0 %2406
        %2408 = vrot.lane.b32.xlu0 %v2362, 103
        %v2409 = vpop.permute.xlu0 %2408
        %2410 = vrot.lane.b32.xlu0 %v2363, 103
        %v2411 = vpop.permute.xlu0 %2410
        %v2412 = vsel %vm897, %v2407, %v2409
        %v2413 = vsel %vm897, %v2409, %v2411
        %2418 = vrot.lane.b32.xlu0 %v2361, 102
        %v2419 = vpop.permute.xlu0 %2418
        %2420 = vrot.lane.b32.xlu0 %v2362, 102
        %v2421 = vpop.permute.xlu0 %2420
        %2422 = vrot.lane.b32.xlu0 %v2363, 102
        %v2423 = vpop.permute.xlu0 %2422
        %v2424 = vsel %vm912, %v2419, %v2421
        %v2425 = vsel %vm912, %v2421, %v2423
        %v2426 = vsel %vm912, %v2423, %v911
        %2431 = vrot.lane.b32.xlu0 %v2361, 80
        %v2432 = vpop.permute.xlu0 %2431
        %2433 = vrot.lane.b32.xlu0 %v2362, 80
        %v2434 = vpop.permute.xlu0 %2433
        %2435 = vrot.lane.b32.xlu0 %v2363, 80
        %v2436 = vpop.permute.xlu0 %2435
        %v2437 = vsel %vm928, %v2432, %v2434
        %v2438 = vsel %vm928, %v2434, %v2436
        %v2439 = vsel %vm928, %v2436, %v927
        %2444 = vrot.lane.b32.xlu0 %v2361, 79
        %v2445 = vpop.permute.xlu0 %2444
        %2446 = vrot.lane.b32.xlu0 %v2362, 79
        %v2447 = vpop.permute.xlu0 %2446
        %2448 = vrot.lane.b32.xlu0 %v2363, 79
        %v2449 = vpop.permute.xlu0 %2448
        %v2450 = vsel %vm944, %v2445, %v2447
        %v2451 = vsel %vm944, %v2447, %v2449
        %v2452 = vsel %vm944, %v2449, %v943
        %2457 = vrot.lane.b32.xlu0 %v2361, 78
        %v2458 = vpop.permute.xlu0 %2457
        %2459 = vrot.lane.b32.xlu0 %v2362, 78
        %v2460 = vpop.permute.xlu0 %2459
        %2461 = vrot.lane.b32.xlu0 %v2363, 78
        %v2462 = vpop.permute.xlu0 %2461
        %v2463 = vsel %vm960, %v2458, %v2460
        %v2464 = vsel %vm960, %v2460, %v2462
        %v2465 = vsel %vm960, %v2462, %v959
        %v2470 = vsel %vm851, %v2053, %v844
        %2471 = vrot.lane.b32.xlu0 0.0, 49
        %v2472 = vpop.permute.xlu0 %2471
        %2473 = vrot.lane.b32.xlu0 %v1393, 49
        %v2474 = vpop.permute.xlu0 %2473
        %2475 = vrot.lane.b32.xlu0 %v1394, 49
        %v2476 = vpop.permute.xlu0 %2475
        %2477 = vrot.lane.b32.xlu0 %v1395, 49
        %v2478 = vpop.permute.xlu0 %2477
        %vm2479 = vcmask 400384
        %v2480 = vsel %vm2479, %v2472, %v2474
        %v2481 = vsel %vm2479, %v2474, %v2476
        %v2482 = vsel %vm2479, %v2476, %v2478
        %2483 = vrot.lane.b32.xlu0 0.0, 48
        %v2484 = vpop.permute.xlu0 %2483
        %2485 = vrot.lane.b32.xlu0 %v1393, 48
        %v2486 = vpop.permute.xlu0 %2485
        %2487 = vrot.lane.b32.xlu0 %v1394, 48
        %v2488 = vpop.permute.xlu0 %2487
        %2489 = vrot.lane.b32.xlu0 %v1395, 48
        %v2490 = vpop.permute.xlu0 %2489
        %vm2491 = vcmask 392192
        %v2492 = vsel %vm2491, %v2484, %v2486
        %v2493 = vsel %vm2491, %v2486, %v2488
        %v2494 = vsel %vm2491, %v2488, %v2490
        %2495 = vrot.lane.b32.xlu0 0.0, 47
        %v2496 = vpop.permute.xlu0 %2495
        %2497 = vrot.lane.b32.xlu0 %v1393, 47
        %v2498 = vpop.permute.xlu0 %2497
        %2499 = vrot.lane.b32.xlu0 %v1394, 47
        %v2500 = vpop.permute.xlu0 %2499
        %2501 = vrot.lane.b32.xlu0 %v1395, 47
        %v2502 = vpop.permute.xlu0 %2501
        %vm2503 = vcmask 384000
        %v2504 = vsel %vm2503, %v2496, %v2498
        %v2505 = vsel %vm2503, %v2498, %v2500
        %v2506 = vsel %vm2503, %v2500, %v2502
        %2507 = vrot.lane.b32.xlu0 0.0, 25
        %v2508 = vpop.permute.xlu0 %2507
        %2509 = vrot.lane.b32.xlu0 %v1393, 25
        %v2510 = vpop.permute.xlu0 %2509
        %2511 = vrot.lane.b32.xlu0 %v1394, 25
        %v2512 = vpop.permute.xlu0 %2511
        %2513 = vrot.lane.b32.xlu0 %v1395, 25
        %v2514 = vpop.permute.xlu0 %2513
        %vm2515 = vcmask 203776
        %v2516 = vsel %vm2515, %v2508, %v2510
        %v2517 = vsel %vm2515, %v2510, %v2512
        %v2518 = vsel %vm2515, %v2512, %v2514
        %2519 = vrot.lane.b32.xlu0 %v1393, 24
        %v2520 = vpop.permute.xlu0 %2519
        %2521 = vrot.lane.b32.xlu0 %v1394, 24
        %v2522 = vpop.permute.xlu0 %2521
        %2523 = vrot.lane.b32.xlu0 %v1395, 24
        %v2524 = vpop.permute.xlu0 %2523
        %vm2525 = vcmask 195584
        %v2526 = vsel %vm2525, %v2520, %v2522
        %v2527 = vsel %vm2525, %v2522, %v2524
        %2528 = vrot.lane.b32.xlu0 %v1393, 23
        %v2529 = vpop.permute.xlu0 %2528
        %2530 = vrot.lane.b32.xlu0 %v1394, 23
        %v2531 = vpop.permute.xlu0 %2530
        %2532 = vrot.lane.b32.xlu0 %v1395, 23
        %v2533 = vpop.permute.xlu0 %2532
        %2534 = vrot.lane.b32.xlu0 0.0, 23
        %v2535 = vpop.permute.xlu0 %2534
        %vm2536 = vcmask 187392
        %v2537 = vsel %vm2536, %v2529, %v2531
        %v2538 = vsel %vm2536, %v2531, %v2533
        %v2539 = vsel %vm2536, %v2533, %v2535
        %2540 = vrot.lane.b32.xlu0 %v1393, 1
        %v2541 = vpop.permute.xlu0 %2540
        %2542 = vrot.lane.b32.xlu0 %v1394, 1
        %v2543 = vpop.permute.xlu0 %2542
        %2544 = vrot.lane.b32.xlu0 %v1395, 1
        %v2545 = vpop.permute.xlu0 %2544
        %2546 = vrot.lane.b32.xlu0 0.0, 1
        %v2547 = vpop.permute.xlu0 %2546
        %vm2548 = vcmask 7168
        %v2549 = vsel %vm2548, %v2541, %v2543
        %v2550 = vsel %vm2548, %v2543, %v2545
        %v2551 = vsel %vm2548, %v2545, %v2547
        %v2552 = vsel %vm851, %v1404, %v844
        %2556 = vrot.lane.b32.xlu0 %v1711, 49
        %v2557 = vpop.permute.xlu0 %2556
        %2558 = vrot.lane.b32.xlu0 %v1712, 49
        %v2559 = vpop.permute.xlu0 %2558
        %2560 = vrot.lane.b32.xlu0 %v1713, 49
        %v2561 = vpop.permute.xlu0 %2560
        %v2562 = vsel %vm2479, %v2472, %v2557
        %v2563 = vsel %vm2479, %v2557, %v2559
        %v2564 = vsel %vm2479, %v2559, %v2561
        %2565 = vrot.lane.b32.xlu0 %v1711, 48
        %v2566 = vpop.permute.xlu0 %2565
        %2567 = vrot.lane.b32.xlu0 %v1712, 48
        %v2568 = vpop.permute.xlu0 %2567
        %2569 = vrot.lane.b32.xlu0 %v1713, 48
        %v2570 = vpop.permute.xlu0 %2569
        %v2571 = vsel %vm2491, %v2484, %v2566
        %v2572 = vsel %vm2491, %v2566, %v2568
        %v2573 = vsel %vm2491, %v2568, %v2570
        %2574 = vrot.lane.b32.xlu0 %v1711, 47
        %v2575 = vpop.permute.xlu0 %2574
        %2576 = vrot.lane.b32.xlu0 %v1712, 47
        %v2577 = vpop.permute.xlu0 %2576
        %2578 = vrot.lane.b32.xlu0 %v1713, 47
        %v2579 = vpop.permute.xlu0 %2578
        %v2580 = vsel %vm2503, %v2496, %v2575
        %v2581 = vsel %vm2503, %v2575, %v2577
        %v2582 = vsel %vm2503, %v2577, %v2579
        %2583 = vrot.lane.b32.xlu0 %v1711, 25
        %v2584 = vpop.permute.xlu0 %2583
        %2585 = vrot.lane.b32.xlu0 %v1712, 25
        %v2586 = vpop.permute.xlu0 %2585
        %2587 = vrot.lane.b32.xlu0 %v1713, 25
        %v2588 = vpop.permute.xlu0 %2587
        %v2589 = vsel %vm2515, %v2508, %v2584
        %v2590 = vsel %vm2515, %v2584, %v2586
        %v2591 = vsel %vm2515, %v2586, %v2588
        %2592 = vrot.lane.b32.xlu0 %v1711, 24
        %v2593 = vpop.permute.xlu0 %2592
        %2594 = vrot.lane.b32.xlu0 %v1712, 24
        %v2595 = vpop.permute.xlu0 %2594
        %2596 = vrot.lane.b32.xlu0 %v1713, 24
        %v2597 = vpop.permute.xlu0 %2596
        %v2598 = vsel %vm2525, %v2593, %v2595
        %v2599 = vsel %vm2525, %v2595, %v2597
        %2600 = vrot.lane.b32.xlu0 %v1711, 106
        %v2601 = vpop.permute.xlu0 %2600
        %2602 = vrot.lane.b32.xlu0 %v1712, 106
        %v2603 = vpop.permute.xlu0 %2602
        %2604 = vrot.lane.b32.xlu0 %v1713, 106
        %v2605 = vpop.permute.xlu0 %2604
        %2606 = vrot.lane.b32.xlu0 0.0, 106
        %v2607 = vpop.permute.xlu0 %2606
        %vm2608 = vcmask 867328
        %v2609 = vsel %vm2608, %v2601, %v2603
        %v2610 = vsel %vm2608, %v2603, %v2605
        %v2611 = vsel %vm2608, %v2605, %v2607
        %2612 = vrot.lane.b32.xlu0 %v1711, 105
        %v2613 = vpop.permute.xlu0 %2612
        %2614 = vrot.lane.b32.xlu0 %v1712, 105
        %v2615 = vpop.permute.xlu0 %2614
        %2616 = vrot.lane.b32.xlu0 %v1713, 105
        %v2617 = vpop.permute.xlu0 %2616
        %2618 = vrot.lane.b32.xlu0 0.0, 105
        %v2619 = vpop.permute.xlu0 %2618
        %vm2620 = vcmask 859136
        %v2621 = vsel %vm2620, %v2613, %v2615
        %v2622 = vsel %vm2620, %v2615, %v2617
        %v2623 = vsel %vm2620, %v2617, %v2619
        %2624 = vrot.lane.b32.xlu0 %v1711, 104
        %v2625 = vpop.permute.xlu0 %2624
        %2626 = vrot.lane.b32.xlu0 %v1712, 104
        %v2627 = vpop.permute.xlu0 %2626
        %2628 = vrot.lane.b32.xlu0 %v1713, 104
        %v2629 = vpop.permute.xlu0 %2628
        %v2630 = vsel %vm883, %v2625, %v2627
        %v2631 = vsel %vm883, %v2627, %v2629
        %v2632 = vsel %vm883, %v2629, %v876
        %2633 = vrot.lane.b32.xlu0 0.0, 26
        %v2634 = vpop.permute.xlu0 %2633
        %2635 = vrot.lane.b32.xlu0 %v797, 26
        %v2636 = vpop.permute.xlu0 %2635
        %2637 = vrot.lane.b32.xlu0 %v798, 26
        %v2638 = vpop.permute.xlu0 %2637
        %2639 = vrot.lane.b32.xlu0 %v799, 26
        %v2640 = vpop.permute.xlu0 %2639
        %vm2641 = vcmask 211968
        %v2642 = vsel %vm2641, %v2634, %v2636
        %v2643 = vsel %vm2641, %v2636, %v2638
        %v2644 = vsel %vm2641, %v2638, %v2640
        %2645 = vrot.lane.b32.xlu0 %v797, 25
        %v2646 = vpop.permute.xlu0 %2645
        %2647 = vrot.lane.b32.xlu0 %v798, 25
        %v2648 = vpop.permute.xlu0 %2647
        %2649 = vrot.lane.b32.xlu0 %v799, 25
        %v2650 = vpop.permute.xlu0 %2649
        %v2651 = vsel %vm2515, %v2508, %v2646
        %v2652 = vsel %vm2515, %v2646, %v2648
        %v2653 = vsel %vm2515, %v2648, %v2650
        %2654 = vrot.lane.b32.xlu0 0.0, 24
        %v2655 = vpop.permute.xlu0 %2654
        %2656 = vrot.lane.b32.xlu0 %v797, 24
        %v2657 = vpop.permute.xlu0 %2656
        %2658 = vrot.lane.b32.xlu0 %v798, 24
        %v2659 = vpop.permute.xlu0 %2658
        %2660 = vrot.lane.b32.xlu0 %v799, 24
        %v2661 = vpop.permute.xlu0 %2660
        %v2662 = vsel %vm2525, %v2655, %v2657
        %v2663 = vsel %vm2525, %v2657, %v2659
        %v2664 = vsel %vm2525, %v2659, %v2661
        %2665 = vrot.lane.b32.xlu0 0.0, 2
        %v2666 = vpop.permute.xlu0 %2665
        %2667 = vrot.lane.b32.xlu0 %v797, 2
        %v2668 = vpop.permute.xlu0 %2667
        %2669 = vrot.lane.b32.xlu0 %v798, 2
        %v2670 = vpop.permute.xlu0 %2669
        %2671 = vrot.lane.b32.xlu0 %v799, 2
        %v2672 = vpop.permute.xlu0 %2671
        %vm2673 = vcmask 15360
        %v2674 = vsel %vm2673, %v2666, %v2668
        %v2675 = vsel %vm2673, %v2668, %v2670
        %v2676 = vsel %vm2673, %v2670, %v2672
        %2677 = vrot.lane.b32.xlu0 %v797, 1
        %v2678 = vpop.permute.xlu0 %2677
        %2679 = vrot.lane.b32.xlu0 %v798, 1
        %v2680 = vpop.permute.xlu0 %2679
        %2681 = vrot.lane.b32.xlu0 %v799, 1
        %v2682 = vpop.permute.xlu0 %2681
        %v2683 = vsel %vm2548, %v2678, %v2680
        %v2684 = vsel %vm2548, %v2680, %v2682
        %2685 = vrot.lane.b32.xlu0 %v797, 106
        %v2686 = vpop.permute.xlu0 %2685
        %2687 = vrot.lane.b32.xlu0 %v798, 106
        %v2688 = vpop.permute.xlu0 %2687
        %2689 = vrot.lane.b32.xlu0 %v799, 106
        %v2690 = vpop.permute.xlu0 %2689
        %v2691 = vsel %vm2608, %v2686, %v2688
        %v2692 = vsel %vm2608, %v2688, %v2690
        %v2693 = vsel %vm2608, %v2690, %v2607
        %2694 = vrot.lane.b32.xlu0 %v797, 105
        %v2695 = vpop.permute.xlu0 %2694
        %2696 = vrot.lane.b32.xlu0 %v798, 105
        %v2697 = vpop.permute.xlu0 %2696
        %2698 = vrot.lane.b32.xlu0 %v799, 105
        %v2699 = vpop.permute.xlu0 %2698
        %v2700 = vsel %vm2620, %v2695, %v2697
        %v2701 = vsel %vm2620, %v2697, %v2699
        %v2702 = vsel %vm2620, %v2699, %v2619
        %v2703 = vsel %vm883, %v1002, %v876
        %2704 = vrot.lane.b32.xlu0 %v2055, 79
        %v2705 = vpop.permute.xlu0 %2704
        %2706 = vrot.lane.b32.xlu0 %v2056, 79
        %v2707 = vpop.permute.xlu0 %2706
        %2708 = vrot.lane.b32.xlu0 %v2470, 79
        %v2709 = vpop.permute.xlu0 %2708
        %2710 = vrot.lane.b32.xlu0 %v2480, 79
        %v2711 = vpop.permute.xlu0 %2710
        %2712 = vrot.lane.b32.xlu0 %v2481, 79
        %v2713 = vpop.permute.xlu0 %2712
        %2714 = vrot.lane.b32.xlu0 %v2482, 79
        %v2715 = vpop.permute.xlu0 %2714
        %2716 = vrot.lane.b32.xlu0 %v2478, 79
        %v2717 = vpop.permute.xlu0 %2716
        %2718 = vrot.lane.b32.xlu0 %v2492, 79
        %v2719 = vpop.permute.xlu0 %2718
        %2720 = vrot.lane.b32.xlu0 %v2493, 79
        %v2721 = vpop.permute.xlu0 %2720
        %2722 = vrot.lane.b32.xlu0 %v2494, 79
        %v2723 = vpop.permute.xlu0 %2722
        %2724 = vrot.lane.b32.xlu0 %v2490, 79
        %v2725 = vpop.permute.xlu0 %2724
        %2726 = vrot.lane.b32.xlu0 %v2504, 79
        %v2727 = vpop.permute.xlu0 %2726
        %2728 = vrot.lane.b32.xlu0 %v2505, 79
        %v2729 = vpop.permute.xlu0 %2728
        %2730 = vrot.lane.b32.xlu0 %v2506, 79
        %v2731 = vpop.permute.xlu0 %2730
        %2732 = vrot.lane.b32.xlu0 %v2502, 79
        %v2733 = vpop.permute.xlu0 %2732
        %2734 = vrot.lane.b32.xlu0 %v2516, 79
        %v2735 = vpop.permute.xlu0 %2734
        %2736 = vrot.lane.b32.xlu0 %v2517, 79
        %v2737 = vpop.permute.xlu0 %2736
        %2738 = vrot.lane.b32.xlu0 %v2518, 79
        %v2739 = vpop.permute.xlu0 %2738
        %2740 = vrot.lane.b32.xlu0 %v2514, 79
        %v2741 = vpop.permute.xlu0 %2740
        %2742 = vrot.lane.b32.xlu0 %v2520, 79
        %v2743 = vpop.permute.xlu0 %2742
        %2744 = vrot.lane.b32.xlu0 %v2526, 79
        %v2745 = vpop.permute.xlu0 %2744
        %2746 = vrot.lane.b32.xlu0 %v2527, 79
        %v2747 = vpop.permute.xlu0 %2746
        %2748 = vrot.lane.b32.xlu0 %v2524, 79
        %v2749 = vpop.permute.xlu0 %2748
        %2750 = vrot.lane.b32.xlu0 %v2529, 79
        %v2751 = vpop.permute.xlu0 %2750
        %2752 = vrot.lane.b32.xlu0 %v2537, 79
        %v2753 = vpop.permute.xlu0 %2752
        %2754 = vrot.lane.b32.xlu0 %v2538, 79
        %v2755 = vpop.permute.xlu0 %2754
        %2756 = vrot.lane.b32.xlu0 %v2539, 79
        %v2757 = vpop.permute.xlu0 %2756
        %2758 = vrot.lane.b32.xlu0 %v2541, 79
        %v2759 = vpop.permute.xlu0 %2758
        %2760 = vrot.lane.b32.xlu0 %v2549, 79
        %v2761 = vpop.permute.xlu0 %2760
        %2762 = vrot.lane.b32.xlu0 %v2550, 79
        %v2763 = vpop.permute.xlu0 %2762
        %2764 = vrot.lane.b32.xlu0 %v2551, 79
        %v2765 = vpop.permute.xlu0 %2764
        %2766 = vrot.lane.b32.xlu0 %v1406, 79
        %v2767 = vpop.permute.xlu0 %2766
        %2768 = vrot.lane.b32.xlu0 %v1407, 79
        %v2769 = vpop.permute.xlu0 %2768
        %2770 = vrot.lane.b32.xlu0 %v2552, 79
        %v2771 = vpop.permute.xlu0 %2770
        %2772 = vrot.lane.b32.xlu0 %v2562, 79
        %v2773 = vpop.permute.xlu0 %2772
        %2774 = vrot.lane.b32.xlu0 %v2563, 79
        %v2775 = vpop.permute.xlu0 %2774
        %2776 = vrot.lane.b32.xlu0 %v2564, 79
        %v2777 = vpop.permute.xlu0 %2776
        %2778 = vrot.lane.b32.xlu0 %v2561, 79
        %v2779 = vpop.permute.xlu0 %2778
        %2780 = vrot.lane.b32.xlu0 %v2571, 79
        %v2781 = vpop.permute.xlu0 %2780
        %2782 = vrot.lane.b32.xlu0 %v2572, 79
        %v2783 = vpop.permute.xlu0 %2782
        %2784 = vrot.lane.b32.xlu0 %v2573, 79
        %v2785 = vpop.permute.xlu0 %2784
        %2786 = vrot.lane.b32.xlu0 %v2570, 79
        %v2787 = vpop.permute.xlu0 %2786
        %2788 = vrot.lane.b32.xlu0 %v2580, 79
        %v2789 = vpop.permute.xlu0 %2788
        %2790 = vrot.lane.b32.xlu0 %v2581, 79
        %v2791 = vpop.permute.xlu0 %2790
        %2792 = vrot.lane.b32.xlu0 %v2582, 79
        %v2793 = vpop.permute.xlu0 %2792
        %2794 = vrot.lane.b32.xlu0 %v2579, 79
        %v2795 = vpop.permute.xlu0 %2794
        %2796 = vrot.lane.b32.xlu0 %v2589, 79
        %v2797 = vpop.permute.xlu0 %2796
        %2798 = vrot.lane.b32.xlu0 %v2590, 79
        %v2799 = vpop.permute.xlu0 %2798
        %2800 = vrot.lane.b32.xlu0 %v2591, 79
        %v2801 = vpop.permute.xlu0 %2800
        %2802 = vrot.lane.b32.xlu0 %v2588, 79
        %v2803 = vpop.permute.xlu0 %2802
        %2804 = vrot.lane.b32.xlu0 %v2593, 79
        %v2805 = vpop.permute.xlu0 %2804
        %2806 = vrot.lane.b32.xlu0 %v2598, 79
        %v2807 = vpop.permute.xlu0 %2806
        %2808 = vrot.lane.b32.xlu0 %v2599, 79
        %v2809 = vpop.permute.xlu0 %2808
        %2810 = vrot.lane.b32.xlu0 %v2597, 79
        %v2811 = vpop.permute.xlu0 %2810
        %v2812 = vsel %vm944, %v2705, %v2707
        %v2813 = vsel %vm944, %v2707, %v2709
        %v2814 = vsel %vm944, %v2709, %v1062
        %v2815 = vsel %vm944, %v2711, %v2713
        %v2816 = vsel %vm944, %v2713, %v2715
        %v2817 = vsel %vm944, %v2715, %v2717
        %v2818 = vsel %vm944, %v2719, %v2721
        %v2819 = vsel %vm944, %v2721, %v2723
        %v2820 = vsel %vm944, %v2723, %v2725
        %v2821 = vsel %vm944, %v2727, %v2729
        %v2822 = vsel %vm944, %v2729, %v2731
        %v2823 = vsel %vm944, %v2731, %v2733
        %v2824 = vsel %vm944, %v2735, %v2737
        %v2825 = vsel %vm944, %v2737, %v2739
        %v2826 = vsel %vm944, %v2739, %v2741
        %v2827 = vsel %vm944, %v2743, %v2745
        %v2828 = vsel %vm944, %v2745, %v2747
        %v2829 = vsel %vm944, %v2747, %v2749
        %v2830 = vsel %vm944, %v2751, %v2753
        %v2831 = vsel %vm944, %v2753, %v2755
        %v2832 = vsel %vm944, %v2755, %v2757
        %v2833 = vsel %vm944, %v2759, %v2761
        %v2834 = vsel %vm944, %v2761, %v2763
        %v2835 = vsel %vm944, %v2763, %v2765
        %v2836 = vsel %vm944, %v2767, %v2769
        %v2837 = vsel %vm944, %v2769, %v2771
        %v2838 = vsel %vm944, %v2771, %v1062
        %v2839 = vsel %vm944, %v2773, %v2775
        %v2840 = vsel %vm944, %v2775, %v2777
        %v2841 = vsel %vm944, %v2777, %v2779
        %v2842 = vsel %vm944, %v2781, %v2783
        %v2843 = vsel %vm944, %v2783, %v2785
        %v2844 = vsel %vm944, %v2785, %v2787
        %v2845 = vsel %vm944, %v2789, %v2791
        %v2846 = vsel %vm944, %v2791, %v2793
        %v2847 = vsel %vm944, %v2793, %v2795
        %v2848 = vsel %vm944, %v2797, %v2799
        %v2849 = vsel %vm944, %v2799, %v2801
        %v2850 = vsel %vm944, %v2801, %v2803
        %v2851 = vsel %vm944, %v2805, %v2807
        %v2852 = vsel %vm944, %v2807, %v2809
        %v2853 = vsel %vm944, %v2809, %v2811
        %2910 = vrot.lane.b32.xlu0 %v1711, 102
        %v2911 = vpop.permute.xlu0 %2910
        %2912 = vrot.lane.b32.xlu0 %v1712, 102
        %v2913 = vpop.permute.xlu0 %2912
        %2914 = vrot.lane.b32.xlu0 %v1713, 102
        %v2915 = vpop.permute.xlu0 %2914
        %2916 = vrot.lane.b32.xlu0 %v2609, 102
        %v2917 = vpop.permute.xlu0 %2916
        %2918 = vrot.lane.b32.xlu0 %v2610, 102
        %v2919 = vpop.permute.xlu0 %2918
        %2920 = vrot.lane.b32.xlu0 %v2611, 102
        %v2921 = vpop.permute.xlu0 %2920
        %2922 = vrot.lane.b32.xlu0 %v2607, 102
        %v2923 = vpop.permute.xlu0 %2922
        %2924 = vrot.lane.b32.xlu0 %v2621, 102
        %v2925 = vpop.permute.xlu0 %2924
        %2926 = vrot.lane.b32.xlu0 %v2622, 102
        %v2927 = vpop.permute.xlu0 %2926
        %2928 = vrot.lane.b32.xlu0 %v2623, 102
        %v2929 = vpop.permute.xlu0 %2928
        %2930 = vrot.lane.b32.xlu0 %v2619, 102
        %v2931 = vpop.permute.xlu0 %2930
        %2932 = vrot.lane.b32.xlu0 %v2630, 102
        %v2933 = vpop.permute.xlu0 %2932
        %2934 = vrot.lane.b32.xlu0 %v2631, 102
        %v2935 = vpop.permute.xlu0 %2934
        %2936 = vrot.lane.b32.xlu0 %v2632, 102
        %v2937 = vpop.permute.xlu0 %2936
        %2938 = vrot.lane.b32.xlu0 %v876, 102
        %v2939 = vpop.permute.xlu0 %2938
        %2940 = vrot.lane.b32.xlu0 %v2642, 102
        %v2941 = vpop.permute.xlu0 %2940
        %2942 = vrot.lane.b32.xlu0 %v2643, 102
        %v2943 = vpop.permute.xlu0 %2942
        %2944 = vrot.lane.b32.xlu0 %v2644, 102
        %v2945 = vpop.permute.xlu0 %2944
        %2946 = vrot.lane.b32.xlu0 %v2640, 102
        %v2947 = vpop.permute.xlu0 %2946
        %2948 = vrot.lane.b32.xlu0 %v2651, 102
        %v2949 = vpop.permute.xlu0 %2948
        %2950 = vrot.lane.b32.xlu0 %v2652, 102
        %v2951 = vpop.permute.xlu0 %2950
        %2952 = vrot.lane.b32.xlu0 %v2653, 102
        %v2953 = vpop.permute.xlu0 %2952
        %2954 = vrot.lane.b32.xlu0 %v2650, 102
        %v2955 = vpop.permute.xlu0 %2954
        %2956 = vrot.lane.b32.xlu0 %v2662, 102
        %v2957 = vpop.permute.xlu0 %2956
        %2958 = vrot.lane.b32.xlu0 %v2663, 102
        %v2959 = vpop.permute.xlu0 %2958
        %2960 = vrot.lane.b32.xlu0 %v2664, 102
        %v2961 = vpop.permute.xlu0 %2960
        %2962 = vrot.lane.b32.xlu0 %v2661, 102
        %v2963 = vpop.permute.xlu0 %2962
        %2964 = vrot.lane.b32.xlu0 %v2674, 102
        %v2965 = vpop.permute.xlu0 %2964
        %2966 = vrot.lane.b32.xlu0 %v2675, 102
        %v2967 = vpop.permute.xlu0 %2966
        %2968 = vrot.lane.b32.xlu0 %v2676, 102
        %v2969 = vpop.permute.xlu0 %2968
        %2970 = vrot.lane.b32.xlu0 %v2672, 102
        %v2971 = vpop.permute.xlu0 %2970
        %2972 = vrot.lane.b32.xlu0 %v2678, 102
        %v2973 = vpop.permute.xlu0 %2972
        %2974 = vrot.lane.b32.xlu0 %v2683, 102
        %v2975 = vpop.permute.xlu0 %2974
        %2976 = vrot.lane.b32.xlu0 %v2684, 102
        %v2977 = vpop.permute.xlu0 %2976
        %2978 = vrot.lane.b32.xlu0 %v2682, 102
        %v2979 = vpop.permute.xlu0 %2978
        %2980 = vrot.lane.b32.xlu0 %v2691, 102
        %v2981 = vpop.permute.xlu0 %2980
        %2982 = vrot.lane.b32.xlu0 %v2692, 102
        %v2983 = vpop.permute.xlu0 %2982
        %2984 = vrot.lane.b32.xlu0 %v2693, 102
        %v2985 = vpop.permute.xlu0 %2984
        %2986 = vrot.lane.b32.xlu0 %v2700, 102
        %v2987 = vpop.permute.xlu0 %2986
        %2988 = vrot.lane.b32.xlu0 %v2701, 102
        %v2989 = vpop.permute.xlu0 %2988
        %2990 = vrot.lane.b32.xlu0 %v2702, 102
        %v2991 = vpop.permute.xlu0 %2990
        %2992 = vrot.lane.b32.xlu0 %v1004, 102
        %v2993 = vpop.permute.xlu0 %2992
        %2994 = vrot.lane.b32.xlu0 %v1005, 102
        %v2995 = vpop.permute.xlu0 %2994
        %2996 = vrot.lane.b32.xlu0 %v2703, 102
        %v2997 = vpop.permute.xlu0 %2996
        %v2998 = vsel %vm912, %v2911, %v2913
        %v2999 = vsel %vm912, %v2913, %v2915
        %v3000 = vsel %vm912, %v2915, %v911
        %v3001 = vsel %vm912, %v2917, %v2919
        %v3002 = vsel %vm912, %v2919, %v2921
        %v3003 = vsel %vm912, %v2921, %v2923
        %v3004 = vsel %vm912, %v2925, %v2927
        %v3005 = vsel %vm912, %v2927, %v2929
        %v3006 = vsel %vm912, %v2929, %v2931
        %v3007 = vsel %vm912, %v2933, %v2935
        %v3008 = vsel %vm912, %v2935, %v2937
        %v3009 = vsel %vm912, %v2937, %v2939
        %v3010 = vsel %vm912, %v2941, %v2943
        %v3011 = vsel %vm912, %v2943, %v2945
        %v3012 = vsel %vm912, %v2945, %v2947
        %v3013 = vsel %vm912, %v2949, %v2951
        %v3014 = vsel %vm912, %v2951, %v2953
        %v3015 = vsel %vm912, %v2953, %v2955
        %v3016 = vsel %vm912, %v2957, %v2959
        %v3017 = vsel %vm912, %v2959, %v2961
        %v3018 = vsel %vm912, %v2961, %v2963
        %v3019 = vsel %vm912, %v2965, %v2967
        %v3020 = vsel %vm912, %v2967, %v2969
        %v3021 = vsel %vm912, %v2969, %v2971
        %v3022 = vsel %vm912, %v2973, %v2975
        %v3023 = vsel %vm912, %v2975, %v2977
        %v3024 = vsel %vm912, %v2977, %v2979
        %v3025 = vsel %vm912, %v2981, %v2983
        %v3026 = vsel %vm912, %v2983, %v2985
        %v3027 = vsel %vm912, %v2985, %v2923
        %v3028 = vsel %vm912, %v2987, %v2989
        %v3029 = vsel %vm912, %v2989, %v2991
        %v3030 = vsel %vm912, %v2991, %v2931
        %v3031 = vsel %vm912, %v2993, %v2995
        %v3032 = vsel %vm912, %v2995, %v2997
        %v3033 = vsel %vm912, %v2997, %v2939
        %v3082 = vpack.c.bf16 %v2373, 0.0
        %v3083 = vpack.c.bf16 %v2374, %v2361
        %v3084 = vpack.c.bf16 %v2375, %v2362
        %v3085 = vpack.c.bf16 %v2372, %v2363
        %v3086 = vpack.c.bf16 %v2399, %v2386
        %v3087 = vpack.c.bf16 %v2400, %v2387
        %v3088 = vpack.c.bf16 %v2401, %v2388
        %v3089 = vpack.c.bf16 %v2398, %v2385
        %v3090 = vpack.c.bf16 %v2419, %v2407
        %v3091 = vpack.c.bf16 %v2424, %v2412
        %v3092 = vpack.c.bf16 %v2425, %v2413
        %v3093 = vpack.c.bf16 %v2426, %v2411
        %v3094 = vpack.c.bf16 %v2445, %v2432
        %v3095 = vpack.c.bf16 %v2450, %v2437
        %v3096 = vpack.c.bf16 %v2451, %v2438
        %v3097 = vpack.c.bf16 %v2452, %v2439
        %v3098 = vpack.c.bf16 0.0, %v2458
        %v3099 = vpack.c.bf16 %v2042, %v2463
        %v3100 = vpack.c.bf16 %v2043, %v2464
        %v3101 = vpack.c.bf16 %v2044, %v2465
        %v3102 = vpack.c.bf16 %v2067, %v2054
        %v3103 = vpack.c.bf16 %v2068, %v2055
        %v3104 = vpack.c.bf16 %v2069, %v2056
        %v3105 = vpack.c.bf16 %v2066, %v2053
        %v3106 = vpack.c.bf16 %v2088, %v2080
        %v3107 = vpack.c.bf16 %v2093, %v2081
        %v3108 = vpack.c.bf16 %v2094, %v2082
        %v3109 = vpack.c.bf16 %v2092, %v2079
        %v3110 = vpack.c.bf16 %v2113, %v2100
        %v3111 = vpack.c.bf16 %v2118, %v2105
        %v3112 = vpack.c.bf16 %v2119, %v2106
        %v3113 = vpack.c.bf16 %v2120, %v2107
        %v3114 = vpack.c.bf16 %v2705, %v2126
        %v3115 = vpack.c.bf16 %v2812, %v2131
        %v3116 = vpack.c.bf16 %v2813, %v2132
        %v3117 = vpack.c.bf16 %v2814, %v2133
        %v3118 = vpack.c.bf16 %v2719, %v2711
        %v3119 = vpack.c.bf16 %v2818, %v2815
        %v3120 = vpack.c.bf16 %v2819, %v2816
        %v3121 = vpack.c.bf16 %v2820, %v2817
        %v3122 = vpack.c.bf16 %v2735, %v2727
        %v3123 = vpack.c.bf16 %v2824, %v2821
        %v3124 = vpack.c.bf16 %v2825, %v2822
        %v3125 = vpack.c.bf16 %v2826, %v2823
        %v3126 = vpack.c.bf16 %v2751, %v2743
        %v3127 = vpack.c.bf16 %v2830, %v2827
        %v3128 = vpack.c.bf16 %v2831, %v2828
        %v3129 = vpack.c.bf16 %v2832, %v2829
        %v3130 = vpack.c.bf16 %v1477, %v2759
        %v3131 = vpack.c.bf16 %v1482, %v2833
        %v3132 = vpack.c.bf16 %v1483, %v2834
        %v3133 = vpack.c.bf16 %v1484, %v2835
        %v3134 = vpack.c.bf16 %v2773, %v2767
        %v3135 = vpack.c.bf16 %v2839, %v2836
        %v3136 = vpack.c.bf16 %v2840, %v2837
        %v3137 = vpack.c.bf16 %v2841, %v2838
        %v3138 = vpack.c.bf16 %v2789, %v2781
        %v3139 = vpack.c.bf16 %v2845, %v2842
        %v3140 = vpack.c.bf16 %v2846, %v2843
        %v3141 = vpack.c.bf16 %v2847, %v2844
        %v3142 = vpack.c.bf16 %v2805, %v2797
        %v3143 = vpack.c.bf16 %v2851, %v2848
        %v3144 = vpack.c.bf16 %v2852, %v2849
        %v3145 = vpack.c.bf16 %v2853, %v2850
        %v3146 = vpack.c.bf16 %v2917, %v2911
        %v3147 = vpack.c.bf16 %v3001, %v2998
        %v3148 = vpack.c.bf16 %v3002, %v2999
        %v3149 = vpack.c.bf16 %v3003, %v3000
        %v3150 = vpack.c.bf16 %v2933, %v2925
        %v3151 = vpack.c.bf16 %v3007, %v3004
        %v3152 = vpack.c.bf16 %v3008, %v3005
        %v3153 = vpack.c.bf16 %v3009, %v3006
        %v3154 = vpack.c.bf16 %v2949, %v2941
        %v3155 = vpack.c.bf16 %v3013, %v3010
        %v3156 = vpack.c.bf16 %v3014, %v3011
        %v3157 = vpack.c.bf16 %v3015, %v3012
        %v3158 = vpack.c.bf16 %v2965, %v2957
        %v3159 = vpack.c.bf16 %v3019, %v3016
        %v3160 = vpack.c.bf16 %v3020, %v3017
        %v3161 = vpack.c.bf16 %v3021, %v3018
        %v3162 = vpack.c.bf16 %v1023, %v2973
        %v3163 = vpack.c.bf16 %v1028, %v3022
        %v3164 = vpack.c.bf16 %v1029, %v3023
        %v3165 = vpack.c.bf16 %v1030, %v3024
        %v3166 = vpack.c.bf16 %v2987, %v2981
        %v3167 = vpack.c.bf16 %v3028, %v3025
        %v3168 = vpack.c.bf16 %v3029, %v3026
        %v3169 = vpack.c.bf16 %v3030, %v3027
        %v3170 = vpack.c.bf16 %v2993, %v2993
        %v3171 = vpack.c.bf16 %v3031, %v3031
        %v3172 = vpack.c.bf16 %v3032, %v3032
        %v3173 = vpack.c.bf16 %v3033, %v3033
        %v3174 = vld [vmem:[%s16] sm:$0xff]
        %v3175 = vld [vmem:[%s16 + $0x8] sm:$0xf]
        %v3176 = vld [vmem:[%s17] sm:$0xff]
        %3178 = vset.pattern.permute.xlu0 0
        %3179 = vperm.xlu0 %3178, %v3176
        %v3180 = vpop.permute.xlu0 %3179
        %v3184 = vunpack.c.l.b16 %v3174
        %v3185 = vunpack.c.h.b16 %v3174
        %v3186 = vunpack.c.l.b16 %v3175
        %v3187 = vpack.c.b16 %v3184, %v3184
        %v3188 = vpack.c.b16 %v3185, %v3185
        %v3189 = vpack.c.b16 %v3186, %v3186
        %3284 = vrot.lane.b32.xlu0 %v3082, 25
        %v3285 = vpop.permute.xlu0 %3284
        %3286 = vrot.lane.b32.xlu0 %v3083, 25
        %v3287 = vpop.permute.xlu0 %3286
        %3288 = vrot.lane.b32.xlu0 %v3084, 25
        %v3289 = vpop.permute.xlu0 %3288
        %3290 = vrot.lane.b32.xlu0 %v3085, 25
        %v3291 = vpop.permute.xlu0 %3290
        %3292 = vrot.lane.b32.xlu0 %v3086, 25
        %v3293 = vpop.permute.xlu0 %3292
        %3294 = vrot.lane.b32.xlu0 %v3087, 25
        %v3295 = vpop.permute.xlu0 %3294
        %3296 = vrot.lane.b32.xlu0 %v3088, 25
        %v3297 = vpop.permute.xlu0 %3296
        %3298 = vrot.lane.b32.xlu0 %v3089, 25
        %v3299 = vpop.permute.xlu0 %3298
        %3300 = vrot.lane.b32.xlu0 %v3090, 25
        %v3301 = vpop.permute.xlu0 %3300
        %3302 = vrot.lane.b32.xlu0 %v3091, 25
        %v3303 = vpop.permute.xlu0 %3302
        %3304 = vrot.lane.b32.xlu0 %v3092, 25
        %v3305 = vpop.permute.xlu0 %3304
        %3306 = vrot.lane.b32.xlu0 %v3093, 25
        %v3307 = vpop.permute.xlu0 %3306
        %3308 = vrot.lane.b32.xlu0 %v3094, 25
        %v3309 = vpop.permute.xlu0 %3308
        %3310 = vrot.lane.b32.xlu0 %v3095, 25
        %v3311 = vpop.permute.xlu0 %3310
        %3312 = vrot.lane.b32.xlu0 %v3096, 25
        %v3313 = vpop.permute.xlu0 %3312
        %3314 = vrot.lane.b32.xlu0 %v3097, 25
        %v3315 = vpop.permute.xlu0 %3314
        %3316 = vrot.lane.b32.xlu0 %v3098, 25
        %v3317 = vpop.permute.xlu0 %3316
        %3318 = vrot.lane.b32.xlu0 %v3099, 25
        %v3319 = vpop.permute.xlu0 %3318
        %3320 = vrot.lane.b32.xlu0 %v3100, 25
        %v3321 = vpop.permute.xlu0 %3320
        %3322 = vrot.lane.b32.xlu0 %v3101, 25
        %v3323 = vpop.permute.xlu0 %3322
        %3324 = vrot.lane.b32.xlu0 %v3102, 25
        %v3325 = vpop.permute.xlu0 %3324
        %3326 = vrot.lane.b32.xlu0 %v3103, 25
        %v3327 = vpop.permute.xlu0 %3326
        %3328 = vrot.lane.b32.xlu0 %v3104, 25
        %v3329 = vpop.permute.xlu0 %3328
        %3330 = vrot.lane.b32.xlu0 %v3105, 25
        %v3331 = vpop.permute.xlu0 %3330
        %3332 = vrot.lane.b32.xlu0 %v3106, 25
        %v3333 = vpop.permute.xlu0 %3332
        %3334 = vrot.lane.b32.xlu0 %v3107, 25
        %v3335 = vpop.permute.xlu0 %3334
        %3336 = vrot.lane.b32.xlu0 %v3108, 25
        %v3337 = vpop.permute.xlu0 %3336
        %3338 = vrot.lane.b32.xlu0 %v3109, 25
        %v3339 = vpop.permute.xlu0 %3338
        %3340 = vrot.lane.b32.xlu0 %v3110, 25
        %v3341 = vpop.permute.xlu0 %3340
        %3342 = vrot.lane.b32.xlu0 %v3111, 25
        %v3343 = vpop.permute.xlu0 %3342
        %3344 = vrot.lane.b32.xlu0 %v3112, 25
        %v3345 = vpop.permute.xlu0 %3344
        %3346 = vrot.lane.b32.xlu0 %v3113, 25
        %v3347 = vpop.permute.xlu0 %3346
        %3348 = vrot.lane.b32.xlu0 %v3114, 25
        %v3349 = vpop.permute.xlu0 %3348
        %3350 = vrot.lane.b32.xlu0 %v3115, 25
        %v3351 = vpop.permute.xlu0 %3350
        %3352 = vrot.lane.b32.xlu0 %v3116, 25
        %v3353 = vpop.permute.xlu0 %3352
        %3354 = vrot.lane.b32.xlu0 %v3117, 25
        %v3355 = vpop.permute.xlu0 %3354
        %3356 = vrot.lane.b32.xlu0 %v3118, 25
        %v3357 = vpop.permute.xlu0 %3356
        %3358 = vrot.lane.b32.xlu0 %v3119, 25
        %v3359 = vpop.permute.xlu0 %3358
        %3360 = vrot.lane.b32.xlu0 %v3120, 25
        %v3361 = vpop.permute.xlu0 %3360
        %3362 = vrot.lane.b32.xlu0 %v3121, 25
        %v3363 = vpop.permute.xlu0 %3362
        %3364 = vrot.lane.b32.xlu0 %v3122, 25
        %v3365 = vpop.permute.xlu0 %3364
        %3366 = vrot.lane.b32.xlu0 %v3123, 25
        %v3367 = vpop.permute.xlu0 %3366
        %3368 = vrot.lane.b32.xlu0 %v3124, 25
        %v3369 = vpop.permute.xlu0 %3368
        %3370 = vrot.lane.b32.xlu0 %v3125, 25
        %v3371 = vpop.permute.xlu0 %3370
        %3372 = vrot.lane.b32.xlu0 %v3126, 25
        %v3373 = vpop.permute.xlu0 %3372
        %3374 = vrot.lane.b32.xlu0 %v3127, 25
        %v3375 = vpop.permute.xlu0 %3374
        %3376 = vrot.lane.b32.xlu0 %v3128, 25
        %v3377 = vpop.permute.xlu0 %3376
        %3378 = vrot.lane.b32.xlu0 %v3129, 25
        %v3379 = vpop.permute.xlu0 %3378
        %3380 = vrot.lane.b32.xlu0 %v3130, 25
        %v3381 = vpop.permute.xlu0 %3380
        %3382 = vrot.lane.b32.xlu0 %v3131, 25
        %v3383 = vpop.permute.xlu0 %3382
        %3384 = vrot.lane.b32.xlu0 %v3132, 25
        %v3385 = vpop.permute.xlu0 %3384
        %3386 = vrot.lane.b32.xlu0 %v3133, 25
        %v3387 = vpop.permute.xlu0 %3386
        %3388 = vrot.lane.b32.xlu0 %v3134, 25
        %v3389 = vpop.permute.xlu0 %3388
        %3390 = vrot.lane.b32.xlu0 %v3135, 25
        %v3391 = vpop.permute.xlu0 %3390
        %3392 = vrot.lane.b32.xlu0 %v3136, 25
        %v3393 = vpop.permute.xlu0 %3392
        %3394 = vrot.lane.b32.xlu0 %v3137, 25
        %v3395 = vpop.permute.xlu0 %3394
        %3396 = vrot.lane.b32.xlu0 %v3138, 25
        %v3397 = vpop.permute.xlu0 %3396
        %3398 = vrot.lane.b32.xlu0 %v3139, 25
        %v3399 = vpop.permute.xlu0 %3398
        %3400 = vrot.lane.b32.xlu0 %v3140, 25
        %v3401 = vpop.permute.xlu0 %3400
        %3402 = vrot.lane.b32.xlu0 %v3141, 25
        %v3403 = vpop.permute.xlu0 %3402
        %3404 = vrot.lane.b32.xlu0 %v3142, 25
        %v3405 = vpop.permute.xlu0 %3404
        %3406 = vrot.lane.b32.xlu0 %v3143, 25
        %v3407 = vpop.permute.xlu0 %3406
        %3408 = vrot.lane.b32.xlu0 %v3144, 25
        %v3409 = vpop.permute.xlu0 %3408
        %3410 = vrot.lane.b32.xlu0 %v3145, 25
        %v3411 = vpop.permute.xlu0 %3410
        %3412 = vrot.lane.b32.xlu0 %v3146, 25
        %v3413 = vpop.permute.xlu0 %3412
        %3414 = vrot.lane.b32.xlu0 %v3147, 25
        %v3415 = vpop.permute.xlu0 %3414
        %3416 = vrot.lane.b32.xlu0 %v3148, 25
        %v3417 = vpop.permute.xlu0 %3416
        %3418 = vrot.lane.b32.xlu0 %v3149, 25
        %v3419 = vpop.permute.xlu0 %3418
        %3420 = vrot.lane.b32.xlu0 %v3150, 25
        %v3421 = vpop.permute.xlu0 %3420
        %3422 = vrot.lane.b32.xlu0 %v3151, 25
        %v3423 = vpop.permute.xlu0 %3422
        %3424 = vrot.lane.b32.xlu0 %v3152, 25
        %v3425 = vpop.permute.xlu0 %3424
        %3426 = vrot.lane.b32.xlu0 %v3153, 25
        %v3427 = vpop.permute.xlu0 %3426
        %3428 = vrot.lane.b32.xlu0 %v3154, 25
        %v3429 = vpop.permute.xlu0 %3428
        %3430 = vrot.lane.b32.xlu0 %v3155, 25
        %v3431 = vpop.permute.xlu0 %3430
        %3432 = vrot.lane.b32.xlu0 %v3156, 25
        %v3433 = vpop.permute.xlu0 %3432
        %3434 = vrot.lane.b32.xlu0 %v3157, 25
        %v3435 = vpop.permute.xlu0 %3434
        %3436 = vrot.lane.b32.xlu0 %v3158, 25
        %v3437 = vpop.permute.xlu0 %3436
        %3438 = vrot.lane.b32.xlu0 %v3159, 25
        %v3439 = vpop.permute.xlu0 %3438
        %3440 = vrot.lane.b32.xlu0 %v3160, 25
        %v3441 = vpop.permute.xlu0 %3440
        %3442 = vrot.lane.b32.xlu0 %v3161, 25
        %v3443 = vpop.permute.xlu0 %3442
        %3444 = vrot.lane.b32.xlu0 %v3162, 25
        %v3445 = vpop.permute.xlu0 %3444
        %3446 = vrot.lane.b32.xlu0 %v3163, 25
        %v3447 = vpop.permute.xlu0 %3446
        %3448 = vrot.lane.b32.xlu0 %v3164, 25
        %v3449 = vpop.permute.xlu0 %3448
        %3450 = vrot.lane.b32.xlu0 %v3165, 25
        %v3451 = vpop.permute.xlu0 %3450
        %3452 = vrot.lane.b32.xlu0 %v3166, 25
        %v3453 = vpop.permute.xlu0 %3452
        %3454 = vrot.lane.b32.xlu0 %v3167, 25
        %v3455 = vpop.permute.xlu0 %3454
        %3456 = vrot.lane.b32.xlu0 %v3168, 25
        %v3457 = vpop.permute.xlu0 %3456
        %3458 = vrot.lane.b32.xlu0 %v3169, 25
        %v3459 = vpop.permute.xlu0 %3458
        %3460 = vrot.lane.b32.xlu0 %v3170, 25
        %v3461 = vpop.permute.xlu0 %3460
        %3462 = vrot.lane.b32.xlu0 %v3171, 25
        %v3463 = vpop.permute.xlu0 %3462
        %3464 = vrot.lane.b32.xlu0 %v3172, 25
        %v3465 = vpop.permute.xlu0 %3464
        %3466 = vrot.lane.b32.xlu0 %v3173, 25
        %v3467 = vpop.permute.xlu0 %3466
        %v3468 = vsel %vm1234, %v3285, %v3287
        %v3469 = vsel %vm1234, %v3287, %v3289
        %v3470 = vsel %vm1234, %v3289, %v3291
        %v3471 = vsel %vm1234, %v3293, %v3295
        %v3472 = vsel %vm1234, %v3295, %v3297
        %v3473 = vsel %vm1234, %v3297, %v3299
        %v3474 = vsel %vm1234, %v3301, %v3303
        %v3475 = vsel %vm1234, %v3303, %v3305
        %v3476 = vsel %vm1234, %v3305, %v3307
        %v3477 = vsel %vm1234, %v3309, %v3311
        %v3478 = vsel %vm1234, %v3311, %v3313
        %v3479 = vsel %vm1234, %v3313, %v3315
        %v3480 = vsel %vm1234, %v3317, %v3319
        %v3481 = vsel %vm1234, %v3319, %v3321
        %v3482 = vsel %vm1234, %v3321, %v3323
        %v3483 = vsel %vm1234, %v3325, %v3327
        %v3484 = vsel %vm1234, %v3327, %v3329
        %v3485 = vsel %vm1234, %v3329, %v3331
        %v3486 = vsel %vm1234, %v3333, %v3335
        %v3487 = vsel %vm1234, %v3335, %v3337
        %v3488 = vsel %vm1234, %v3337, %v3339
        %v3489 = vsel %vm1234, %v3341, %v3343
        %v3490 = vsel %vm1234, %v3343, %v3345
        %v3491 = vsel %vm1234, %v3345, %v3347
        %v3492 = vsel %vm1234, %v3349, %v3351
        %v3493 = vsel %vm1234, %v3351, %v3353
        %v3494 = vsel %vm1234, %v3353, %v3355
        %v3495 = vsel %vm1234, %v3357, %v3359
        %v3496 = vsel %vm1234, %v3359, %v3361
        %v3497 = vsel %vm1234, %v3361, %v3363
        %v3498 = vsel %vm1234, %v3365, %v3367
        %v3499 = vsel %vm1234, %v3367, %v3369
        %v3500 = vsel %vm1234, %v3369, %v3371
        %v3501 = vsel %vm1234, %v3373, %v3375
        %v3502 = vsel %vm1234, %v3375, %v3377
        %v3503 = vsel %vm1234, %v3377, %v3379
        %v3504 = vsel %vm1234, %v3381, %v3383
        %v3505 = vsel %vm1234, %v3383, %v3385
        %v3506 = vsel %vm1234, %v3385, %v3387
        %v3507 = vsel %vm1234, %v3389, %v3391
        %v3508 = vsel %vm1234, %v3391, %v3393
        %v3509 = vsel %vm1234, %v3393, %v3395
        %v3510 = vsel %vm1234, %v3397, %v3399
        %v3511 = vsel %vm1234, %v3399, %v3401
        %v3512 = vsel %vm1234, %v3401, %v3403
        %v3513 = vsel %vm1234, %v3405, %v3407
        %v3514 = vsel %vm1234, %v3407, %v3409
        %v3515 = vsel %vm1234, %v3409, %v3411
        %v3516 = vsel %vm1234, %v3413, %v3415
        %v3517 = vsel %vm1234, %v3415, %v3417
        %v3518 = vsel %vm1234, %v3417, %v3419
        %v3519 = vsel %vm1234, %v3421, %v3423
        %v3520 = vsel %vm1234, %v3423, %v3425
        %v3521 = vsel %vm1234, %v3425, %v3427
        %v3522 = vsel %vm1234, %v3429, %v3431
        %v3523 = vsel %vm1234, %v3431, %v3433
        %v3524 = vsel %vm1234, %v3433, %v3435
        %v3525 = vsel %vm1234, %v3437, %v3439
        %v3526 = vsel %vm1234, %v3439, %v3441
        %v3527 = vsel %vm1234, %v3441, %v3443
        %v3528 = vsel %vm1234, %v3445, %v3447
        %v3529 = vsel %vm1234, %v3447, %v3449
        %v3530 = vsel %vm1234, %v3449, %v3451
        %v3531 = vsel %vm1234, %v3453, %v3455
        %v3532 = vsel %vm1234, %v3455, %v3457
        %v3533 = vsel %vm1234, %v3457, %v3459
        %v3534 = vsel %vm1234, %v3461, %v3463
        %v3535 = vsel %vm1234, %v3463, %v3465
        %v3536 = vsel %vm1234, %v3465, %v3467
        %v3604 = vsel %vm883, %v3189, 0
        %v3607 = vsel %vm1620, %v3534, 0
        %v3610 = vsel %vm1620, %v3535, 0
        %v3613 = vsel %vm1620, %v3536, 0
        %3615 = vmatprep.subr.bf16.mxu0 %v3469
        %3616 = vmatpush1.bf16.msra.mxu0 %v3468
        %3617 = vmatprep.subr.bf16.mxu0 %v3472
        %3618 = vmatpush1.bf16.msra.mxu0 %v3471
        %3619 = vmatprep.subr.bf16.mxu0 %v3475
        %3620 = vmatpush1.bf16.msra.mxu0 %v3474
        %3621 = vmatprep.subr.bf16.mxu0 %v3478
        %3622 = vmatpush1.bf16.msra.mxu0 %v3477
        %3623 = vmatprep.subr.bf16.mxu0 %v3481
        %3624 = vmatpush1.bf16.msra.mxu0 %v3480
        %3625 = vmatprep.subr.bf16.mxu0 %v3484
        %3626 = vmatpush1.bf16.msra.mxu0 %v3483
        %3627 = vmatprep.subr.bf16.mxu0 %v3487
        %3628 = vmatpush1.bf16.msra.mxu0 %v3486
        %3629 = vmatprep.subr.bf16.mxu0 %v3490
        %3630 = vmatpush1.bf16.msra.mxu0 %v3489
        %3631 = vmatprep.subr.bf16.mxu0 %v3493
        %3632 = vmatpush1.bf16.msra.mxu0 %v3492
        %3633 = vmatprep.subr.bf16.mxu0 %v3496
        %3634 = vmatpush1.bf16.msra.mxu0 %v3495
        %3635 = vmatprep.subr.bf16.mxu0 %v3499
        %3636 = vmatpush1.bf16.msra.mxu0 %v3498
        %3637 = vmatprep.subr.bf16.mxu0 %v3502
        %3638 = vmatpush1.bf16.msra.mxu0 %v3501
        %3639 = vmatprep.subr.bf16.mxu0 %v3505
        %3640 = vmatpush1.bf16.msra.mxu0 %v3504
        %3641 = vmatprep.subr.bf16.mxu0 %v3508
        %3642 = vmatpush1.bf16.msra.mxu0 %v3507
        %3643 = vmatprep.subr.bf16.mxu0 %v3511
        %3644 = vmatpush1.bf16.msra.mxu0 %v3510
        %3645 = vmatprep.subr.bf16.mxu0 %v3514
        %3646 = vmatpush1.bf16.msra.mxu0 %v3513
        %3647 = vmatprep.mubr.bf16.mxu0 %v3188
        %3648 = vmatmul.mubr.bf16.gmra.mrb[0].mxu0 %v3187
        %v3649 = vpop.f32.mrb[0].mxu0
        %v3650 = vadd.f32 %v3180, %v3649
        %v3651 = vpop.f32.mrb[0].mxu0
        %v3652 = vadd.f32 %v3180, %v3651
        %v3653 = vpop.f32.mrb[0].mxu0
        %v3654 = vpop.f32.mrb[0].mxu0
        %3655 = vdwg.mxu0
        %3656 = vmatprep.subr.bf16.mxu0 %v3517
        %3657 = vmatpush1.bf16.msra.mxu0 %v3516
        %3658 = vmatprep.subr.bf16.mxu0 %v3520
        %3659 = vmatpush1.bf16.msra.mxu0 %v3519
        %3660 = vmatprep.subr.bf16.mxu0 %v3523
        %3661 = vmatpush1.bf16.msra.mxu0 %v3522
        %3662 = vmatprep.subr.bf16.mxu0 %v3526
        %3663 = vmatpush1.bf16.msra.mxu0 %v3525
        %3664 = vmatprep.subr.bf16.mxu0 %v3529
        %3665 = vmatpush1.bf16.msra.mxu0 %v3528
        %3666 = vmatprep.subr.bf16.mxu0 %v3532
        %3667 = vmatpush1.bf16.msra.mxu0 %v3531
        %3668 = vmatprep.subr.bf16.mxu0 %v3610
        %3669 = vmatpush1.bf16.msra.mxu0 %v3607
        %3670 = vmatprep.subr.bf16.mxu0 0
        %3671 = vmatpush1.bf16.msra.mxu0 0
        %3672 = vmatprep.subr.bf16.mxu0 0
        %3673 = vmatpush1.bf16.msra.mxu0 0
        %3674 = vmatprep.subr.bf16.mxu0 0
        %3675 = vmatpush1.bf16.msra.mxu0 0
        %3676 = vmatprep.subr.bf16.mxu0 0
        %3677 = vmatpush1.bf16.msra.mxu0 0
        %3678 = vmatprep.subr.bf16.mxu0 0
        %3679 = vmatpush1.bf16.msra.mxu0 0
        %3680 = vmatprep.subr.bf16.mxu0 0
        %3681 = vmatpush1.bf16.msra.mxu0 0
        %3682 = vmatprep.subr.bf16.mxu0 0
        %3683 = vmatpush1.bf16.msra.mxu0 0
        %3684 = vmatprep.subr.bf16.mxu0 0
        %3685 = vmatpush1.bf16.msra.mxu0 0
        %3686 = vmatprep.subr.bf16.mxu0 0
        %3687 = vmatpush1.bf16.msra.mxu0 0
        %3688 = vmatprep.mubr.bf16.mxu0 0
        %3689 = vmatmul.mubr.bf16.gmra.mrb[0].mxu0 %v3604
        %v3690 = vpop.f32.mrb[0].mxu0
        %v3691 = vadd.f32 %v3650, %v3690
        %v3692 = vpop.f32.mrb[0].mxu0
        %v3693 = vadd.f32 %v3652, %v3692
        %v3694 = vpop.f32.mrb[0].mxu0
        %v3695 = vpop.f32.mrb[0].mxu0
        %3696 = vdwg.mxu0
        %3697 = vmatprep.subr.bf16.mxu0 0
        %3698 = vmatpush1.bf16.msra.mxu0 %v3470
        %3699 = vmatprep.subr.bf16.mxu0 0
        %3700 = vmatpush1.bf16.msra.mxu0 %v3473
        %3701 = vmatprep.subr.bf16.mxu0 0
        %3702 = vmatpush1.bf16.msra.mxu0 %v3476
        %3703 = vmatprep.subr.bf16.mxu0 0
        %3704 = vmatpush1.bf16.msra.mxu0 %v3479
        %3705 = vmatprep.subr.bf16.mxu0 0
        %3706 = vmatpush1.bf16.msra.mxu0 %v3482
        %3707 = vmatprep.subr.bf16.mxu0 0
        %3708 = vmatpush1.bf16.msra.mxu0 %v3485
        %3709 = vmatprep.subr.bf16.mxu0 0
        %3710 = vmatpush1.bf16.msra.mxu0 %v3488
        %3711 = vmatprep.subr.bf16.mxu0 0
        %3712 = vmatpush1.bf16.msra.mxu0 %v3491
        %3713 = vmatprep.subr.bf16.mxu0 0
        %3714 = vmatpush1.bf16.msra.mxu0 %v3494
        %3715 = vmatprep.subr.bf16.mxu0 0
        %3716 = vmatpush1.bf16.msra.mxu0 %v3497
        %3717 = vmatprep.subr.bf16.mxu0 0
        %3718 = vmatpush1.bf16.msra.mxu0 %v3500
        %3719 = vmatprep.subr.bf16.mxu0 0
        %3720 = vmatpush1.bf16.msra.mxu0 %v3503
        %3721 = vmatprep.subr.bf16.mxu0 0
        %3722 = vmatpush1.bf16.msra.mxu0 %v3506
        %3723 = vmatprep.subr.bf16.mxu0 0
        %3724 = vmatpush1.bf16.msra.mxu0 %v3509
        %3725 = vmatprep.subr.bf16.mxu0 0
        %3726 = vmatpush1.bf16.msra.mxu0 %v3512
        %3727 = vmatprep.subr.bf16.mxu0 0
        %3728 = vmatpush1.bf16.msra.mxu0 %v3515
        %3729 = vmatprep.mubr.bf16.mxu0 %v3188
        %3730 = vmatmul.mubr.bf16.gmra.mrb[0].mxu0 %v3187
        %v3731 = vpop.f32.mrb[0].mxu0
        %v3732 = vadd.f32 %v3180, %v3731
        %v3733 = vpop.f32.mrb[0].mxu0
        %v3734 = vpop.f32.mrb[0].mxu0
        %v3735 = vpop.f32.mrb[0].mxu0
        %3736 = vdwg.mxu0
        %3737 = vmatprep.subr.bf16.mxu0 0
        %3738 = vmatpush1.bf16.msra.mxu0 %v3518
        %3739 = vmatprep.subr.bf16.mxu0 0
        %3740 = vmatpush1.bf16.msra.mxu0 %v3521
        %3741 = vmatprep.subr.bf16.mxu0 0
        %3742 = vmatpush1.bf16.msra.mxu0 %v3524
        %3743 = vmatprep.subr.bf16.mxu0 0
        %3744 = vmatpush1.bf16.msra.mxu0 %v3527
        %3745 = vmatprep.subr.bf16.mxu0 0
        %3746 = vmatpush1.bf16.msra.mxu0 %v3530
        %3747 = vmatprep.subr.bf16.mxu0 0
        %3748 = vmatpush1.bf16.msra.mxu0 %v3533
        %3749 = vmatprep.subr.bf16.mxu0 0
        %3750 = vmatpush1.bf16.msra.mxu0 %v3613
        %3751 = vmatprep.subr.bf16.mxu0 0
        %3752 = vmatpush1.bf16.msra.mxu0 0
        %3753 = vmatprep.subr.bf16.mxu0 0
        %3754 = vmatpush1.bf16.msra.mxu0 0
        %3755 = vmatprep.subr.bf16.mxu0 0
        %3756 = vmatpush1.bf16.msra.mxu0 0
        %3757 = vmatprep.subr.bf16.mxu0 0
        %3758 = vmatpush1.bf16.msra.mxu0 0
        %3759 = vmatprep.subr.bf16.mxu0 0
        %3760 = vmatpush1.bf16.msra.mxu0 0
        %3761 = vmatprep.subr.bf16.mxu0 0
        %3762 = vmatpush1.bf16.msra.mxu0 0
        %3763 = vmatprep.subr.bf16.mxu0 0
        %3764 = vmatpush1.bf16.msra.mxu0 0
        %3765 = vmatprep.subr.bf16.mxu0 0
        %3766 = vmatpush1.bf16.msra.mxu0 0
        %3767 = vmatprep.subr.bf16.mxu0 0
        %3768 = vmatpush1.bf16.msra.mxu0 0
        %3769 = vmatprep.mubr.bf16.mxu0 0
        %3770 = vmatmul.mubr.bf16.gmra.mrb[0].mxu0 %v3604
        %v3771 = vpop.f32.mrb[0].mxu0
        %v3772 = vadd.f32 %v3732, %v3771
        %v3773 = vpop.f32.mrb[0].mxu0
        %v3774 = vpop.f32.mrb[0].mxu0
        %v3775 = vpop.f32.mrb[0].mxu0
        %3776 = vdwg.mxu0
        %v3777 = vmax.f32 %v3691, 0.0
        %v3778 = vmax.f32 %v3693, 0.0
        %v3779 = vmax.f32 %v3772, 0.0
        %v3780 = vmul.f32 %v3777, %v1381
        %v3781 = vmul.f32 %v3778, %v1385
        %v3782 = vmul.f32 %v3779, %v1389
        %3786 = vrot.lane.b32.xlu0 %v3780, 127
        %v3787 = vpop.permute.xlu0 %3786
        %3788 = vrot.lane.b32.xlu0 %v3781, 127
        %v3789 = vpop.permute.xlu0 %3788
        %3790 = vrot.lane.b32.xlu0 %v3782, 127
        %v3791 = vpop.permute.xlu0 %3790
        %v3792 = vsel %vm851, %v844, %v3787
        %v3793 = vsel %vm851, %v3787, %v3789
        %v3794 = vsel %vm851, %v3789, %v3791
        %3799 = vrot.lane.b32.xlu0 %v3780, 126
        %v3800 = vpop.permute.xlu0 %3799
        %3801 = vrot.lane.b32.xlu0 %v3781, 126
        %v3802 = vpop.permute.xlu0 %3801
        %3803 = vrot.lane.b32.xlu0 %v3782, 126
        %v3804 = vpop.permute.xlu0 %3803
        %v3805 = vsel %vm867, %v860, %v3800
        %v3806 = vsel %vm867, %v3800, %v3802
        %v3807 = vsel %vm867, %v3802, %v3804
        %3812 = vrot.lane.b32.xlu0 %v3780, 104
        %v3813 = vpop.permute.xlu0 %3812
        %3814 = vrot.lane.b32.xlu0 %v3781, 104
        %v3815 = vpop.permute.xlu0 %3814
        %3816 = vrot.lane.b32.xlu0 %v3782, 104
        %v3817 = vpop.permute.xlu0 %3816
        %v3818 = vsel %vm883, %v876, %v3813
        %v3819 = vsel %vm883, %v3813, %v3815
        %v3820 = vsel %vm883, %v3815, %v3817
        %3825 = vrot.lane.b32.xlu0 %v3780, 103
        %v3826 = vpop.permute.xlu0 %3825
        %3827 = vrot.lane.b32.xlu0 %v3781, 103
        %v3828 = vpop.permute.xlu0 %3827
        %3829 = vrot.lane.b32.xlu0 %v3782, 103
        %v3830 = vpop.permute.xlu0 %3829
        %v3831 = vsel %vm897, %v3826, %v3828
        %v3832 = vsel %vm897, %v3828, %v3830
        %3837 = vrot.lane.b32.xlu0 %v3780, 102
        %v3838 = vpop.permute.xlu0 %3837
        %3839 = vrot.lane.b32.xlu0 %v3781, 102
        %v3840 = vpop.permute.xlu0 %3839
        %3841 = vrot.lane.b32.xlu0 %v3782, 102
        %v3842 = vpop.permute.xlu0 %3841
        %v3843 = vsel %vm912, %v3838, %v3840
        %v3844 = vsel %vm912, %v3840, %v3842
        %v3845 = vsel %vm912, %v3842, %v911
        %3850 = vrot.lane.b32.xlu0 %v3780, 80
        %v3851 = vpop.permute.xlu0 %3850
        %3852 = vrot.lane.b32.xlu0 %v3781, 80
        %v3853 = vpop.permute.xlu0 %3852
        %3854 = vrot.lane.b32.xlu0 %v3782, 80
        %v3855 = vpop.permute.xlu0 %3854
        %v3856 = vsel %vm928, %v3851, %v3853
        %v3857 = vsel %vm928, %v3853, %v3855
        %v3858 = vsel %vm928, %v3855, %v927
        %3863 = vrot.lane.b32.xlu0 %v3780, 79
        %v3864 = vpop.permute.xlu0 %3863
        %3865 = vrot.lane.b32.xlu0 %v3781, 79
        %v3866 = vpop.permute.xlu0 %3865
        %3867 = vrot.lane.b32.xlu0 %v3782, 79
        %v3868 = vpop.permute.xlu0 %3867
        %v3869 = vsel %vm944, %v3864, %v3866
        %v3870 = vsel %vm944, %v3866, %v3868
        %v3871 = vsel %vm944, %v3868, %v943
        %3876 = vrot.lane.b32.xlu0 %v3780, 78
        %v3877 = vpop.permute.xlu0 %3876
        %3878 = vrot.lane.b32.xlu0 %v3781, 78
        %v3879 = vpop.permute.xlu0 %3878
        %3880 = vrot.lane.b32.xlu0 %v3782, 78
        %v3881 = vpop.permute.xlu0 %3880
        %v3882 = vsel %vm960, %v3877, %v3879
        %v3883 = vsel %vm960, %v3879, %v3881
        %v3884 = vsel %vm960, %v3881, %v959
        %v3889 = vpack.c.bf16 %v3792, 0.0
        %v3890 = vpack.c.bf16 %v3793, %v3780
        %v3891 = vpack.c.bf16 %v3794, %v3781
        %v3892 = vpack.c.bf16 %v3791, %v3782
        %v3893 = vpack.c.bf16 %v3818, %v3805
        %v3894 = vpack.c.bf16 %v3819, %v3806
        %v3895 = vpack.c.bf16 %v3820, %v3807
        %v3896 = vpack.c.bf16 %v3817, %v3804
        %v3897 = vpack.c.bf16 %v3838, %v3826
        %v3898 = vpack.c.bf16 %v3843, %v3831
        %v3899 = vpack.c.bf16 %v3844, %v3832
        %v3900 = vpack.c.bf16 %v3845, %v3830
        %v3901 = vpack.c.bf16 %v3864, %v3851
        %v3902 = vpack.c.bf16 %v3869, %v3856
        %v3903 = vpack.c.bf16 %v3870, %v3857
        %v3904 = vpack.c.bf16 %v3871, %v3858
        %v3905 = vpack.c.bf16 %v3877, %v3877
        %v3906 = vpack.c.bf16 %v3882, %v3882
        %v3907 = vpack.c.bf16 %v3883, %v3883
        %v3908 = vpack.c.bf16 %v3884, %v3884
        %v3909 = vld [vmem:[%s18] sm:$0xf]
        %v3910 = vld [vmem:[%s19] sm:$0xff]
        %3912 = vset.pattern.permute.xlu0 0
        %3913 = vperm.xlu0 %3912, %v3910
        %v3914 = vpop.permute.xlu0 %3913
        %3936 = vrot.lane.b32.xlu0 %v3889, 25
        %v3937 = vpop.permute.xlu0 %3936
        %3938 = vrot.lane.b32.xlu0 %v3890, 25
        %v3939 = vpop.permute.xlu0 %3938
        %3940 = vrot.lane.b32.xlu0 %v3891, 25
        %v3941 = vpop.permute.xlu0 %3940
        %3942 = vrot.lane.b32.xlu0 %v3892, 25
        %v3943 = vpop.permute.xlu0 %3942
        %3944 = vrot.lane.b32.xlu0 %v3893, 25
        %v3945 = vpop.permute.xlu0 %3944
        %3946 = vrot.lane.b32.xlu0 %v3894, 25
        %v3947 = vpop.permute.xlu0 %3946
        %3948 = vrot.lane.b32.xlu0 %v3895, 25
        %v3949 = vpop.permute.xlu0 %3948
        %3950 = vrot.lane.b32.xlu0 %v3896, 25
        %v3951 = vpop.permute.xlu0 %3950
        %3952 = vrot.lane.b32.xlu0 %v3897, 25
        %v3953 = vpop.permute.xlu0 %3952
        %3954 = vrot.lane.b32.xlu0 %v3898, 25
        %v3955 = vpop.permute.xlu0 %3954
        %3956 = vrot.lane.b32.xlu0 %v3899, 25
        %v3957 = vpop.permute.xlu0 %3956
        %3958 = vrot.lane.b32.xlu0 %v3900, 25
        %v3959 = vpop.permute.xlu0 %3958
        %3960 = vrot.lane.b32.xlu0 %v3901, 25
        %v3961 = vpop.permute.xlu0 %3960
        %3962 = vrot.lane.b32.xlu0 %v3902, 25
        %v3963 = vpop.permute.xlu0 %3962
        %3964 = vrot.lane.b32.xlu0 %v3903, 25
        %v3965 = vpop.permute.xlu0 %3964
        %3966 = vrot.lane.b32.xlu0 %v3904, 25
        %v3967 = vpop.permute.xlu0 %3966
        %3968 = vrot.lane.b32.xlu0 %v3905, 25
        %v3969 = vpop.permute.xlu0 %3968
        %3970 = vrot.lane.b32.xlu0 %v3906, 25
        %v3971 = vpop.permute.xlu0 %3970
        %3972 = vrot.lane.b32.xlu0 %v3907, 25
        %v3973 = vpop.permute.xlu0 %3972
        %3974 = vrot.lane.b32.xlu0 %v3908, 25
        %v3975 = vpop.permute.xlu0 %3974
        %v3976 = vsel %vm1234, %v3937, %v3939
        %v3977 = vsel %vm1234, %v3939, %v3941
        %v3978 = vsel %vm1234, %v3941, %v3943
        %v3979 = vsel %vm1234, %v3945, %v3947
        %v3980 = vsel %vm1234, %v3947, %v3949
        %v3981 = vsel %vm1234, %v3949, %v3951
        %v3982 = vsel %vm1234, %v3953, %v3955
        %v3983 = vsel %vm1234, %v3955, %v3957
        %v3984 = vsel %vm1234, %v3957, %v3959
        %v3985 = vsel %vm1234, %v3961, %v3963
        %v3986 = vsel %vm1234, %v3963, %v3965
        %v3987 = vsel %vm1234, %v3965, %v3967
        %v3988 = vsel %vm1234, %v3969, %v3971
        %v3989 = vsel %vm1234, %v3971, %v3973
        %v3990 = vsel %vm1234, %v3973, %v3975
        %v4004 = vsel %vm1616, %v3909, 0
        %v4007 = vsel %vm1620, %v3988, 0
        %v4010 = vsel %vm1620, %v3989, 0
        %v4013 = vsel %vm1620, %v3990, 0
        %4015 = vmatprep.subr.bf16.mxu0 %v3977
        %4016 = vmatpush1.bf16.msra.mxu0 %v3976
        %4017 = vmatprep.subr.bf16.mxu0 %v3980
        %4018 = vmatpush1.bf16.msra.mxu0 %v3979
        %4019 = vmatprep.subr.bf16.mxu0 %v3983
        %4020 = vmatpush1.bf16.msra.mxu0 %v3982
        %4021 = vmatprep.subr.bf16.mxu0 %v3986
        %4022 = vmatpush1.bf16.msra.mxu0 %v3985
        %4023 = vmatprep.subr.bf16.mxu0 %v4010
        %4024 = vmatpush1.bf16.msra.mxu0 %v4007
        %4025 = vmatprep.subr.bf16.mxu0 0
        %4026 = vmatpush1.bf16.msra.mxu0 0
        %4027 = vmatprep.subr.bf16.mxu0 0
        %4028 = vmatpush1.bf16.msra.mxu0 0
        %4029 = vmatprep.subr.bf16.mxu0 0
        %4030 = vmatpush1.bf16.msra.mxu0 0
        %4031 = vmatprep.subr.bf16.mxu0 0
        %4032 = vmatpush1.bf16.msra.mxu0 0
        %4033 = vmatprep.subr.bf16.mxu0 0
        %4034 = vmatpush1.bf16.msra.mxu0 0
        %4035 = vmatprep.subr.bf16.mxu0 0
        %4036 = vmatpush1.bf16.msra.mxu0 0
        %4037 = vmatprep.subr.bf16.mxu0 0
        %4038 = vmatpush1.bf16.msra.mxu0 0
        %4039 = vmatprep.subr.bf16.mxu0 0
        %4040 = vmatpush1.bf16.msra.mxu0 0
        %4041 = vmatprep.subr.bf16.mxu0 0
        %4042 = vmatpush1.bf16.msra.mxu0 0
        %4043 = vmatprep.subr.bf16.mxu0 0
        %4044 = vmatpush1.bf16.msra.mxu0 0
        %4045 = vmatprep.subr.bf16.mxu0 0
        %4046 = vmatpush1.bf16.msra.mxu0 0
        %4047 = vmatprep.mubr.bf16.mxu0 0
        %4048 = vmatmul.mubr.bf16.gmra.mrb[0].mxu0 %v4004
        %v4049 = vpop.f32.mrb[0].mxu0
        %v4050 = vadd.f32 %v3914, %v4049
        %v4051 = vpop.f32.mrb[0].mxu0
        %v4052 = vadd.f32 %v3914, %v4051
        %v4053 = vpop.f32.mrb[0].mxu0
        %v4054 = vpop.f32.mrb[0].mxu0
        %4055 = vdwg.mxu0
        %4056 = vmatprep.subr.bf16.mxu0 0
        %4057 = vmatpush1.bf16.msra.mxu0 %v3978
        %4058 = vmatprep.subr.bf16.mxu0 0
        %4059 = vmatpush1.bf16.msra.mxu0 %v3981
        %4060 = vmatprep.subr.bf16.mxu0 0
        %4061 = vmatpush1.bf16.msra.mxu0 %v3984
        %4062 = vmatprep.subr.bf16.mxu0 0
        %4063 = vmatpush1.bf16.msra.mxu0 %v3987
        %4064 = vmatprep.subr.bf16.mxu0 0
        %4065 = vmatpush1.bf16.msra.mxu0 %v4013
        %4066 = vmatprep.subr.bf16.mxu0 0
        %4067 = vmatpush1.bf16.msra.mxu0 0
        %4068 = vmatprep.subr.bf16.mxu0 0
        %4069 = vmatpush1.bf16.msra.mxu0 0
        %4070 = vmatprep.subr.bf16.mxu0 0
        %4071 = vmatpush1.bf16.msra.mxu0 0
        %4072 = vmatprep.subr.bf16.mxu0 0
        %4073 = vmatpush1.bf16.msra.mxu0 0
        %4074 = vmatprep.subr.bf16.mxu0 0
        %4075 = vmatpush1.bf16.msra.mxu0 0
        %4076 = vmatprep.subr.bf16.mxu0 0
        %4077 = vmatpush1.bf16.msra.mxu0 0
        %4078 = vmatprep.subr.bf16.mxu0 0
        %4079 = vmatpush1.bf16.msra.mxu0 0
        %4080 = vmatprep.subr.bf16.mxu0 0
        %4081 = vmatpush1.bf16.msra.mxu0 0
        %4082 = vmatprep.subr.bf16.mxu0 0
        %4083 = vmatpush1.bf16.msra.mxu0 0
        %4084 = vmatprep.subr.bf16.mxu0 0
        %4085 = vmatpush1.bf16.msra.mxu0 0
        %4086 = vmatprep.subr.bf16.mxu0 0
        %4087 = vmatpush1.bf16.msra.mxu0 0
        %4088 = vmatprep.mubr.bf16.mxu0 0
        %4089 = vmatmul.mubr.bf16.gmra.mrb[0].mxu0 %v4004
        %v4090 = vpop.f32.mrb[0].mxu0
        %v4091 = vadd.f32 %v3914, %v4090
        %v4092 = vpop.f32.mrb[0].mxu0
        %v4093 = vpop.f32.mrb[0].mxu0
        %v4094 = vpop.f32.mrb[0].mxu0
        %4095 = vdwg.mxu0
        %v4096 = vmul.f32 %v4050, %v1381
        %v4097 = vmul.f32 %v4052, %v1385
        %v4098 = vmul.f32 %v4091, %v1389
        %v4099 = vsub.f32 %v4096, %v836
        %v4100 = vsub.f32 %v4097, %v837
        %v4101 = vsub.f32 %v4098, %v838
        %v4102 = vand.u32 2147483647, %v4099
        %v4103 = vand.u32 2147483647, %v4100
        %v4104 = vand.u32 2147483647, %v4101
        %4105 = vst [vmem:[%s768] sm:$0xff] %v4102
        %4106 = vst [vmem:[%s768 + $0x8] sm:$0xff] %v4103
        %4107 = vst [vmem:[%s768 + $0x10] sm:$0xff] %v4104
        %s4108 = sand.u32 %s503, 1
        %s4109 = scalar_lea.sflag [#allocation4], %s4108
        %s4110 = sand.u32 %s503, 1
        %s4111 = smul.addr %s4110, 24
        %s4112 = scalar_lea.vmem [#allocation8], %s4111
        // Predicated region
        $region113: #{tpu_custom_call.1} parent=99 // pred_check
          %p4113 = pneg %p513
        $region114: #{tpu_custom_call.1} parent=99 // pred_check_branch
          %4115 = sbr.rel (%p4113) target = $region116
        $region115: #{tpu_custom_call.1} parent=99 // pred_region
          %s4117 = ssub.s32 384, 384
          %4118 = vsyncadd %s4109, %s4117
          %s4119 = smul.addr %s40, 3
          %s4120 = smul.addr %s4119, 128
          %s4121 = scalar_lea.hbm %s20, %s4120
          %s4123 = sshll.u32 %s4112, 4
          %s4124 = int_to_ptr.vmem [resolvable:$true] %s4123
          %4126 = dma.vmem_to_hbm [thread:$0]  %s4124, 384, %s4121, %s4109
        $region116: #{tpu_custom_call.1} parent=99 // pred_fallthru
          _
      $region100: #{tpu_custom_call.1} parent=5 // pred_fallthru
        _
      %p4127 = scmp.le.s32.totalorder 2, %s35
      // Predicated region
      $region117: #{tpu_custom_call.1} parent=5 // pred_check
        %p4128 = pneg %p4127
      $region118: #{tpu_custom_call.1} parent=5 // pred_check_branch
        %4130 = sbr.rel (%p4128) target = $region120
      $region119: #{tpu_custom_call.1} parent=5 // pred_region
        %s4131 = ssub.s32 %s35, 2
        // Predicated region
        $region121: #{tpu_custom_call.1} parent=119 // pred_check
          %p4132 = pneg %p519
        $region122: #{tpu_custom_call.1} parent=119 // pred_check_branch
          %4134 = sbr.rel (%p4132) target = $region124
        $region123: #{tpu_custom_call.1} parent=119 // pred_region
          %s4135 = sand.u32 %s504, 1
          %s4136 = scalar_lea.sflag [#allocation4], %s4135
          %s4137 = sand.u32 %s504, 1
          %s4138 = smul.addr %s4137, 24
          %s4139 = scalar_lea.vmem [#allocation8], %s4138
          %4140 = dma.done %s4136, 384
        $region124: #{tpu_custom_call.1} parent=119 // pred_fallthru
          _
      $region120: #{tpu_custom_call.1} parent=5 // pred_fallthru
        _
    $region6: #{tpu_custom_call.1} parent=1 // loop_footer
      %s39 = sadd.s32 1, %s35
    $region7: #{tpu_custom_call.1} parent=1 // loop_footer_branch
      %34 = sbr.rel target = $region3
    $region8: #{tpu_custom_call.1} parent=1 // loop_exit
      _
    %4141 = vsyncpa [#allocation3], 1
    %s4142 = scalar_lea.sflag [#allocation3], 1
    %4143 = vsyncpa %s4142, 1
    %4144 = vsyncpa [#allocation6], 1
    %s4145 = scalar_lea.sflag [#allocation6], 1
    %4146 = vsyncpa %s4145, 1
    %4147 = vsyncpa [#allocation4], 1
    %s4148 = scalar_lea.sflag [#allocation4], 1
    %4149 = vsyncpa %s4148, 1

</llo_original>
